<compile_context>
chip_gen: v5e
topology: v5e:2x2
jax: 0.10.0
libtpu: 0.0.40
codegen_flags: <defaults>
</compile_context>

<pallas_src>
import functools
from math import sqrt

import jax
import jax.numpy as jnp
import numpy as np
from jax.experimental import pallas as pl
from jax.experimental.pallas import tpu as pltpu

LN_EPS = 1e-5

# kernel-arg / in_specs ordering of the (stacked, packed) per-layer parameters
PARAM_ORDER = [
    "wq", "bq", "wk", "bk", "wv", "bv", "wo", "bo",
    "mixw1", "mixb1", "mixw2", "mixb2", "mixw3", "mixb3",
    "ln1g", "ln1b",
    "fc1w", "fc1b", "fc2w", "fc2b",
    "ln2g", "ln2b",
]


# ------------------------- fused kernel -------------------------

def mhad_fused_kernel(
    x_ref, d_ref,
    wq_ref, bq_ref, wk_ref, bk_ref, wv_ref, bv_ref, wo_ref, bo_ref,
    m1w_ref, m1b_ref, m2w_ref, m2b_ref, m3w_ref, m3b_ref,
    ln1g_ref, ln1b_ref,
    fc1w_ref, fc1b_ref, fc2w_ref, fc2b_ref,
    ln2g_ref, ln2b_ref,
    out_ref,
    act_ref,
    *, num_heads,
):
    l = pl.program_id(1)
    n_layers = pl.num_programs(1)

    Bb, S, E = x_ref.shape
    H = num_heads
    dk = E // H
    N = Bb * S
    inv_sqrt_dk = 1.0 / sqrt(dk)

    # Layer 0 of each batch block: load activation into the resident VMEM
    # scratch; later layers update it in place (no HBM round-trips).
    @pl.when(l == 0)
    def _():
        act_ref[...] = x_ref[...].reshape(N, E)

    xf = act_ref[...]                                      # (N, E)
    d = d_ref[...]                                         # (Bb, S, S)

    # --- QKV projections fused over the whole batch*seq M dimension ---
    q = jnp.dot(xf, wq_ref[0], preferred_element_type=jnp.float32) + bq_ref[0]
    k = jnp.dot(xf, wk_ref[0], preferred_element_type=jnp.float32) + bk_ref[0]
    v = jnp.dot(xf, wv_ref[0], preferred_element_type=jnp.float32) + bv_ref[0]

    # --- attention scores per (batch, head); softmax fused across heads ---
    # (per-head 2-D matmuls kept deliberately: robust lowering, tiny cost;
    #  everything downstream is fused across heads and batch.)
    z_rows = []
    for b in range(Bb):
        qb = q[b * S:(b + 1) * S]
        kb = k[b * S:(b + 1) * S]
        sc = jnp.stack(
            [jnp.einsum("qd,kd->qk",
                        qb[:, h * dk:(h + 1) * dk],
                        kb[:, h * dk:(h + 1) * dk],
                        preferred_element_type=jnp.float32) * inv_sqrt_dk
             for h in range(H)],
            axis=0)                                        # (H, S, S)
        sc = sc - jnp.max(sc, axis=-1, keepdims=True)
        p = jnp.exp(sc)
        den = jnp.sum(p, axis=-1, keepdims=True)
        inv = pl.reciprocal(den, approx=True)
        inv = inv * (2.0 - den * inv)                      # one Newton step
        attn = p * inv                                     # (H, S, S)
        zb = jnp.concatenate([attn, d[b][None]], axis=0)   # (H+1, S, S)
        z_rows.append(zb.reshape(H + 1, S * S).T)          # (S*S, H+1)
    z = jnp.concatenate(z_rows, axis=0)                    # (Bb*S*S, H+1)

    # --- distance-mix MLP: plain 2-D matmuls, fused over batch*S*S rows and
    #     over heads via block-diagonal packed weights ---
    h1 = jnp.maximum(
        jnp.dot(z, m1w_ref[0], preferred_element_type=jnp.float32) + m1b_ref[0],
        0.0)                                               # (Bb*S*S, H*Dh)
    h2 = jnp.maximum(
        jnp.dot(h1, m2w_ref[0], preferred_element_type=jnp.float32) + m2b_ref[0],
        0.0)                                               # (Bb*S*S, H*Dh)
    mixed = (jnp.dot(h2, m3w_ref[0], preferred_element_type=jnp.float32)
             + m3b_ref[0])                                 # (Bb*S*S, H)

    # --- mixed-attn @ V per (batch, head); concat heads -> one output proj ---
    cat_rows = []
    for b in range(Bb):
        mb = mixed[b * S * S:(b + 1) * S * S].T.reshape(H, S, S)
        vb = v[b * S:(b + 1) * S]
        heads = [jnp.dot(mb[h], vb[:, h * dk:(h + 1) * dk],
                         preferred_element_type=jnp.float32)
                 for h in range(H)]
        cat_rows.append(jnp.concatenate(heads, axis=-1))   # (S, E)
    attn_cat = jnp.concatenate(cat_rows, axis=0)           # (N, E)

    attn_out = (jnp.dot(attn_cat, wo_ref[0], preferred_element_type=jnp.float32)
                + bo_ref[0])

    # residual + LayerNorm 1 (rsqrt -> EUP)
    hres = xf + attn_out
    mu = jnp.mean(hres, axis=-1, keepdims=True)
    var = jnp.mean((hres - mu) ** 2, axis=-1, keepdims=True)
    y = (hres - mu) * jax.lax.rsqrt(var + LN_EPS) * ln1g_ref[0] + ln1b_ref[0]

    # feed-forward MLP (Linear -> ReLU -> Linear); dropout = identity
    m = jnp.maximum(
        jnp.dot(y, fc1w_ref[0], preferred_element_type=jnp.float32) + fc1b_ref[0],
        0.0)
    m = jnp.dot(m, fc2w_ref[0], preferred_element_type=jnp.float32) + fc2b_ref[0]

    # residual + LayerNorm 2
    zr = y + m
    mu2 = jnp.mean(zr, axis=-1, keepdims=True)
    var2 = jnp.mean((zr - mu2) ** 2, axis=-1, keepdims=True)
    newx = (zr - mu2) * jax.lax.rsqrt(var2 + LN_EPS) * ln2g_ref[0] + ln2b_ref[0]

    act_ref[...] = newx

    @pl.when(l == n_layers - 1)
    def _():
        out_ref[...] = newx.reshape(Bb, S, E)


# ------------------------- wrapper -------------------------

def pack_layer_params(p, H, Dh):
    """Pack per-head mix-MLP weights into head-fused block-diagonal matrices."""
    HD = H * Dh
    W1 = np.zeros((H + 1, HD), np.float32)   # rows 0..H-1: attn weight, row H: dist
    b1 = np.zeros((1, HD), np.float32)
    W2 = np.zeros((HD, HD), np.float32)      # block-diagonal
    b2 = np.zeros((1, HD), np.float32)
    W3 = np.zeros((HD, H), np.float32)       # block-diagonal
    b3 = np.zeros((1, H), np.float32)
    mw1, mb1 = np.asarray(p["mw1"]), np.asarray(p["mb1"])
    mw2, mb2 = np.asarray(p["mw2"]), np.asarray(p["mb2"])
    mw3, mb3 = np.asarray(p["mw3"]), np.asarray(p["mb3"])
    for h in range(H):
        sl = slice(h * Dh, (h + 1) * Dh)
        W1[h, sl] = mw1[h, 0]
        W1[H, sl] = mw1[h, 1]
        b1[0, sl] = mb1[h]
        W2[sl, sl] = mw2[h]
        b2[0, sl] = mb2[h]
        W3[sl, h] = mw3[h]
        b3[0, h] = mb3[h, 0]
    packed = {"mixw1": jnp.asarray(W1), "mixb1": jnp.asarray(b1),
              "mixw2": jnp.asarray(W2), "mixb2": jnp.asarray(b2),
              "mixw3": jnp.asarray(W3), "mixb3": jnp.asarray(b3)}
    for k in ["wq", "bq", "wk", "bk", "wv", "bv", "wo", "bo",
              "ln1g", "ln1b", "fc1w", "fc1b", "fc2w", "fc2b", "ln2g", "ln2b"]:
        packed[k] = p[k]
    return packed


def mhad_forward(x, d, layer_params, num_heads, dist_hidden, batch_blocks=1):
    """All layers in one pallas_call. batch_blocks=1 for v5e/v6e (single TC);
    batch_blocks=2 on v7x to spread the batch over the two TensorCores."""
    B, S, E = x.shape
    L = len(layer_params)
    assert B % batch_blocks == 0
    Bb = B // batch_blocks

    packed = [pack_layer_params(p, num_heads, dist_hidden) for p in layer_params]
    stacked = [jnp.stack([pp[name] for pp in packed], axis=0)
               for name in PARAM_ORDER]

    def _wspec(arr):
        nd = arr.ndim
        return pl.BlockSpec((1,) + arr.shape[1:],
                            lambda bb, l, nd=nd: (l,) + (0,) * (nd - 1))

    kernel = functools.partial(mhad_fused_kernel, num_heads=num_heads)
    return pl.pallas_call(
        kernel,
        out_shape=jax.ShapeDtypeStruct((B, S, E), jnp.float32),
        grid_spec=pltpu.PrefetchScalarGridSpec(
            num_scalar_prefetch=0,
            grid=(batch_blocks, L),
            in_specs=[pl.BlockSpec((Bb, S, E), lambda bb, l: (bb, 0, 0)),
                      pl.BlockSpec((Bb, S, S), lambda bb, l: (bb, 0, 0))]
                     + [_wspec(w) for w in stacked],
            out_specs=pl.BlockSpec((Bb, S, E), lambda bb, l: (bb, 0, 0)),
            scratch_shapes=[pltpu.VMEM((Bb * S, E), jnp.float32)],
        ),
        compiler_params=pltpu.CompilerParams(
            dimension_semantics=("parallel", "arbitrary")),
    )(x, d, *stacked)


# ------------------------- parameter init (deterministic) -------------------------

def _linear(key, fan_in, fan_out):
    k1, k2 = jax.random.split(key)
    lim = 1.0 / np.sqrt(fan_in)
    w = jax.random.uniform(k1, (fan_in, fan_out), jnp.float32, -lim, lim)
    b = jax.random.uniform(k2, (1, fan_out), jnp.float32, -lim, lim)
    return w, b


def init_layer_params(key, E, H, Dh):
    keys = jax.random.split(key, 8 + 3 * H)
    p = {}
    p["wq"], p["bq"] = _linear(keys[0], E, E)
    p["wk"], p["bk"] = _linear(keys[1], E, E)
    p["wv"], p["bv"] = _linear(keys[2], E, E)
    p["wo"], p["bo"] = _linear(keys[3], E, E)

    mw1, mb1, mw2, mb2, mw3, mb3 = [], [], [], [], [], []
    for h in range(H):
        w1, b1 = _linear(keys[4 + 3 * h], 2, Dh)
        w2, b2 = _linear(keys[5 + 3 * h], Dh, Dh)
        w3, b3 = _linear(keys[6 + 3 * h], Dh, 1)
        mw1.append(w1); mb1.append(b1[0])
        mw2.append(w2); mb2.append(b2[0])
        mw3.append(w3[:, 0]); mb3.append(b3[0])
    p["mw1"] = jnp.stack(mw1)            # (H, 2, Dh)
    p["mb1"] = jnp.stack(mb1)            # (H, Dh)
    p["mw2"] = jnp.stack(mw2)            # (H, Dh, Dh)
    p["mb2"] = jnp.stack(mb2)            # (H, Dh)
    p["mw3"] = jnp.stack(mw3)            # (H, Dh)
    p["mb3"] = jnp.stack(mb3)            # (H, 1)

    p["ln1g"] = jnp.ones((1, E), jnp.float32)
    p["ln1b"] = jnp.zeros((1, E), jnp.float32)
    p["fc1w"], p["fc1b"] = _linear(keys[4 + 3 * H], E, 4 * E)
    p["fc2w"], p["fc2b"] = _linear(keys[5 + 3 * H], 4 * E, E)
    p["ln2g"] = jnp.ones((1, E), jnp.float32)
    p["ln2b"] = jnp.zeros((1, E), jnp.float32)
    return p


# ------------------------- pure-JAX reference -------------------------

def _ln(t, g, b):
    mu = t.mean(-1, keepdims=True)
    var = ((t - mu) ** 2).mean(-1, keepdims=True)
    return (t - mu) / jnp.sqrt(var + LN_EPS) * g + b


def mhad_layer_ref(x, d, p, H, dk):
    B, S, E = x.shape
    q = x @ p["wq"] + p["bq"]
    k = x @ p["wk"] + p["bk"]
    v = x @ p["wv"] + p["bv"]

    def split(t):
        return t.reshape(B, S, H, dk).transpose(0, 2, 1, 3)

    qh, kh, vh = split(q), split(k), split(v)
    scores = jnp.einsum("bhqd,bhkd->bhqk", qh, kh) / np.sqrt(dk)
    attn = jax.nn.softmax(scores, axis=-1)

    mixed = []
    for h in range(H):
        a = attn[:, h]                                               # (B, S, S)
        z = jnp.stack([a, jnp.broadcast_to(d, a.shape)], axis=-1)    # (B, S, S, 2)
        h1 = jnp.maximum(z @ p["mw1"][h] + p["mb1"][h], 0.0)
        h2 = jnp.maximum(h1 @ p["mw2"][h] + p["mb2"][h], 0.0)
        h3 = jnp.sum(h2 * p["mw3"][h], axis=-1) + p["mb3"][h, 0]
        mixed.append(h3)
    attn_m = jnp.stack(mixed, axis=1)                                # (B, H, S, S)

    xo = jnp.einsum("bhqk,bhkd->bhqd", attn_m, vh)
    xo = xo.transpose(0, 2, 1, 3).reshape(B, S, E)
    xo = xo @ p["wo"] + p["bo"]

    y = _ln(x + xo, p["ln1g"], p["ln1b"])
    m = jnp.maximum(y @ p["fc1w"] + p["fc1b"], 0.0) @ p["fc2w"] + p["fc2b"]
    return _ln(y + m, p["ln2g"], p["ln2b"])


def mhad_ref(x, d, layer_params, H, dk):
    for p in layer_params:
        x = mhad_layer_ref(x, d, p, H, dk)
    return x


# ------------------------- main -------------------------

if __name__ == "__main__":
    B, S = 2, 8
    EMBED_DIM, NUM_HEADS, NUM_LAYERS, DIST_HIDDEN = 32, 4, 2, 16
    D_K = EMBED_DIM // NUM_HEADS

    root = jax.random.PRNGKey(0)
    kx, kd, kp = jax.random.split(root, 3)
    x = jax.random.normal(kx, (B, S, EMBED_DIM), jnp.float32)
    dist = jax.random.normal(kd, (B, S, S), jnp.float32)

    layer_keys = jax.random.split(kp, NUM_LAYERS)
    layer_params = [init_layer_params(k, EMBED_DIM, NUM_HEADS, DIST_HIDDEN)
                    for k in layer_keys]

    # batch_blocks=1 collapses the batch grid (single-TC v5e/v6e); use 2 on v7x.
    out = mhad_forward(x, dist, layer_params, NUM_HEADS, DIST_HIDDEN,
                       batch_blocks=1)
    out = jax.block_until_ready(out)

    ref = jax.block_until_ready(mhad_ref(x, dist, layer_params, NUM_HEADS, D_K))
    np.testing.assert_allclose(np.asarray(out), np.asarray(ref),
                               rtol=1e-3, atol=1e-3)

    print("KERNEL_OK")
</pallas_src>

<mosaic_0001>
module attributes {stable_mosaic.version = 11 : i64} {
  func.func @mhad_fused_kernel(%arg0: i32, %arg1: i32, %arg2: memref<2x8x32xf32, #tpu.memory_space<vmem>>, %arg3: memref<2x8x8xf32, #tpu.memory_space<vmem>>, %arg4: memref<1x32x32xf32, #tpu.memory_space<vmem>>, %arg5: memref<1x1x32xf32, #tpu.memory_space<vmem>>, %arg6: memref<1x32x32xf32, #tpu.memory_space<vmem>>, %arg7: memref<1x1x32xf32, #tpu.memory_space<vmem>>, %arg8: memref<1x32x32xf32, #tpu.memory_space<vmem>>, %arg9: memref<1x1x32xf32, #tpu.memory_space<vmem>>, %arg10: memref<1x32x32xf32, #tpu.memory_space<vmem>>, %arg11: memref<1x1x32xf32, #tpu.memory_space<vmem>>, %arg12: memref<1x5x64xf32, #tpu.memory_space<vmem>>, %arg13: memref<1x1x64xf32, #tpu.memory_space<vmem>>, %arg14: memref<1x64x64xf32, #tpu.memory_space<vmem>>, %arg15: memref<1x1x64xf32, #tpu.memory_space<vmem>>, %arg16: memref<1x64x4xf32, #tpu.memory_space<vmem>>, %arg17: memref<1x1x4xf32, #tpu.memory_space<vmem>>, %arg18: memref<1x1x32xf32, #tpu.memory_space<vmem>>, %arg19: memref<1x1x32xf32, #tpu.memory_space<vmem>>, %arg20: memref<1x32x128xf32, #tpu.memory_space<vmem>>, %arg21: memref<1x1x128xf32, #tpu.memory_space<vmem>>, %arg22: memref<1x128x32xf32, #tpu.memory_space<vmem>>, %arg23: memref<1x1x32xf32, #tpu.memory_space<vmem>>, %arg24: memref<1x1x32xf32, #tpu.memory_space<vmem>>, %arg25: memref<1x1x32xf32, #tpu.memory_space<vmem>>, %arg26: memref<2x8x32xf32, #tpu.memory_space<vmem>>, %arg27: memref<16x32xf32, #tpu.memory_space<vmem>>) attributes {dimension_semantics = [#tpu.dimension_semantics<parallel>, #tpu.dimension_semantics<arbitrary>], iteration_bounds = array<i64: 1, 2>, scalar_prefetch = 0 : i64, scratch_operands = 1 : i64, tpu.core_type = #tpu.core_type<tc>, window_params = [{transform_indices = @transform_0, window_bounds = array<i64: 2, 8, 32>}, {transform_indices = @transform_1, window_bounds = array<i64: 2, 8, 8>}, {transform_indices = @transform_2, window_bounds = array<i64: 1, 32, 32>}, {transform_indices = @transform_3, window_bounds = array<i64: 1, 1, 32>}, {transform_indices = @transform_4, window_bounds = array<i64: 1, 32, 32>}, {transform_indices = @transform_5, window_bounds = array<i64: 1, 1, 32>}, {transform_indices = @transform_6, window_bounds = array<i64: 1, 32, 32>}, {transform_indices = @transform_7, window_bounds = array<i64: 1, 1, 32>}, {transform_indices = @transform_8, window_bounds = array<i64: 1, 32, 32>}, {transform_indices = @transform_9, window_bounds = array<i64: 1, 1, 32>}, {transform_indices = @transform_10, window_bounds = array<i64: 1, 5, 64>}, {transform_indices = @transform_11, window_bounds = array<i64: 1, 1, 64>}, {transform_indices = @transform_12, window_bounds = array<i64: 1, 64, 64>}, {transform_indices = @transform_13, window_bounds = array<i64: 1, 1, 64>}, {transform_indices = @transform_14, window_bounds = array<i64: 1, 64, 4>}, {transform_indices = @transform_15, window_bounds = array<i64: 1, 1, 4>}, {transform_indices = @transform_16, window_bounds = array<i64: 1, 1, 32>}, {transform_indices = @transform_17, window_bounds = array<i64: 1, 1, 32>}, {transform_indices = @transform_18, window_bounds = array<i64: 1, 32, 128>}, {transform_indices = @transform_19, window_bounds = array<i64: 1, 1, 128>}, {transform_indices = @transform_20, window_bounds = array<i64: 1, 128, 32>}, {transform_indices = @transform_21, window_bounds = array<i64: 1, 1, 32>}, {transform_indices = @transform_22, window_bounds = array<i64: 1, 1, 32>}, {transform_indices = @transform_23, window_bounds = array<i64: 1, 1, 32>}, {transform_indices = @transform_24, window_bounds = array<i64: 2, 8, 32>}]} {
    %c0_i32 = arith.constant 0 : i32
    %0 = arith.cmpi eq, %arg1, %c0_i32 : i32
    %1 = arith.extui %0 : i1 to i32
    %c0_i32_0 = arith.constant 0 : i32
    %2 = arith.cmpi ne, %1, %c0_i32_0 : i32
    scf.if %2 {
      %c0_125 = arith.constant 0 : index
      %c0_126 = arith.constant 0 : index
      %c0_127 = arith.constant 0 : index
      %270 = vector.load %arg2[%c0_125, %c0_126, %c0_127] : memref<2x8x32xf32, #tpu.memory_space<vmem>>, vector<2x8x32xf32>
      %271 = vector.shape_cast %270 : vector<2x8x32xf32> to vector<16x32xf32>
      %c0_128 = arith.constant 0 : index
      %c0_129 = arith.constant 0 : index
      %272 = vector.load %arg27[%c0_128, %c0_129] : memref<16x32xf32, #tpu.memory_space<vmem>>, vector<16x32xf32>
      tpu.vector_store %arg27[%c0_128, %c0_129], %271 {strides = array<i32>} : memref<16x32xf32, #tpu.memory_space<vmem>>, vector<16x32xf32>,
    } else {
    }
    %c0 = arith.constant 0 : index
    %c0_1 = arith.constant 0 : index
    %3 = vector.load %arg27[%c0, %c0_1] : memref<16x32xf32, #tpu.memory_space<vmem>>, vector<16x32xf32>
    %c0_2 = arith.constant 0 : index
    %c0_3 = arith.constant 0 : index
    %c0_4 = arith.constant 0 : index
    %4 = vector.load %arg3[%c0_2, %c0_3, %c0_4] : memref<2x8x8xf32, #tpu.memory_space<vmem>>, vector<2x8x8xf32>
    %c0_5 = arith.constant 0 : index
    %c0_6 = arith.constant 0 : index
    %c0_7 = arith.constant 0 : index
    %5 = vector.load %arg4[%c0_5, %c0_6, %c0_7] : memref<1x32x32xf32, #tpu.memory_space<vmem>>, vector<1x32x32xf32>
    %6 = vector.shape_cast %5 : vector<1x32x32xf32> to vector<32x32xf32>
    %cst = arith.constant dense<0.000000e+00> : vector<16x32xf32>
    %7 = tpu.matmul %3, %6, %cst {dimension_numbers = #tpu.dot_dimension_numbers<[1], [0], [0], [1], [0, 0, 1, 1], [], []>} : vector<16x32xf32>, vector<32x32xf32>, vector<16x32xf32> -> vector<16x32xf32>
    %c0_8 = arith.constant 0 : index
    %c0_9 = arith.constant 0 : index
    %c0_10 = arith.constant 0 : index
    %8 = vector.load %arg5[%c0_8, %c0_9, %c0_10] : memref<1x1x32xf32, #tpu.memory_space<vmem>>, vector<1x1x32xf32>
    %9 = vector.shape_cast %8 : vector<1x1x32xf32> to vector<1x32xf32>
    %10 = vector.broadcast %9 : vector<1x32xf32> to vector<16x32xf32>
    %11 = arith.addf %7, %10 : vector<16x32xf32>
    %c0_11 = arith.constant 0 : index
    %c0_12 = arith.constant 0 : index
    %c0_13 = arith.constant 0 : index
    %12 = vector.load %arg6[%c0_11, %c0_12, %c0_13] : memref<1x32x32xf32, #tpu.memory_space<vmem>>, vector<1x32x32xf32>
    %13 = vector.shape_cast %12 : vector<1x32x32xf32> to vector<32x32xf32>
    %cst_14 = arith.constant dense<0.000000e+00> : vector<16x32xf32>
    %14 = tpu.matmul %3, %13, %cst_14 {dimension_numbers = #tpu.dot_dimension_numbers<[1], [0], [0], [1], [0, 0, 1, 1], [], []>} : vector<16x32xf32>, vector<32x32xf32>, vector<16x32xf32> -> vector<16x32xf32>
    %c0_15 = arith.constant 0 : index
    %c0_16 = arith.constant 0 : index
    %c0_17 = arith.constant 0 : index
    %15 = vector.load %arg7[%c0_15, %c0_16, %c0_17] : memref<1x1x32xf32, #tpu.memory_space<vmem>>, vector<1x1x32xf32>
    %16 = vector.shape_cast %15 : vector<1x1x32xf32> to vector<1x32xf32>
    %17 = vector.broadcast %16 : vector<1x32xf32> to vector<16x32xf32>
    %18 = arith.addf %14, %17 : vector<16x32xf32>
    %c0_18 = arith.constant 0 : index
    %c0_19 = arith.constant 0 : index
    %c0_20 = arith.constant 0 : index
    %19 = vector.load %arg8[%c0_18, %c0_19, %c0_20] : memref<1x32x32xf32, #tpu.memory_space<vmem>>, vector<1x32x32xf32>
    %20 = vector.shape_cast %19 : vector<1x32x32xf32> to vector<32x32xf32>
    %cst_21 = arith.constant dense<0.000000e+00> : vector<16x32xf32>
    %21 = tpu.matmul %3, %20, %cst_21 {dimension_numbers = #tpu.dot_dimension_numbers<[1], [0], [0], [1], [0, 0, 1, 1], [], []>} : vector<16x32xf32>, vector<32x32xf32>, vector<16x32xf32> -> vector<16x32xf32>
    %c0_22 = arith.constant 0 : index
    %c0_23 = arith.constant 0 : index
    %c0_24 = arith.constant 0 : index
    %22 = vector.load %arg9[%c0_22, %c0_23, %c0_24] : memref<1x1x32xf32, #tpu.memory_space<vmem>>, vector<1x1x32xf32>
    %23 = vector.shape_cast %22 : vector<1x1x32xf32> to vector<1x32xf32>
    %24 = vector.broadcast %23 : vector<1x32xf32> to vector<16x32xf32>
    %25 = arith.addf %21, %24 : vector<16x32xf32>
    %26 = vector.extract_strided_slice %11 {offsets = [0, 0], sizes = [8, 32], strides = [1, 1]} : vector<16x32xf32> to vector<8x32xf32>
    %27 = vector.extract_strided_slice %18 {offsets = [0, 0], sizes = [8, 32], strides = [1, 1]} : vector<16x32xf32> to vector<8x32xf32>
    %28 = vector.extract_strided_slice %26 {offsets = [0, 0], sizes = [8, 8], strides = [1, 1]} : vector<8x32xf32> to vector<8x8xf32>
    %29 = vector.extract_strided_slice %27 {offsets = [0, 0], sizes = [8, 8], strides = [1, 1]} : vector<8x32xf32> to vector<8x8xf32>
    "tpu.trace_start"() <{level = 10 : i32, message = "qd,kd->qk"}> : () -> ()
    %cst_25 = arith.constant dense<0.000000e+00> : vector<8x8xf32>
    %30 = tpu.matmul %28, %29, %cst_25 {dimension_numbers = #tpu.dot_dimension_numbers<[1], [1], [0], [0], [0, 0, 1, 0], [], []>} : vector<8x8xf32>, vector<8x8xf32>, vector<8x8xf32> -> vector<8x8xf32>
    "tpu.trace_stop"() : () -> ()
    %cst_26 = arith.constant 0.353553385 : f32
    %31 = vector.broadcast %cst_26 : f32 to vector<8x8xf32>
    %32 = arith.mulf %30, %31 : vector<8x8xf32>
    %33 = vector.extract_strided_slice %26 {offsets = [0, 8], sizes = [8, 8], strides = [1, 1]} : vector<8x32xf32> to vector<8x8xf32>
    %34 = vector.extract_strided_slice %27 {offsets = [0, 8], sizes = [8, 8], strides = [1, 1]} : vector<8x32xf32> to vector<8x8xf32>
    "tpu.trace_start"() <{level = 10 : i32, message = "qd,kd->qk"}> : () -> ()
    %cst_27 = arith.constant dense<0.000000e+00> : vector<8x8xf32>
    %35 = tpu.matmul %33, %34, %cst_27 {dimension_numbers = #tpu.dot_dimension_numbers<[1], [1], [0], [0], [0, 0, 1, 0], [], []>} : vector<8x8xf32>, vector<8x8xf32>, vector<8x8xf32> -> vector<8x8xf32>
    "tpu.trace_stop"() : () -> ()
    %cst_28 = arith.constant 0.353553385 : f32
    %36 = vector.broadcast %cst_28 : f32 to vector<8x8xf32>
    %37 = arith.mulf %35, %36 : vector<8x8xf32>
    %38 = vector.extract_strided_slice %26 {offsets = [0, 16], sizes = [8, 8], strides = [1, 1]} : vector<8x32xf32> to vector<8x8xf32>
    %39 = vector.extract_strided_slice %27 {offsets = [0, 16], sizes = [8, 8], strides = [1, 1]} : vector<8x32xf32> to vector<8x8xf32>
    "tpu.trace_start"() <{level = 10 : i32, message = "qd,kd->qk"}> : () -> ()
    %cst_29 = arith.constant dense<0.000000e+00> : vector<8x8xf32>
    %40 = tpu.matmul %38, %39, %cst_29 {dimension_numbers = #tpu.dot_dimension_numbers<[1], [1], [0], [0], [0, 0, 1, 0], [], []>} : vector<8x8xf32>, vector<8x8xf32>, vector<8x8xf32> -> vector<8x8xf32>
    "tpu.trace_stop"() : () -> ()
    %cst_30 = arith.constant 0.353553385 : f32
    %41 = vector.broadcast %cst_30 : f32 to vector<8x8xf32>
    %42 = arith.mulf %40, %41 : vector<8x8xf32>
    %43 = vector.extract_strided_slice %26 {offsets = [0, 24], sizes = [8, 8], strides = [1, 1]} : vector<8x32xf32> to vector<8x8xf32>
    %44 = vector.extract_strided_slice %27 {offsets = [0, 24], sizes = [8, 8], strides = [1, 1]} : vector<8x32xf32> to vector<8x8xf32>
    "tpu.trace_start"() <{level = 10 : i32, message = "qd,kd->qk"}> : () -> ()
    %cst_31 = arith.constant dense<0.000000e+00> : vector<8x8xf32>
    %45 = tpu.matmul %43, %44, %cst_31 {dimension_numbers = #tpu.dot_dimension_numbers<[1], [1], [0], [0], [0, 0, 1, 0], [], []>} : vector<8x8xf32>, vector<8x8xf32>, vector<8x8xf32> -> vector<8x8xf32>
    "tpu.trace_stop"() : () -> ()
    %cst_32 = arith.constant 0.353553385 : f32
    %46 = vector.broadcast %cst_32 : f32 to vector<8x8xf32>
    %47 = arith.mulf %45, %46 : vector<8x8xf32>
    %48 = vector.shape_cast %32 : vector<8x8xf32> to vector<1x8x8xf32>
    %49 = vector.shape_cast %37 : vector<8x8xf32> to vector<1x8x8xf32>
    %50 = vector.shape_cast %42 : vector<8x8xf32> to vector<1x8x8xf32>
    %51 = vector.shape_cast %47 : vector<8x8xf32> to vector<1x8x8xf32>
    %52 = tpu.concatenate %48, %49, %50, %51 in 0 : vector<1x8x8xf32>, vector<1x8x8xf32>, vector<1x8x8xf32>, vector<1x8x8xf32> -> vector<4x8x8xf32>
    %cst_33 = arith.constant dense<0xFF800000> : vector<4x8xf32>
    %53 = vector.multi_reduction <maximumf>, %52, %cst_33 [2] : vector<4x8x8xf32> to vector<4x8xf32>
    %54 = vector.shape_cast %53 : vector<4x8xf32> to vector<4x8x1xf32>
    %55 = vector.broadcast %54 : vector<4x8x1xf32> to vector<4x8x8xf32>
    %56 = arith.subf %52, %55 : vector<4x8x8xf32>
    %57 = math.exp %56 : vector<4x8x8xf32>
    %cst_34 = arith.constant dense<0.000000e+00> : vector<4x8xf32>
    %58 = vector.multi_reduction <add>, %57, %cst_34 [2] : vector<4x8x8xf32> to vector<4x8xf32>
    %59 = vector.shape_cast %58 : vector<4x8xf32> to vector<4x8x1xf32>
    %60 = tpu.reciprocal %59 {approx = true} : vector<4x8x1xf32> -> vector<4x8x1xf32>
    %61 = arith.mulf %59, %60 : vector<4x8x1xf32>
    %cst_35 = arith.constant 2.000000e+00 : f32
    %62 = vector.broadcast %cst_35 : f32 to vector<4x8x1xf32>
    %63 = arith.subf %62, %61 : vector<4x8x1xf32>
    %64 = arith.mulf %60, %63 : vector<4x8x1xf32>
    %65 = vector.broadcast %64 : vector<4x8x1xf32> to vector<4x8x8xf32>
    %66 = arith.mulf %57, %65 : vector<4x8x8xf32>
    %67 = vector.extract_strided_slice %4 {offsets = [0, 0, 0], sizes = [1, 8, 8], strides = [1, 1, 1]} : vector<2x8x8xf32> to vector<1x8x8xf32>
    %68 = vector.shape_cast %67 : vector<1x8x8xf32> to vector<8x8xf32>
    %69 = vector.shape_cast %68 : vector<8x8xf32> to vector<1x8x8xf32>
    %70 = tpu.concatenate %66, %69 in 0 : vector<4x8x8xf32>, vector<1x8x8xf32> -> vector<5x8x8xf32>
    %71 = vector.shape_cast %70 : vector<5x8x8xf32> to vector<5x64xf32>
    %72 = tpu.transpose %71, [1, 0] : vector<5x64xf32> -> vector<64x5xf32>
    %73 = vector.extract_strided_slice %11 {offsets = [8, 0], sizes = [8, 32], strides = [1, 1]} : vector<16x32xf32> to vector<8x32xf32>
    %74 = vector.extract_strided_slice %18 {offsets = [8, 0], sizes = [8, 32], strides = [1, 1]} : vector<16x32xf32> to vector<8x32xf32>
    %75 = vector.extract_strided_slice %73 {offsets = [0, 0], sizes = [8, 8], strides = [1, 1]} : vector<8x32xf32> to vector<8x8xf32>
    %76 = vector.extract_strided_slice %74 {offsets = [0, 0], sizes = [8, 8], strides = [1, 1]} : vector<8x32xf32> to vector<8x8xf32>
    "tpu.trace_start"() <{level = 10 : i32, message = "qd,kd->qk"}> : () -> ()
    %cst_36 = arith.constant dense<0.000000e+00> : vector<8x8xf32>
    %77 = tpu.matmul %75, %76, %cst_36 {dimension_numbers = #tpu.dot_dimension_numbers<[1], [1], [0], [0], [0, 0, 1, 0], [], []>} : vector<8x8xf32>, vector<8x8xf32>, vector<8x8xf32> -> vector<8x8xf32>
    "tpu.trace_stop"() : () -> ()
    %cst_37 = arith.constant 0.353553385 : f32
    %78 = vector.broadcast %cst_37 : f32 to vector<8x8xf32>
    %79 = arith.mulf %77, %78 : vector<8x8xf32>
    %80 = vector.extract_strided_slice %73 {offsets = [0, 8], sizes = [8, 8], strides = [1, 1]} : vector<8x32xf32> to vector<8x8xf32>
    %81 = vector.extract_strided_slice %74 {offsets = [0, 8], sizes = [8, 8], strides = [1, 1]} : vector<8x32xf32> to vector<8x8xf32>
    "tpu.trace_start"() <{level = 10 : i32, message = "qd,kd->qk"}> : () -> ()
    %cst_38 = arith.constant dense<0.000000e+00> : vector<8x8xf32>
    %82 = tpu.matmul %80, %81, %cst_38 {dimension_numbers = #tpu.dot_dimension_numbers<[1], [1], [0], [0], [0, 0, 1, 0], [], []>} : vector<8x8xf32>, vector<8x8xf32>, vector<8x8xf32> -> vector<8x8xf32>
    "tpu.trace_stop"() : () -> ()
    %cst_39 = arith.constant 0.353553385 : f32
    %83 = vector.broadcast %cst_39 : f32 to vector<8x8xf32>
    %84 = arith.mulf %82, %83 : vector<8x8xf32>
    %85 = vector.extract_strided_slice %73 {offsets = [0, 16], sizes = [8, 8], strides = [1, 1]} : vector<8x32xf32> to vector<8x8xf32>
    %86 = vector.extract_strided_slice %74 {offsets = [0, 16], sizes = [8, 8], strides = [1, 1]} : vector<8x32xf32> to vector<8x8xf32>
    "tpu.trace_start"() <{level = 10 : i32, message = "qd,kd->qk"}> : () -> ()
    %cst_40 = arith.constant dense<0.000000e+00> : vector<8x8xf32>
    %87 = tpu.matmul %85, %86, %cst_40 {dimension_numbers = #tpu.dot_dimension_numbers<[1], [1], [0], [0], [0, 0, 1, 0], [], []>} : vector<8x8xf32>, vector<8x8xf32>, vector<8x8xf32> -> vector<8x8xf32>
    "tpu.trace_stop"() : () -> ()
    %cst_41 = arith.constant 0.353553385 : f32
    %88 = vector.broadcast %cst_41 : f32 to vector<8x8xf32>
    %89 = arith.mulf %87, %88 : vector<8x8xf32>
    %90 = vector.extract_strided_slice %73 {offsets = [0, 24], sizes = [8, 8], strides = [1, 1]} : vector<8x32xf32> to vector<8x8xf32>
    %91 = vector.extract_strided_slice %74 {offsets = [0, 24], sizes = [8, 8], strides = [1, 1]} : vector<8x32xf32> to vector<8x8xf32>
    "tpu.trace_start"() <{level = 10 : i32, message = "qd,kd->qk"}> : () -> ()
    %cst_42 = arith.constant dense<0.000000e+00> : vector<8x8xf32>
    %92 = tpu.matmul %90, %91, %cst_42 {dimension_numbers = #tpu.dot_dimension_numbers<[1], [1], [0], [0], [0, 0, 1, 0], [], []>} : vector<8x8xf32>, vector<8x8xf32>, vector<8x8xf32> -> vector<8x8xf32>
    "tpu.trace_stop"() : () -> ()
    %cst_43 = arith.constant 0.353553385 : f32
    %93 = vector.broadcast %cst_43 : f32 to vector<8x8xf32>
    %94 = arith.mulf %92, %93 : vector<8x8xf32>
    %95 = vector.shape_cast %79 : vector<8x8xf32> to vector<1x8x8xf32>
    %96 = vector.shape_cast %84 : vector<8x8xf32> to vector<1x8x8xf32>
    %97 = vector.shape_cast %89 : vector<8x8xf32> to vector<1x8x8xf32>
    %98 = vector.shape_cast %94 : vector<8x8xf32> to vector<1x8x8xf32>
    %99 = tpu.concatenate %95, %96, %97, %98 in 0 : vector<1x8x8xf32>, vector<1x8x8xf32>, vector<1x8x8xf32>, vector<1x8x8xf32> -> vector<4x8x8xf32>
    %cst_44 = arith.constant dense<0xFF800000> : vector<4x8xf32>
    %100 = vector.multi_reduction <maximumf>, %99, %cst_44 [2] : vector<4x8x8xf32> to vector<4x8xf32>
    %101 = vector.shape_cast %100 : vector<4x8xf32> to vector<4x8x1xf32>
    %102 = vector.broadcast %101 : vector<4x8x1xf32> to vector<4x8x8xf32>
    %103 = arith.subf %99, %102 : vector<4x8x8xf32>
    %104 = math.exp %103 : vector<4x8x8xf32>
    %cst_45 = arith.constant dense<0.000000e+00> : vector<4x8xf32>
    %105 = vector.multi_reduction <add>, %104, %cst_45 [2] : vector<4x8x8xf32> to vector<4x8xf32>
    %106 = vector.shape_cast %105 : vector<4x8xf32> to vector<4x8x1xf32>
    %107 = tpu.reciprocal %106 {approx = true} : vector<4x8x1xf32> -> vector<4x8x1xf32>
    %108 = arith.mulf %106, %107 : vector<4x8x1xf32>
    %cst_46 = arith.constant 2.000000e+00 : f32
    %109 = vector.broadcast %cst_46 : f32 to vector<4x8x1xf32>
    %110 = arith.subf %109, %108 : vector<4x8x1xf32>
    %111 = arith.mulf %107, %110 : vector<4x8x1xf32>
    %112 = vector.broadcast %111 : vector<4x8x1xf32> to vector<4x8x8xf32>
    %113 = arith.mulf %104, %112 : vector<4x8x8xf32>
    %114 = vector.extract_strided_slice %4 {offsets = [1, 0, 0], sizes = [1, 8, 8], strides = [1, 1, 1]} : vector<2x8x8xf32> to vector<1x8x8xf32>
    %115 = vector.shape_cast %114 : vector<1x8x8xf32> to vector<8x8xf32>
    %116 = vector.shape_cast %115 : vector<8x8xf32> to vector<1x8x8xf32>
    %117 = tpu.concatenate %113, %116 in 0 : vector<4x8x8xf32>, vector<1x8x8xf32> -> vector<5x8x8xf32>
    %118 = vector.shape_cast %117 : vector<5x8x8xf32> to vector<5x64xf32>
    %119 = tpu.transpose %118, [1, 0] : vector<5x64xf32> -> vector<64x5xf32>
    %120 = tpu.concatenate %72, %119 in 0 : vector<64x5xf32>, vector<64x5xf32> -> vector<128x5xf32>
    %c0_47 = arith.constant 0 : index
    %c0_48 = arith.constant 0 : index
    %c0_49 = arith.constant 0 : index
    %121 = vector.load %arg12[%c0_47, %c0_48, %c0_49] : memref<1x5x64xf32, #tpu.memory_space<vmem>>, vector<1x5x64xf32>
    %122 = vector.shape_cast %121 : vector<1x5x64xf32> to vector<5x64xf32>
    %cst_50 = arith.constant dense<0.000000e+00> : vector<128x64xf32>
    %123 = tpu.matmul %120, %122, %cst_50 {dimension_numbers = #tpu.dot_dimension_numbers<[1], [0], [0], [1], [0, 0, 1, 1], [], []>} : vector<128x5xf32>, vector<5x64xf32>, vector<128x64xf32> -> vector<128x64xf32>
    %c0_51 = arith.constant 0 : index
    %c0_52 = arith.constant 0 : index
    %c0_53 = arith.constant 0 : index
    %124 = vector.load %arg13[%c0_51, %c0_52, %c0_53] : memref<1x1x64xf32, #tpu.memory_space<vmem>>, vector<1x1x64xf32>
    %125 = vector.shape_cast %124 : vector<1x1x64xf32> to vector<1x64xf32>
    %126 = vector.broadcast %125 : vector<1x64xf32> to vector<128x64xf32>
    %127 = arith.addf %123, %126 : vector<128x64xf32>
    %cst_54 = arith.constant 0.000000e+00 : f32
    %128 = vector.broadcast %cst_54 : f32 to vector<128x64xf32>
    %129 = arith.maximumf %127, %128 : vector<128x64xf32>
    %c0_55 = arith.constant 0 : index
    %c0_56 = arith.constant 0 : index
    %c0_57 = arith.constant 0 : index
    %130 = vector.load %arg14[%c0_55, %c0_56, %c0_57] : memref<1x64x64xf32, #tpu.memory_space<vmem>>, vector<1x64x64xf32>
    %131 = vector.shape_cast %130 : vector<1x64x64xf32> to vector<64x64xf32>
    %cst_58 = arith.constant dense<0.000000e+00> : vector<128x64xf32>
    %132 = tpu.matmul %129, %131, %cst_58 {dimension_numbers = #tpu.dot_dimension_numbers<[1], [0], [0], [1], [0, 0, 1, 1], [], []>} : vector<128x64xf32>, vector<64x64xf32>, vector<128x64xf32> -> vector<128x64xf32>
    %c0_59 = arith.constant 0 : index
    %c0_60 = arith.constant 0 : index
    %c0_61 = arith.constant 0 : index
    %133 = vector.load %arg15[%c0_59, %c0_60, %c0_61] : memref<1x1x64xf32, #tpu.memory_space<vmem>>, vector<1x1x64xf32>
    %134 = vector.shape_cast %133 : vector<1x1x64xf32> to vector<1x64xf32>
    %135 = vector.broadcast %134 : vector<1x64xf32> to vector<128x64xf32>
    %136 = arith.addf %132, %135 : vector<128x64xf32>
    %cst_62 = arith.constant 0.000000e+00 : f32
    %137 = vector.broadcast %cst_62 : f32 to vector<128x64xf32>
    %138 = arith.maximumf %136, %137 : vector<128x64xf32>
    %c0_63 = arith.constant 0 : index
    %c0_64 = arith.constant 0 : index
    %c0_65 = arith.constant 0 : index
    %139 = vector.load %arg16[%c0_63, %c0_64, %c0_65] : memref<1x64x4xf32, #tpu.memory_space<vmem>>, vector<1x64x4xf32>
    %140 = vector.shape_cast %139 : vector<1x64x4xf32> to vector<64x4xf32>
    %cst_66 = arith.constant dense<0.000000e+00> : vector<128x4xf32>
    %141 = tpu.matmul %138, %140, %cst_66 {dimension_numbers = #tpu.dot_dimension_numbers<[1], [0], [0], [1], [0, 0, 1, 1], [], []>} : vector<128x64xf32>, vector<64x4xf32>, vector<128x4xf32> -> vector<128x4xf32>
    %c0_67 = arith.constant 0 : index
    %c0_68 = arith.constant 0 : index
    %c0_69 = arith.constant 0 : index
    %142 = vector.load %arg17[%c0_67, %c0_68, %c0_69] : memref<1x1x4xf32, #tpu.memory_space<vmem>>, vector<1x1x4xf32>
    %143 = vector.shape_cast %142 : vector<1x1x4xf32> to vector<1x4xf32>
    %144 = vector.broadcast %143 : vector<1x4xf32> to vector<128x4xf32>
    %145 = arith.addf %141, %144 : vector<128x4xf32>
    %146 = vector.extract_strided_slice %145 {offsets = [0, 0], sizes = [64, 4], strides = [1, 1]} : vector<128x4xf32> to vector<64x4xf32>
    %147 = tpu.transpose %146, [1, 0] : vector<64x4xf32> -> vector<4x64xf32>
    %148 = vector.shape_cast %147 : vector<4x64xf32> to vector<4x8x8xf32>
    %149 = vector.extract_strided_slice %25 {offsets = [0, 0], sizes = [8, 32], strides = [1, 1]} : vector<16x32xf32> to vector<8x32xf32>
    %150 = vector.extract_strided_slice %148 {offsets = [0, 0, 0], sizes = [1, 8, 8], strides = [1, 1, 1]} : vector<4x8x8xf32> to vector<1x8x8xf32>
    %151 = vector.shape_cast %150 : vector<1x8x8xf32> to vector<8x8xf32>
    %152 = vector.extract_strided_slice %149 {offsets = [0, 0], sizes = [8, 8], strides = [1, 1]} : vector<8x32xf32> to vector<8x8xf32>
    %cst_70 = arith.constant dense<0.000000e+00> : vector<8x8xf32>
    %153 = tpu.matmul %151, %152, %cst_70 {dimension_numbers = #tpu.dot_dimension_numbers<[1], [0], [0], [1], [0, 0, 1, 1], [], []>} : vector<8x8xf32>, vector<8x8xf32>, vector<8x8xf32> -> vector<8x8xf32>
    %154 = vector.extract_strided_slice %148 {offsets = [1, 0, 0], sizes = [1, 8, 8], strides = [1, 1, 1]} : vector<4x8x8xf32> to vector<1x8x8xf32>
    %155 = vector.shape_cast %154 : vector<1x8x8xf32> to vector<8x8xf32>
    %156 = vector.extract_strided_slice %149 {offsets = [0, 8], sizes = [8, 8], strides = [1, 1]} : vector<8x32xf32> to vector<8x8xf32>
    %cst_71 = arith.constant dense<0.000000e+00> : vector<8x8xf32>
    %157 = tpu.matmul %155, %156, %cst_71 {dimension_numbers = #tpu.dot_dimension_numbers<[1], [0], [0], [1], [0, 0, 1, 1], [], []>} : vector<8x8xf32>, vector<8x8xf32>, vector<8x8xf32> -> vector<8x8xf32>
    %158 = vector.extract_strided_slice %148 {offsets = [2, 0, 0], sizes = [1, 8, 8], strides = [1, 1, 1]} : vector<4x8x8xf32> to vector<1x8x8xf32>
    %159 = vector.shape_cast %158 : vector<1x8x8xf32> to vector<8x8xf32>
    %160 = vector.extract_strided_slice %149 {offsets = [0, 16], sizes = [8, 8], strides = [1, 1]} : vector<8x32xf32> to vector<8x8xf32>
    %cst_72 = arith.constant dense<0.000000e+00> : vector<8x8xf32>
    %161 = tpu.matmul %159, %160, %cst_72 {dimension_numbers = #tpu.dot_dimension_numbers<[1], [0], [0], [1], [0, 0, 1, 1], [], []>} : vector<8x8xf32>, vector<8x8xf32>, vector<8x8xf32> -> vector<8x8xf32>
    %162 = vector.extract_strided_slice %148 {offsets = [3, 0, 0], sizes = [1, 8, 8], strides = [1, 1, 1]} : vector<4x8x8xf32> to vector<1x8x8xf32>
    %163 = vector.shape_cast %162 : vector<1x8x8xf32> to vector<8x8xf32>
    %164 = vector.extract_strided_slice %149 {offsets = [0, 24], sizes = [8, 8], strides = [1, 1]} : vector<8x32xf32> to vector<8x8xf32>
    %cst_73 = arith.constant dense<0.000000e+00> : vector<8x8xf32>
    %165 = tpu.matmul %163, %164, %cst_73 {dimension_numbers = #tpu.dot_dimension_numbers<[1], [0], [0], [1], [0, 0, 1, 1], [], []>} : vector<8x8xf32>, vector<8x8xf32>, vector<8x8xf32> -> vector<8x8xf32>
    %166 = tpu.concatenate %153, %157, %161, %165 in 1 : vector<8x8xf32>, vector<8x8xf32>, vector<8x8xf32>, vector<8x8xf32> -> vector<8x32xf32>
    %167 = vector.extract_strided_slice %145 {offsets = [64, 0], sizes = [64, 4], strides = [1, 1]} : vector<128x4xf32> to vector<64x4xf32>
    %168 = tpu.transpose %167, [1, 0] : vector<64x4xf32> -> vector<4x64xf32>
    %169 = vector.shape_cast %168 : vector<4x64xf32> to vector<4x8x8xf32>
    %170 = vector.extract_strided_slice %25 {offsets = [8, 0], sizes = [8, 32], strides = [1, 1]} : vector<16x32xf32> to vector<8x32xf32>
    %171 = vector.extract_strided_slice %169 {offsets = [0, 0, 0], sizes = [1, 8, 8], strides = [1, 1, 1]} : vector<4x8x8xf32> to vector<1x8x8xf32>
    %172 = vector.shape_cast %171 : vector<1x8x8xf32> to vector<8x8xf32>
    %173 = vector.extract_strided_slice %170 {offsets = [0, 0], sizes = [8, 8], strides = [1, 1]} : vector<8x32xf32> to vector<8x8xf32>
    %cst_74 = arith.constant dense<0.000000e+00> : vector<8x8xf32>
    %174 = tpu.matmul %172, %173, %cst_74 {dimension_numbers = #tpu.dot_dimension_numbers<[1], [0], [0], [1], [0, 0, 1, 1], [], []>} : vector<8x8xf32>, vector<8x8xf32>, vector<8x8xf32> -> vector<8x8xf32>
    %175 = vector.extract_strided_slice %169 {offsets = [1, 0, 0], sizes = [1, 8, 8], strides = [1, 1, 1]} : vector<4x8x8xf32> to vector<1x8x8xf32>
    %176 = vector.shape_cast %175 : vector<1x8x8xf32> to vector<8x8xf32>
    %177 = vector.extract_strided_slice %170 {offsets = [0, 8], sizes = [8, 8], strides = [1, 1]} : vector<8x32xf32> to vector<8x8xf32>
    %cst_75 = arith.constant dense<0.000000e+00> : vector<8x8xf32>
    %178 = tpu.matmul %176, %177, %cst_75 {dimension_numbers = #tpu.dot_dimension_numbers<[1], [0], [0], [1], [0, 0, 1, 1], [], []>} : vector<8x8xf32>, vector<8x8xf32>, vector<8x8xf32> -> vector<8x8xf32>
    %179 = vector.extract_strided_slice %169 {offsets = [2, 0, 0], sizes = [1, 8, 8], strides = [1, 1, 1]} : vector<4x8x8xf32> to vector<1x8x8xf32>
    %180 = vector.shape_cast %179 : vector<1x8x8xf32> to vector<8x8xf32>
    %181 = vector.extract_strided_slice %170 {offsets = [0, 16], sizes = [8, 8], strides = [1, 1]} : vector<8x32xf32> to vector<8x8xf32>
    %cst_76 = arith.constant dense<0.000000e+00> : vector<8x8xf32>
    %182 = tpu.matmul %180, %181, %cst_76 {dimension_numbers = #tpu.dot_dimension_numbers<[1], [0], [0], [1], [0, 0, 1, 1], [], []>} : vector<8x8xf32>, vector<8x8xf32>, vector<8x8xf32> -> vector<8x8xf32>
    %183 = vector.extract_strided_slice %169 {offsets = [3, 0, 0], sizes = [1, 8, 8], strides = [1, 1, 1]} : vector<4x8x8xf32> to vector<1x8x8xf32>
    %184 = vector.shape_cast %183 : vector<1x8x8xf32> to vector<8x8xf32>
    %185 = vector.extract_strided_slice %170 {offsets = [0, 24], sizes = [8, 8], strides = [1, 1]} : vector<8x32xf32> to vector<8x8xf32>
    %cst_77 = arith.constant dense<0.000000e+00> : vector<8x8xf32>
    %186 = tpu.matmul %184, %185, %cst_77 {dimension_numbers = #tpu.dot_dimension_numbers<[1], [0], [0], [1], [0, 0, 1, 1], [], []>} : vector<8x8xf32>, vector<8x8xf32>, vector<8x8xf32> -> vector<8x8xf32>
    %187 = tpu.concatenate %174, %178, %182, %186 in 1 : vector<8x8xf32>, vector<8x8xf32>, vector<8x8xf32>, vector<8x8xf32> -> vector<8x32xf32>
    %188 = tpu.concatenate %166, %187 in 0 : vector<8x32xf32>, vector<8x32xf32> -> vector<16x32xf32>
    %c0_78 = arith.constant 0 : index
    %c0_79 = arith.constant 0 : index
    %c0_80 = arith.constant 0 : index
    %189 = vector.load %arg10[%c0_78, %c0_79, %c0_80] : memref<1x32x32xf32, #tpu.memory_space<vmem>>, vector<1x32x32xf32>
    %190 = vector.shape_cast %189 : vector<1x32x32xf32> to vector<32x32xf32>
    %cst_81 = arith.constant dense<0.000000e+00> : vector<16x32xf32>
    %191 = tpu.matmul %188, %190, %cst_81 {dimension_numbers = #tpu.dot_dimension_numbers<[1], [0], [0], [1], [0, 0, 1, 1], [], []>} : vector<16x32xf32>, vector<32x32xf32>, vector<16x32xf32> -> vector<16x32xf32>
    %c0_82 = arith.constant 0 : index
    %c0_83 = arith.constant 0 : index
    %c0_84 = arith.constant 0 : index
    %192 = vector.load %arg11[%c0_82, %c0_83, %c0_84] : memref<1x1x32xf32, #tpu.memory_space<vmem>>, vector<1x1x32xf32>
    %193 = vector.shape_cast %192 : vector<1x1x32xf32> to vector<1x32xf32>
    %194 = vector.broadcast %193 : vector<1x32xf32> to vector<16x32xf32>
    %195 = arith.addf %191, %194 : vector<16x32xf32>
    %196 = arith.addf %3, %195 : vector<16x32xf32>
    %cst_85 = arith.constant dense<0.000000e+00> : vector<16xf32>
    %197 = vector.multi_reduction <add>, %196, %cst_85 [1] : vector<16x32xf32> to vector<16xf32>
    %198 = vector.shape_cast %197 : vector<16xf32> to vector<16x1xf32>
    %cst_86 = arith.constant 3.200000e+01 : f32
    %199 = vector.broadcast %cst_86 : f32 to vector<16x1xf32>
    %200 = arith.divf %198, %199 : vector<16x1xf32>
    %201 = vector.broadcast %200 : vector<16x1xf32> to vector<16x32xf32>
    %202 = arith.subf %196, %201 : vector<16x32xf32>
    %203 = arith.mulf %202, %202 : vector<16x32xf32>
    %cst_87 = arith.constant dense<0.000000e+00> : vector<16xf32>
    %204 = vector.multi_reduction <add>, %203, %cst_87 [1] : vector<16x32xf32> to vector<16xf32>
    %205 = vector.shape_cast %204 : vector<16xf32> to vector<16x1xf32>
    %cst_88 = arith.constant 3.200000e+01 : f32
    %206 = vector.broadcast %cst_88 : f32 to vector<16x1xf32>
    %207 = arith.divf %205, %206 : vector<16x1xf32>
    %208 = vector.broadcast %200 : vector<16x1xf32> to vector<16x32xf32>
    %209 = arith.subf %196, %208 : vector<16x32xf32>
    %cst_89 = arith.constant 9.99999974E-6 : f32
    %210 = vector.broadcast %cst_89 : f32 to vector<16x1xf32>
    %211 = arith.addf %207, %210 : vector<16x1xf32>
    %212 = math.rsqrt %211 : vector<16x1xf32>
    %213 = vector.broadcast %212 : vector<16x1xf32> to vector<16x32xf32>
    %214 = arith.mulf %209, %213 : vector<16x32xf32>
    %c0_90 = arith.constant 0 : index
    %c0_91 = arith.constant 0 : index
    %c0_92 = arith.constant 0 : index
    %215 = vector.load %arg18[%c0_90, %c0_91, %c0_92] : memref<1x1x32xf32, #tpu.memory_space<vmem>>, vector<1x1x32xf32>
    %216 = vector.shape_cast %215 : vector<1x1x32xf32> to vector<1x32xf32>
    %217 = vector.broadcast %216 : vector<1x32xf32> to vector<16x32xf32>
    %218 = arith.mulf %214, %217 : vector<16x32xf32>
    %c0_93 = arith.constant 0 : index
    %c0_94 = arith.constant 0 : index
    %c0_95 = arith.constant 0 : index
    %219 = vector.load %arg19[%c0_93, %c0_94, %c0_95] : memref<1x1x32xf32, #tpu.memory_space<vmem>>, vector<1x1x32xf32>
    %220 = vector.shape_cast %219 : vector<1x1x32xf32> to vector<1x32xf32>
    %221 = vector.broadcast %220 : vector<1x32xf32> to vector<16x32xf32>
    %222 = arith.addf %218, %221 : vector<16x32xf32>
    %c0_96 = arith.constant 0 : index
    %c0_97 = arith.constant 0 : index
    %c0_98 = arith.constant 0 : index
    %223 = vector.load %arg20[%c0_96, %c0_97, %c0_98] : memref<1x32x128xf32, #tpu.memory_space<vmem>>, vector<1x32x128xf32>
    %224 = vector.shape_cast %223 : vector<1x32x128xf32> to vector<32x128xf32>
    %cst_99 = arith.constant dense<0.000000e+00> : vector<16x128xf32>
    %225 = tpu.matmul %222, %224, %cst_99 {dimension_numbers = #tpu.dot_dimension_numbers<[1], [0], [0], [1], [0, 0, 1, 1], [], []>} : vector<16x32xf32>, vector<32x128xf32>, vector<16x128xf32> -> vector<16x128xf32>
    %c0_100 = arith.constant 0 : index
    %c0_101 = arith.constant 0 : index
    %c0_102 = arith.constant 0 : index
    %226 = vector.load %arg21[%c0_100, %c0_101, %c0_102] : memref<1x1x128xf32, #tpu.memory_space<vmem>>, vector<1x1x128xf32>
    %227 = vector.shape_cast %226 : vector<1x1x128xf32> to vector<1x128xf32>
    %228 = vector.broadcast %227 : vector<1x128xf32> to vector<16x128xf32>
    %229 = arith.addf %225, %228 : vector<16x128xf32>
    %cst_103 = arith.constant 0.000000e+00 : f32
    %230 = vector.broadcast %cst_103 : f32 to vector<16x128xf32>
    %231 = arith.maximumf %229, %230 : vector<16x128xf32>
    %c0_104 = arith.constant 0 : index
    %c0_105 = arith.constant 0 : index
    %c0_106 = arith.constant 0 : index
    %232 = vector.load %arg22[%c0_104, %c0_105, %c0_106] : memref<1x128x32xf32, #tpu.memory_space<vmem>>, vector<1x128x32xf32>
    %233 = vector.shape_cast %232 : vector<1x128x32xf32> to vector<128x32xf32>
    %cst_107 = arith.constant dense<0.000000e+00> : vector<16x32xf32>
    %234 = tpu.matmul %231, %233, %cst_107 {dimension_numbers = #tpu.dot_dimension_numbers<[1], [0], [0], [1], [0, 0, 1, 1], [], []>} : vector<16x128xf32>, vector<128x32xf32>, vector<16x32xf32> -> vector<16x32xf32>
    %c0_108 = arith.constant 0 : index
    %c0_109 = arith.constant 0 : index
    %c0_110 = arith.constant 0 : index
    %235 = vector.load %arg23[%c0_108, %c0_109, %c0_110] : memref<1x1x32xf32, #tpu.memory_space<vmem>>, vector<1x1x32xf32>
    %236 = vector.shape_cast %235 : vector<1x1x32xf32> to vector<1x32xf32>
    %237 = vector.broadcast %236 : vector<1x32xf32> to vector<16x32xf32>
    %238 = arith.addf %234, %237 : vector<16x32xf32>
    %239 = arith.addf %222, %238 : vector<16x32xf32>
    %cst_111 = arith.constant dense<0.000000e+00> : vector<16xf32>
    %240 = vector.multi_reduction <add>, %239, %cst_111 [1] : vector<16x32xf32> to vector<16xf32>
    %241 = vector.shape_cast %240 : vector<16xf32> to vector<16x1xf32>
    %cst_112 = arith.constant 3.200000e+01 : f32
    %242 = vector.broadcast %cst_112 : f32 to vector<16x1xf32>
    %243 = arith.divf %241, %242 : vector<16x1xf32>
    %244 = vector.broadcast %243 : vector<16x1xf32> to vector<16x32xf32>
    %245 = arith.subf %239, %244 : vector<16x32xf32>
    %246 = arith.mulf %245, %245 : vector<16x32xf32>
    %cst_113 = arith.constant dense<0.000000e+00> : vector<16xf32>
    %247 = vector.multi_reduction <add>, %246, %cst_113 [1] : vector<16x32xf32> to vector<16xf32>
    %248 = vector.shape_cast %247 : vector<16xf32> to vector<16x1xf32>
    %cst_114 = arith.constant 3.200000e+01 : f32
    %249 = vector.broadcast %cst_114 : f32 to vector<16x1xf32>
    %250 = arith.divf %248, %249 : vector<16x1xf32>
    %251 = vector.broadcast %243 : vector<16x1xf32> to vector<16x32xf32>
    %252 = arith.subf %239, %251 : vector<16x32xf32>
    %cst_115 = arith.constant 9.99999974E-6 : f32
    %253 = vector.broadcast %cst_115 : f32 to vector<16x1xf32>
    %254 = arith.addf %250, %253 : vector<16x1xf32>
    %255 = math.rsqrt %254 : vector<16x1xf32>
    %256 = vector.broadcast %255 : vector<16x1xf32> to vector<16x32xf32>
    %257 = arith.mulf %252, %256 : vector<16x32xf32>
    %c0_116 = arith.constant 0 : index
    %c0_117 = arith.constant 0 : index
    %c0_118 = arith.constant 0 : index
    %258 = vector.load %arg24[%c0_116, %c0_117, %c0_118] : memref<1x1x32xf32, #tpu.memory_space<vmem>>, vector<1x1x32xf32>
    %259 = vector.shape_cast %258 : vector<1x1x32xf32> to vector<1x32xf32>
    %260 = vector.broadcast %259 : vector<1x32xf32> to vector<16x32xf32>
    %261 = arith.mulf %257, %260 : vector<16x32xf32>
    %c0_119 = arith.constant 0 : index
    %c0_120 = arith.constant 0 : index
    %c0_121 = arith.constant 0 : index
    %262 = vector.load %arg25[%c0_119, %c0_120, %c0_121] : memref<1x1x32xf32, #tpu.memory_space<vmem>>, vector<1x1x32xf32>
    %263 = vector.shape_cast %262 : vector<1x1x32xf32> to vector<1x32xf32>
    %264 = vector.broadcast %263 : vector<1x32xf32> to vector<16x32xf32>
    %265 = arith.addf %261, %264 : vector<16x32xf32>
    %c0_122 = arith.constant 0 : index
    %c0_123 = arith.constant 0 : index
    %266 = vector.load %arg27[%c0_122, %c0_123] : memref<16x32xf32, #tpu.memory_space<vmem>>, vector<16x32xf32>
    tpu.vector_store %arg27[%c0_122, %c0_123], %265 {strides = array<i32>} : memref<16x32xf32, #tpu.memory_space<vmem>>, vector<16x32xf32>,
    %c1_i32 = arith.constant 1 : i32
    %267 = arith.cmpi eq, %arg1, %c1_i32 : i32
    %268 = arith.extui %267 : i1 to i32
    %c0_i32_124 = arith.constant 0 : i32
    %269 = arith.cmpi ne, %268, %c0_i32_124 : i32
    scf.if %269 {
      %270 = vector.shape_cast %265 : vector<16x32xf32> to vector<2x8x32xf32>
      %c0_125 = arith.constant 0 : index
      %c0_126 = arith.constant 0 : index
      %c0_127 = arith.constant 0 : index
      %271 = vector.load %arg26[%c0_125, %c0_126, %c0_127] : memref<2x8x32xf32, #tpu.memory_space<vmem>>, vector<2x8x32xf32>
      tpu.vector_store %arg26[%c0_125, %c0_126, %c0_127], %270 {strides = array<i32>} : memref<2x8x32xf32, #tpu.memory_space<vmem>>, vector<2x8x32xf32>,
    } else {
    }
    return
  }
  func.func @transform_0(%arg0: i32, %arg1: i32) -> (i32, i32, i32) {
    %c0_i32 = arith.constant 0 : i32
    %c0_i32_0 = arith.constant 0 : i32
    %c0_i32_1 = arith.constant 0 : i32
    return %arg0, %c0_i32, %c0_i32_0 : i32, i32, i32
  }
  func.func @transform_1(%arg0: i32, %arg1: i32) -> (i32, i32, i32) {
    %c0_i32 = arith.constant 0 : i32
    %c0_i32_0 = arith.constant 0 : i32
    %c0_i32_1 = arith.constant 0 : i32
    return %arg0, %c0_i32, %c0_i32_0 : i32, i32, i32
  }
  func.func @transform_2(%arg0: i32, %arg1: i32) -> (i32, i32, i32) {
    %c0_i32 = arith.constant 0 : i32
    %c0_i32_0 = arith.constant 0 : i32
    %c0_i32_1 = arith.constant 0 : i32
    return %arg1, %c0_i32, %c0_i32_0 : i32, i32, i32
  }
  func.func @transform_3(%arg0: i32, %arg1: i32) -> (i32, i32, i32) {
    %c0_i32 = arith.constant 0 : i32
    %c0_i32_0 = arith.constant 0 : i32
    %c0_i32_1 = arith.constant 0 : i32
    return %arg1, %c0_i32, %c0_i32_0 : i32, i32, i32
  }
  func.func @transform_4(%arg0: i32, %arg1: i32) -> (i32, i32, i32) {
    %c0_i32 = arith.constant 0 : i32
    %c0_i32_0 = arith.constant 0 : i32
    %c0_i32_1 = arith.constant 0 : i32
    return %arg1, %c0_i32, %c0_i32_0 : i32, i32, i32
  }
  func.func @transform_5(%arg0: i32, %arg1: i32) -> (i32, i32, i32) {
    %c0_i32 = arith.constant 0 : i32
    %c0_i32_0 = arith.constant 0 : i32
    %c0_i32_1 = arith.constant 0 : i32
    return %arg1, %c0_i32, %c0_i32_0 : i32, i32, i32
  }
  func.func @transform_6(%arg0: i32, %arg1: i32) -> (i32, i32, i32) {
    %c0_i32 = arith.constant 0 : i32
    %c0_i32_0 = arith.constant 0 : i32
    %c0_i32_1 = arith.constant 0 : i32
    return %arg1, %c0_i32, %c0_i32_0 : i32, i32, i32
  }
  func.func @transform_7(%arg0: i32, %arg1: i32) -> (i32, i32, i32) {
    %c0_i32 = arith.constant 0 : i32
    %c0_i32_0 = arith.constant 0 : i32
    %c0_i32_1 = arith.constant 0 : i32
    return %arg1, %c0_i32, %c0_i32_0 : i32, i32, i32
  }
  func.func @transform_8(%arg0: i32, %arg1: i32) -> (i32, i32, i32) {
    %c0_i32 = arith.constant 0 : i32
    %c0_i32_0 = arith.constant 0 : i32
    %c0_i32_1 = arith.constant 0 : i32
    return %arg1, %c0_i32, %c0_i32_0 : i32, i32, i32
  }
  func.func @transform_9(%arg0: i32, %arg1: i32) -> (i32, i32, i32) {
    %c0_i32 = arith.constant 0 : i32
    %c0_i32_0 = arith.constant 0 : i32
    %c0_i32_1 = arith.constant 0 : i32
    return %arg1, %c0_i32, %c0_i32_0 : i32, i32, i32
  }
  func.func @transform_10(%arg0: i32, %arg1: i32) -> (i32, i32, i32) {
    %c0_i32 = arith.constant 0 : i32
    %c0_i32_0 = arith.constant 0 : i32
    %c0_i32_1 = arith.constant 0 : i32
    return %arg1, %c0_i32, %c0_i32_0 : i32, i32, i32
  }
  func.func @transform_11(%arg0: i32, %arg1: i32) -> (i32, i32, i32) {
    %c0_i32 = arith.constant 0 : i32
    %c0_i32_0 = arith.constant 0 : i32
    %c0_i32_1 = arith.constant 0 : i32
    return %arg1, %c0_i32, %c0_i32_0 : i32, i32, i32
  }
  func.func @transform_12(%arg0: i32, %arg1: i32) -> (i32, i32, i32) {
    %c0_i32 = arith.constant 0 : i32
    %c0_i32_0 = arith.constant 0 : i32
    %c0_i32_1 = arith.constant 0 : i32
    return %arg1, %c0_i32, %c0_i32_0 : i32, i32, i32
  }
  func.func @transform_13(%arg0: i32, %arg1: i32) -> (i32, i32, i32) {
    %c0_i32 = arith.constant 0 : i32
    %c0_i32_0 = arith.constant 0 : i32
    %c0_i32_1 = arith.constant 0 : i32
    return %arg1, %c0_i32, %c0_i32_0 : i32, i32, i32
  }
  func.func @transform_14(%arg0: i32, %arg1: i32) -> (i32, i32, i32) {
    %c0_i32 = arith.constant 0 : i32
    %c0_i32_0 = arith.constant 0 : i32
    %c0_i32_1 = arith.constant 0 : i32
    return %arg1, %c0_i32, %c0_i32_0 : i32, i32, i32
  }
  func.func @transform_15(%arg0: i32, %arg1: i32) -> (i32, i32, i32) {
    %c0_i32 = arith.constant 0 : i32
    %c0_i32_0 = arith.constant 0 : i32
    %c0_i32_1 = arith.constant 0 : i32
    return %arg1, %c0_i32, %c0_i32_0 : i32, i32, i32
  }
  func.func @transform_16(%arg0: i32, %arg1: i32) -> (i32, i32, i32) {
    %c0_i32 = arith.constant 0 : i32
    %c0_i32_0 = arith.constant 0 : i32
    %c0_i32_1 = arith.constant 0 : i32
    return %arg1, %c0_i32, %c0_i32_0 : i32, i32, i32
  }
  func.func @transform_17(%arg0: i32, %arg1: i32) -> (i32, i32, i32) {
    %c0_i32 = arith.constant 0 : i32
    %c0_i32_0 = arith.constant 0 : i32
    %c0_i32_1 = arith.constant 0 : i32
    return %arg1, %c0_i32, %c0_i32_0 : i32, i32, i32
  }
  func.func @transform_18(%arg0: i32, %arg1: i32) -> (i32, i32, i32) {
    %c0_i32 = arith.constant 0 : i32
    %c0_i32_0 = arith.constant 0 : i32
    %c0_i32_1 = arith.constant 0 : i32
    return %arg1, %c0_i32, %c0_i32_0 : i32, i32, i32
  }
  func.func @transform_19(%arg0: i32, %arg1: i32) -> (i32, i32, i32) {
    %c0_i32 = arith.constant 0 : i32
    %c0_i32_0 = arith.constant 0 : i32
    %c0_i32_1 = arith.constant 0 : i32
    return %arg1, %c0_i32, %c0_i32_0 : i32, i32, i32
  }
  func.func @transform_20(%arg0: i32, %arg1: i32) -> (i32, i32, i32) {
    %c0_i32 = arith.constant 0 : i32
    %c0_i32_0 = arith.constant 0 : i32
    %c0_i32_1 = arith.constant 0 : i32
    return %arg1, %c0_i32, %c0_i32_0 : i32, i32, i32
  }
  func.func @transform_21(%arg0: i32, %arg1: i32) -> (i32, i32, i32) {
    %c0_i32 = arith.constant 0 : i32
    %c0_i32_0 = arith.constant 0 : i32
    %c0_i32_1 = arith.constant 0 : i32
    return %arg1, %c0_i32, %c0_i32_0 : i32, i32, i32
  }
  func.func @transform_22(%arg0: i32, %arg1: i32) -> (i32, i32, i32) {
    %c0_i32 = arith.constant 0 : i32
    %c0_i32_0 = arith.constant 0 : i32
    %c0_i32_1 = arith.constant 0 : i32
    return %arg1, %c0_i32, %c0_i32_0 : i32, i32, i32
  }
  func.func @transform_23(%arg0: i32, %arg1: i32) -> (i32, i32, i32) {
    %c0_i32 = arith.constant 0 : i32
    %c0_i32_0 = arith.constant 0 : i32
    %c0_i32_1 = arith.constant 0 : i32
    return %arg1, %c0_i32, %c0_i32_0 : i32, i32, i32
  }
  func.func @transform_24(%arg0: i32, %arg1: i32) -> (i32, i32, i32) {
    %c0_i32 = arith.constant 0 : i32
    %c0_i32_0 = arith.constant 0 : i32
    %c0_i32_1 = arith.constant 0 : i32
    return %arg0, %c0_i32, %c0_i32_0 : i32, i32, i32
  }
}

</mosaic_0001>

<llo_original>
// kernel: tpu_custom_call.1
$region0: #{tpu_custom_call.1}
  #allocation0 [shape = 'u32[]', space=smem, size = 0x4, offset = 0x4, fixed_abs, tag = 'smem constant byte address 0x4 - core index']
  #allocation1 [shape = 'u32[72,128]{1,0:T(1,128)}', space=vmem, size = 0x9000, scoped, tag = 'internal scratch']
  #allocation2 [shape = 'f32[16,32]{1,0:T(8,128)}', space=vmem, size = 0x2000, scoped, tag = 'scratch operand']
  %s0 = inlined_call_operand.vmem [shape: f32[2,8,32], index: 0, kind: input, shape index: {}]
  %s1 = inlined_call_operand.hbm [shape: f32[2,8,8], index: 1, kind: input, shape index: {}]
  %s2 = inlined_call_operand.vmem [shape: f32[2,32,32], index: 2, kind: input, shape index: {}]
  %s3 = inlined_call_operand.vmem [shape: f32[2,1,32], index: 3, kind: input, shape index: {}]
  %s4 = inlined_call_operand.vmem [shape: f32[2,32,32], index: 4, kind: input, shape index: {}]
  %s5 = inlined_call_operand.vmem [shape: f32[2,1,32], index: 5, kind: input, shape index: {}]
  %s6 = inlined_call_operand.vmem [shape: f32[2,32,32], index: 6, kind: input, shape index: {}]
  %s7 = inlined_call_operand.vmem [shape: f32[2,1,32], index: 7, kind: input, shape index: {}]
  %s8 = inlined_call_operand.vmem [shape: f32[2,32,32], index: 8, kind: input, shape index: {}]
  %s9 = inlined_call_operand.vmem [shape: f32[2,1,32], index: 9, kind: input, shape index: {}]
  %s10 = inlined_call_operand.vmem [shape: f32[2,5,64], index: 10, kind: input, shape index: {}]
  %s11 = inlined_call_operand.vmem [shape: f32[2,1,64], index: 11, kind: input, shape index: {}]
  %s12 = inlined_call_operand.vmem [shape: f32[2,64,64], index: 12, kind: input, shape index: {}]
  %s13 = inlined_call_operand.vmem [shape: f32[2,1,64], index: 13, kind: input, shape index: {}]
  %s14 = inlined_call_operand.vmem [shape: f32[2,64,4], index: 14, kind: input, shape index: {}]
  %s15 = inlined_call_operand.vmem [shape: f32[2,1,4], index: 15, kind: input, shape index: {}]
  %s16 = inlined_call_operand.vmem [shape: f32[2,1,32], index: 16, kind: input, shape index: {}]
  %s17 = inlined_call_operand.vmem [shape: f32[2,1,32], index: 17, kind: input, shape index: {}]
  %s18 = inlined_call_operand.hbm [shape: f32[2,32,128], index: 18, kind: input, shape index: {}]
  %s19 = inlined_call_operand.vmem [shape: f32[2,1,128], index: 19, kind: input, shape index: {}]
  %s20 = inlined_call_operand.vmem [shape: f32[2,128,32], index: 20, kind: input, shape index: {}]
  %s21 = inlined_call_operand.vmem [shape: f32[2,1,32], index: 21, kind: input, shape index: {}]
  %s22 = inlined_call_operand.vmem [shape: f32[2,1,32], index: 22, kind: input, shape index: {}]
  %s23 = inlined_call_operand.vmem [shape: f32[2,1,32], index: 23, kind: input, shape index: {}]
  %s24 = inlined_call_operand.hbm [shape: f32[2,8,32], index: 24, kind: output, shape index: {}]
  %s25 = sld [smem:[#allocation0]]
  $region145: #{tpu_custom_call.1} parent=0
    _
  %s27 = ssub.s32 1, %s25
  %s28 = scalar_select 0, %s27, %s25
  $region1: #{tpu_custom_call.1} parent=0
    #allocation3 [shape = 'u8[8192]{0}', space=vmem, size = 0x2000, scoped, tag = 'input window, operand 1, single buffered']
    #allocation4 [shape = 's32[2]{0}', space=sflag, size = 0x8, scoped, tag = 'scoped memory for tpu_custom_call.1']
    #allocation5 [shape = 's32[2]{0}', space=sflag, size = 0x8, scoped, tag = 'scoped memory for tpu_custom_call.1']
    #allocation6 [shape = 'u8[32768]{0}', space=vmem, size = 0x8000, scoped, tag = 'input window, operand 18']
    #allocation7 [shape = 's32[2]{0}', space=sflag, size = 0x8, scoped, tag = 'scoped memory for tpu_custom_call.1']
    #allocation8 [shape = 'u8[8192]{0}', space=vmem, size = 0x2000, scoped, tag = 'output window, operand 0, single buffered']
    %29 = vsyncpa [#allocation4], 0
    %30 = vsyncpa [#allocation7], 0
    %s31 = scalar_lea.sflag [#allocation7], 1
    %32 = vsyncpa %s31, 0
    %33 = vsyncpa [#allocation5], 0
    loop: start=0, step=1, limit=4
    $region2: #{tpu_custom_call.1} parent=1 // loop_pre_header
      _
    $region3: #{tpu_custom_call.1} parent=1 // loop_header
      %s35 = sphi 0, %s39
      %p36 = scmp.ge.s32.totalorder %s35, 4
      %s42 = sphi 0, %s54
      %s43 = sphi 0, %s50
      %s44 = sphi 0, %s42
      %s45 = sphi 0, %s43
      %s46 = sphi 0, %s44
      %s47 = sphi 0, %s45
      %s57 = sphi 0, %s59
      %s60 = sphi 0, %s57
      %s61 = sphi 0, %s60
      %s77 = sphi 0, %s61
      %s83 = sphi 0, %s85
      %s86 = sphi 0, %s83
      %s87 = sphi 0, %s86
      %s103 = sphi 0, %s87
      %s109 = sphi 0, %s111
      %s112 = sphi 0, %s109
      %s113 = sphi 0, %s112
      %s129 = sphi 0, %s113
      %s135 = sphi 0, %s137
      %s138 = sphi 0, %s135
      %s139 = sphi 0, %s138
      %s155 = sphi 0, %s139
      %s161 = sphi 0, %s163
      %s164 = sphi 0, %s161
      %s165 = sphi 0, %s164
      %s181 = sphi 0, %s165
      %s187 = sphi 0, %s189
      %s190 = sphi 0, %s187
      %s191 = sphi 0, %s190
      %s207 = sphi 0, %s191
      %s213 = sphi 0, %s215
      %s216 = sphi 0, %s213
      %s217 = sphi 0, %s216
      %s233 = sphi 0, %s217
      %s239 = sphi 0, %s241
      %s242 = sphi 0, %s239
      %s243 = sphi 0, %s242
      %s259 = sphi 0, %s243
      %s265 = sphi 0, %s267
      %s268 = sphi 0, %s265
      %s269 = sphi 0, %s268
      %s285 = sphi 0, %s269
      %s291 = sphi 0, %s293
      %s294 = sphi 0, %s291
      %s295 = sphi 0, %s294
      %s311 = sphi 0, %s295
      %s317 = sphi 0, %s319
      %s320 = sphi 0, %s317
      %s321 = sphi 0, %s320
      %s337 = sphi 0, %s321
      %s343 = sphi 0, %s345
      %s346 = sphi 0, %s343
      %s347 = sphi 0, %s346
      %s363 = sphi 0, %s347
      %s369 = sphi 0, %s371
      %s372 = sphi 0, %s369
      %s373 = sphi 0, %s372
      %s389 = sphi 0, %s373
      %s395 = sphi 0, %s397
      %s398 = sphi 0, %s395
      %s399 = sphi 0, %s398
      %s415 = sphi 0, %s399
      %s421 = sphi 0, %s423
      %s424 = sphi 0, %s421
      %s425 = sphi 0, %s424
      %s441 = sphi 0, %s425
      %s447 = sphi 0, %s449
      %s450 = sphi 0, %s447
      %s451 = sphi 0, %s450
      %s467 = sphi 0, %s451
      %s473 = sphi 0, %s475
      %s476 = sphi 0, %s473
      %s477 = sphi 0, %s476
      %s493 = sphi 0, %s477
      %s499 = sphi 0, %s501
      %s502 = sphi 0, %s499
      %s503 = sphi 0, %s502
      %s519 = sphi 0, %s503
      %s525 = sphi 0, %s527
      %s528 = sphi 0, %s525
      %s529 = sphi 0, %s528
      %s545 = sphi 0, %s529
      %s551 = sphi 0, %s553
      %s554 = sphi 0, %s551
      %s555 = sphi 0, %s554
      %s571 = sphi 0, %s555
      %s577 = sphi 0, %s579
      %s580 = sphi 0, %s577
      %s581 = sphi 0, %s580
      %s597 = sphi 0, %s581
      %s603 = sphi 0, %s605
      %s606 = sphi 0, %s603
      %s607 = sphi 0, %s606
      %s623 = sphi 0, %s607
      %s629 = sphi 0, %s631
      %s632 = sphi 0, %s629
      %s633 = sphi 0, %s632
      %s649 = sphi 0, %s633
      %s655 = sphi 0, %s657
      %s658 = sphi 0, %s655
      %s659 = sphi 0, %s658
      %s675 = sphi 0, %s659
      %s681 = sphi 0, %s683
      %s684 = sphi 0, %s681
      %s685 = sphi 0, %s684
      %s701 = sphi 0, %s685
    $region4: #{tpu_custom_call.1} parent=1 // loop_header_branch
      %38 = sbr.rel (%p36) target = $region8
    $region5: #{tpu_custom_call.1} parent=1 // loop_body
      %s40 = ssub.s32 %s35, 1
      %s41 = ssub.s32 %s35, 2
      %s48 = sadd.s32 1, %s43
      %p49 = scmp.ge.s32.totalorder %s48, 2
      %s50 = scalar_select %p49, 0, %s48
      %s51 = sadd.s32 1, %s42
      %s52 = scalar_select %p49, %s51, %s42
      %p53 = scmp.ge.s32.totalorder %s52, 1
      %s54 = scalar_select %p53, 0, %s52
      %s55 = ssub.s32 %s42, %s54
      %p56 = scmp.eq.s32.totalorder %s55, 0
      %s58 = sadd.s32 %s57, 1
      %s59 = scalar_select %p56, %s57, %s58
      %p62 = pneg %p56
      %p63 = scmp.eq.s32.totalorder %s35, 1
      %p64 = por %p62, %p63
      %p65 = scmp.ne.s32.totalorder %s57, %s60
      %p66 = scmp.eq.s32.totalorder %s35, 0
      %p67 = por %p65, %p66
      %p68 = scmp.ne.s32.totalorder %s57, %s60
      %p69 = scmp.eq.s32.totalorder %s40, 1
      %p70 = por %p68, %p69
      %p71 = scmp.ne.s32.totalorder %s60, %s61
      %p72 = scmp.eq.s32.totalorder %s40, 0
      %p73 = por %p71, %p72
      %p74 = scmp.ne.s32.totalorder %s60, %s61
      %p75 = scmp.eq.s32.totalorder %s41, 1
      %p76 = por %p74, %p75
      %p78 = scmp.ne.s32.totalorder %s61, %s77
      %p79 = scmp.eq.s32.totalorder %s41, 0
      %p80 = por %p78, %p79
      %s81 = ssub.s32 %s42, %s54
      %p82 = scmp.eq.s32.totalorder %s81, 0
      %s84 = sadd.s32 %s83, 1
      %s85 = scalar_select %p82, %s83, %s84
      %p88 = pneg %p82
      %p89 = scmp.eq.s32.totalorder %s35, 1
      %p90 = por %p88, %p89
      %p91 = scmp.ne.s32.totalorder %s83, %s86
      %p92 = scmp.eq.s32.totalorder %s35, 0
      %p93 = por %p91, %p92
      %p94 = scmp.ne.s32.totalorder %s83, %s86
      %p95 = scmp.eq.s32.totalorder %s40, 1
      %p96 = por %p94, %p95
      %p97 = scmp.ne.s32.totalorder %s86, %s87
      %p98 = scmp.eq.s32.totalorder %s40, 0
      %p99 = por %p97, %p98
      %p100 = scmp.ne.s32.totalorder %s86, %s87
      %p101 = scmp.eq.s32.totalorder %s41, 1
      %p102 = por %p100, %p101
      %p104 = scmp.ne.s32.totalorder %s87, %s103
      %p105 = scmp.eq.s32.totalorder %s41, 0
      %p106 = por %p104, %p105
      %s107 = ssub.s32 %s43, %s50
      %p108 = scmp.eq.s32.totalorder %s107, 0
      %s110 = sadd.s32 %s109, 1
      %s111 = scalar_select %p108, %s109, %s110
      %p114 = pneg %p108
      %p115 = scmp.eq.s32.totalorder %s35, 1
      %p116 = por %p114, %p115
      %p117 = scmp.ne.s32.totalorder %s109, %s112
      %p118 = scmp.eq.s32.totalorder %s35, 0
      %p119 = por %p117, %p118
      %p120 = scmp.ne.s32.totalorder %s109, %s112
      %p121 = scmp.eq.s32.totalorder %s40, 1
      %p122 = por %p120, %p121
      %p123 = scmp.ne.s32.totalorder %s112, %s113
      %p124 = scmp.eq.s32.totalorder %s40, 0
      %p125 = por %p123, %p124
      %p126 = scmp.ne.s32.totalorder %s112, %s113
      %p127 = scmp.eq.s32.totalorder %s41, 1
      %p128 = por %p126, %p127
      %p130 = scmp.ne.s32.totalorder %s113, %s129
      %p131 = scmp.eq.s32.totalorder %s41, 0
      %p132 = por %p130, %p131
      %s133 = ssub.s32 %s43, %s50
      %p134 = scmp.eq.s32.totalorder %s133, 0
      %s136 = sadd.s32 %s135, 1
      %s137 = scalar_select %p134, %s135, %s136
      %p140 = pneg %p134
      %p141 = scmp.eq.s32.totalorder %s35, 1
      %p142 = por %p140, %p141
      %p143 = scmp.ne.s32.totalorder %s135, %s138
      %p144 = scmp.eq.s32.totalorder %s35, 0
      %p145 = por %p143, %p144
      %p146 = scmp.ne.s32.totalorder %s135, %s138
      %p147 = scmp.eq.s32.totalorder %s40, 1
      %p148 = por %p146, %p147
      %p149 = scmp.ne.s32.totalorder %s138, %s139
      %p150 = scmp.eq.s32.totalorder %s40, 0
      %p151 = por %p149, %p150
      %p152 = scmp.ne.s32.totalorder %s138, %s139
      %p153 = scmp.eq.s32.totalorder %s41, 1
      %p154 = por %p152, %p153
      %p156 = scmp.ne.s32.totalorder %s139, %s155
      %p157 = scmp.eq.s32.totalorder %s41, 0
      %p158 = por %p156, %p157
      %s159 = ssub.s32 %s43, %s50
      %p160 = scmp.eq.s32.totalorder %s159, 0
      %s162 = sadd.s32 %s161, 1
      %s163 = scalar_select %p160, %s161, %s162
      %p166 = pneg %p160
      %p167 = scmp.eq.s32.totalorder %s35, 1
      %p168 = por %p166, %p167
      %p169 = scmp.ne.s32.totalorder %s161, %s164
      %p170 = scmp.eq.s32.totalorder %s35, 0
      %p171 = por %p169, %p170
      %p172 = scmp.ne.s32.totalorder %s161, %s164
      %p173 = scmp.eq.s32.totalorder %s40, 1
      %p174 = por %p172, %p173
      %p175 = scmp.ne.s32.totalorder %s164, %s165
      %p176 = scmp.eq.s32.totalorder %s40, 0
      %p177 = por %p175, %p176
      %p178 = scmp.ne.s32.totalorder %s164, %s165
      %p179 = scmp.eq.s32.totalorder %s41, 1
      %p180 = por %p178, %p179
      %p182 = scmp.ne.s32.totalorder %s165, %s181
      %p183 = scmp.eq.s32.totalorder %s41, 0
      %p184 = por %p182, %p183
      %s185 = ssub.s32 %s43, %s50
      %p186 = scmp.eq.s32.totalorder %s185, 0
      %s188 = sadd.s32 %s187, 1
      %s189 = scalar_select %p186, %s187, %s188
      %p192 = pneg %p186
      %p193 = scmp.eq.s32.totalorder %s35, 1
      %p194 = por %p192, %p193
      %p195 = scmp.ne.s32.totalorder %s187, %s190
      %p196 = scmp.eq.s32.totalorder %s35, 0
      %p197 = por %p195, %p196
      %p198 = scmp.ne.s32.totalorder %s187, %s190
      %p199 = scmp.eq.s32.totalorder %s40, 1
      %p200 = por %p198, %p199
      %p201 = scmp.ne.s32.totalorder %s190, %s191
      %p202 = scmp.eq.s32.totalorder %s40, 0
      %p203 = por %p201, %p202
      %p204 = scmp.ne.s32.totalorder %s190, %s191
      %p205 = scmp.eq.s32.totalorder %s41, 1
      %p206 = por %p204, %p205
      %p208 = scmp.ne.s32.totalorder %s191, %s207
      %p209 = scmp.eq.s32.totalorder %s41, 0
      %p210 = por %p208, %p209
      %s211 = ssub.s32 %s43, %s50
      %p212 = scmp.eq.s32.totalorder %s211, 0
      %s214 = sadd.s32 %s213, 1
      %s215 = scalar_select %p212, %s213, %s214
      %p218 = pneg %p212
      %p219 = scmp.eq.s32.totalorder %s35, 1
      %p220 = por %p218, %p219
      %p221 = scmp.ne.s32.totalorder %s213, %s216
      %p222 = scmp.eq.s32.totalorder %s35, 0
      %p223 = por %p221, %p222
      %p224 = scmp.ne.s32.totalorder %s213, %s216
      %p225 = scmp.eq.s32.totalorder %s40, 1
      %p226 = por %p224, %p225
      %p227 = scmp.ne.s32.totalorder %s216, %s217
      %p228 = scmp.eq.s32.totalorder %s40, 0
      %p229 = por %p227, %p228
      %p230 = scmp.ne.s32.totalorder %s216, %s217
      %p231 = scmp.eq.s32.totalorder %s41, 1
      %p232 = por %p230, %p231
      %p234 = scmp.ne.s32.totalorder %s217, %s233
      %p235 = scmp.eq.s32.totalorder %s41, 0
      %p236 = por %p234, %p235
      %s237 = ssub.s32 %s43, %s50
      %p238 = scmp.eq.s32.totalorder %s237, 0
      %s240 = sadd.s32 %s239, 1
      %s241 = scalar_select %p238, %s239, %s240
      %p244 = pneg %p238
      %p245 = scmp.eq.s32.totalorder %s35, 1
      %p246 = por %p244, %p245
      %p247 = scmp.ne.s32.totalorder %s239, %s242
      %p248 = scmp.eq.s32.totalorder %s35, 0
      %p249 = por %p247, %p248
      %p250 = scmp.ne.s32.totalorder %s239, %s242
      %p251 = scmp.eq.s32.totalorder %s40, 1
      %p252 = por %p250, %p251
      %p253 = scmp.ne.s32.totalorder %s242, %s243
      %p254 = scmp.eq.s32.totalorder %s40, 0
      %p255 = por %p253, %p254
      %p256 = scmp.ne.s32.totalorder %s242, %s243
      %p257 = scmp.eq.s32.totalorder %s41, 1
      %p258 = por %p256, %p257
      %p260 = scmp.ne.s32.totalorder %s243, %s259
      %p261 = scmp.eq.s32.totalorder %s41, 0
      %p262 = por %p260, %p261
      %s263 = ssub.s32 %s43, %s50
      %p264 = scmp.eq.s32.totalorder %s263, 0
      %s266 = sadd.s32 %s265, 1
      %s267 = scalar_select %p264, %s265, %s266
      %p270 = pneg %p264
      %p271 = scmp.eq.s32.totalorder %s35, 1
      %p272 = por %p270, %p271
      %p273 = scmp.ne.s32.totalorder %s265, %s268
      %p274 = scmp.eq.s32.totalorder %s35, 0
      %p275 = por %p273, %p274
      %p276 = scmp.ne.s32.totalorder %s265, %s268
      %p277 = scmp.eq.s32.totalorder %s40, 1
      %p278 = por %p276, %p277
      %p279 = scmp.ne.s32.totalorder %s268, %s269
      %p280 = scmp.eq.s32.totalorder %s40, 0
      %p281 = por %p279, %p280
      %p282 = scmp.ne.s32.totalorder %s268, %s269
      %p283 = scmp.eq.s32.totalorder %s41, 1
      %p284 = por %p282, %p283
      %p286 = scmp.ne.s32.totalorder %s269, %s285
      %p287 = scmp.eq.s32.totalorder %s41, 0
      %p288 = por %p286, %p287
      %s289 = ssub.s32 %s43, %s50
      %p290 = scmp.eq.s32.totalorder %s289, 0
      %s292 = sadd.s32 %s291, 1
      %s293 = scalar_select %p290, %s291, %s292
      %p296 = pneg %p290
      %p297 = scmp.eq.s32.totalorder %s35, 1
      %p298 = por %p296, %p297
      %p299 = scmp.ne.s32.totalorder %s291, %s294
      %p300 = scmp.eq.s32.totalorder %s35, 0
      %p301 = por %p299, %p300
      %p302 = scmp.ne.s32.totalorder %s291, %s294
      %p303 = scmp.eq.s32.totalorder %s40, 1
      %p304 = por %p302, %p303
      %p305 = scmp.ne.s32.totalorder %s294, %s295
      %p306 = scmp.eq.s32.totalorder %s40, 0
      %p307 = por %p305, %p306
      %p308 = scmp.ne.s32.totalorder %s294, %s295
      %p309 = scmp.eq.s32.totalorder %s41, 1
      %p310 = por %p308, %p309
      %p312 = scmp.ne.s32.totalorder %s295, %s311
      %p313 = scmp.eq.s32.totalorder %s41, 0
      %p314 = por %p312, %p313
      %s315 = ssub.s32 %s43, %s50
      %p316 = scmp.eq.s32.totalorder %s315, 0
      %s318 = sadd.s32 %s317, 1
      %s319 = scalar_select %p316, %s317, %s318
      %p322 = pneg %p316
      %p323 = scmp.eq.s32.totalorder %s35, 1
      %p324 = por %p322, %p323
      %p325 = scmp.ne.s32.totalorder %s317, %s320
      %p326 = scmp.eq.s32.totalorder %s35, 0
      %p327 = por %p325, %p326
      %p328 = scmp.ne.s32.totalorder %s317, %s320
      %p329 = scmp.eq.s32.totalorder %s40, 1
      %p330 = por %p328, %p329
      %p331 = scmp.ne.s32.totalorder %s320, %s321
      %p332 = scmp.eq.s32.totalorder %s40, 0
      %p333 = por %p331, %p332
      %p334 = scmp.ne.s32.totalorder %s320, %s321
      %p335 = scmp.eq.s32.totalorder %s41, 1
      %p336 = por %p334, %p335
      %p338 = scmp.ne.s32.totalorder %s321, %s337
      %p339 = scmp.eq.s32.totalorder %s41, 0
      %p340 = por %p338, %p339
      %s341 = ssub.s32 %s43, %s50
      %p342 = scmp.eq.s32.totalorder %s341, 0
      %s344 = sadd.s32 %s343, 1
      %s345 = scalar_select %p342, %s343, %s344
      %p348 = pneg %p342
      %p349 = scmp.eq.s32.totalorder %s35, 1
      %p350 = por %p348, %p349
      %p351 = scmp.ne.s32.totalorder %s343, %s346
      %p352 = scmp.eq.s32.totalorder %s35, 0
      %p353 = por %p351, %p352
      %p354 = scmp.ne.s32.totalorder %s343, %s346
      %p355 = scmp.eq.s32.totalorder %s40, 1
      %p356 = por %p354, %p355
      %p357 = scmp.ne.s32.totalorder %s346, %s347
      %p358 = scmp.eq.s32.totalorder %s40, 0
      %p359 = por %p357, %p358
      %p360 = scmp.ne.s32.totalorder %s346, %s347
      %p361 = scmp.eq.s32.totalorder %s41, 1
      %p362 = por %p360, %p361
      %p364 = scmp.ne.s32.totalorder %s347, %s363
      %p365 = scmp.eq.s32.totalorder %s41, 0
      %p366 = por %p364, %p365
      %s367 = ssub.s32 %s43, %s50
      %p368 = scmp.eq.s32.totalorder %s367, 0
      %s370 = sadd.s32 %s369, 1
      %s371 = scalar_select %p368, %s369, %s370
      %p374 = pneg %p368
      %p375 = scmp.eq.s32.totalorder %s35, 1
      %p376 = por %p374, %p375
      %p377 = scmp.ne.s32.totalorder %s369, %s372
      %p378 = scmp.eq.s32.totalorder %s35, 0
      %p379 = por %p377, %p378
      %p380 = scmp.ne.s32.totalorder %s369, %s372
      %p381 = scmp.eq.s32.totalorder %s40, 1
      %p382 = por %p380, %p381
      %p383 = scmp.ne.s32.totalorder %s372, %s373
      %p384 = scmp.eq.s32.totalorder %s40, 0
      %p385 = por %p383, %p384
      %p386 = scmp.ne.s32.totalorder %s372, %s373
      %p387 = scmp.eq.s32.totalorder %s41, 1
      %p388 = por %p386, %p387
      %p390 = scmp.ne.s32.totalorder %s373, %s389
      %p391 = scmp.eq.s32.totalorder %s41, 0
      %p392 = por %p390, %p391
      %s393 = ssub.s32 %s43, %s50
      %p394 = scmp.eq.s32.totalorder %s393, 0
      %s396 = sadd.s32 %s395, 1
      %s397 = scalar_select %p394, %s395, %s396
      %p400 = pneg %p394
      %p401 = scmp.eq.s32.totalorder %s35, 1
      %p402 = por %p400, %p401
      %p403 = scmp.ne.s32.totalorder %s395, %s398
      %p404 = scmp.eq.s32.totalorder %s35, 0
      %p405 = por %p403, %p404
      %p406 = scmp.ne.s32.totalorder %s395, %s398
      %p407 = scmp.eq.s32.totalorder %s40, 1
      %p408 = por %p406, %p407
      %p409 = scmp.ne.s32.totalorder %s398, %s399
      %p410 = scmp.eq.s32.totalorder %s40, 0
      %p411 = por %p409, %p410
      %p412 = scmp.ne.s32.totalorder %s398, %s399
      %p413 = scmp.eq.s32.totalorder %s41, 1
      %p414 = por %p412, %p413
      %p416 = scmp.ne.s32.totalorder %s399, %s415
      %p417 = scmp.eq.s32.totalorder %s41, 0
      %p418 = por %p416, %p417
      %s419 = ssub.s32 %s43, %s50
      %p420 = scmp.eq.s32.totalorder %s419, 0
      %s422 = sadd.s32 %s421, 1
      %s423 = scalar_select %p420, %s421, %s422
      %p426 = pneg %p420
      %p427 = scmp.eq.s32.totalorder %s35, 1
      %p428 = por %p426, %p427
      %p429 = scmp.ne.s32.totalorder %s421, %s424
      %p430 = scmp.eq.s32.totalorder %s35, 0
      %p431 = por %p429, %p430
      %p432 = scmp.ne.s32.totalorder %s421, %s424
      %p433 = scmp.eq.s32.totalorder %s40, 1
      %p434 = por %p432, %p433
      %p435 = scmp.ne.s32.totalorder %s424, %s425
      %p436 = scmp.eq.s32.totalorder %s40, 0
      %p437 = por %p435, %p436
      %p438 = scmp.ne.s32.totalorder %s424, %s425
      %p439 = scmp.eq.s32.totalorder %s41, 1
      %p440 = por %p438, %p439
      %p442 = scmp.ne.s32.totalorder %s425, %s441
      %p443 = scmp.eq.s32.totalorder %s41, 0
      %p444 = por %p442, %p443
      %s445 = ssub.s32 %s43, %s50
      %p446 = scmp.eq.s32.totalorder %s445, 0
      %s448 = sadd.s32 %s447, 1
      %s449 = scalar_select %p446, %s447, %s448
      %p452 = pneg %p446
      %p453 = scmp.eq.s32.totalorder %s35, 1
      %p454 = por %p452, %p453
      %p455 = scmp.ne.s32.totalorder %s447, %s450
      %p456 = scmp.eq.s32.totalorder %s35, 0
      %p457 = por %p455, %p456
      %p458 = scmp.ne.s32.totalorder %s447, %s450
      %p459 = scmp.eq.s32.totalorder %s40, 1
      %p460 = por %p458, %p459
      %p461 = scmp.ne.s32.totalorder %s450, %s451
      %p462 = scmp.eq.s32.totalorder %s40, 0
      %p463 = por %p461, %p462
      %p464 = scmp.ne.s32.totalorder %s450, %s451
      %p465 = scmp.eq.s32.totalorder %s41, 1
      %p466 = por %p464, %p465
      %p468 = scmp.ne.s32.totalorder %s451, %s467
      %p469 = scmp.eq.s32.totalorder %s41, 0
      %p470 = por %p468, %p469
      %s471 = ssub.s32 %s43, %s50
      %p472 = scmp.eq.s32.totalorder %s471, 0
      %s474 = sadd.s32 %s473, 1
      %s475 = scalar_select %p472, %s473, %s474
      %p478 = pneg %p472
      %p479 = scmp.eq.s32.totalorder %s35, 1
      %p480 = por %p478, %p479
      %p481 = scmp.ne.s32.totalorder %s473, %s476
      %p482 = scmp.eq.s32.totalorder %s35, 0
      %p483 = por %p481, %p482
      %p484 = scmp.ne.s32.totalorder %s473, %s476
      %p485 = scmp.eq.s32.totalorder %s40, 1
      %p486 = por %p484, %p485
      %p487 = scmp.ne.s32.totalorder %s476, %s477
      %p488 = scmp.eq.s32.totalorder %s40, 0
      %p489 = por %p487, %p488
      %p490 = scmp.ne.s32.totalorder %s476, %s477
      %p491 = scmp.eq.s32.totalorder %s41, 1
      %p492 = por %p490, %p491
      %p494 = scmp.ne.s32.totalorder %s477, %s493
      %p495 = scmp.eq.s32.totalorder %s41, 0
      %p496 = por %p494, %p495
      %s497 = ssub.s32 %s43, %s50
      %p498 = scmp.eq.s32.totalorder %s497, 0
      %s500 = sadd.s32 %s499, 1
      %s501 = scalar_select %p498, %s499, %s500
      %p504 = pneg %p498
      %p505 = scmp.eq.s32.totalorder %s35, 1
      %p506 = por %p504, %p505
      %p507 = scmp.ne.s32.totalorder %s499, %s502
      %p508 = scmp.eq.s32.totalorder %s35, 0
      %p509 = por %p507, %p508
      %p510 = scmp.ne.s32.totalorder %s499, %s502
      %p511 = scmp.eq.s32.totalorder %s40, 1
      %p512 = por %p510, %p511
      %p513 = scmp.ne.s32.totalorder %s502, %s503
      %p514 = scmp.eq.s32.totalorder %s40, 0
      %p515 = por %p513, %p514
      %p516 = scmp.ne.s32.totalorder %s502, %s503
      %p517 = scmp.eq.s32.totalorder %s41, 1
      %p518 = por %p516, %p517
      %p520 = scmp.ne.s32.totalorder %s503, %s519
      %p521 = scmp.eq.s32.totalorder %s41, 0
      %p522 = por %p520, %p521
      %s523 = ssub.s32 %s43, %s50
      %p524 = scmp.eq.s32.totalorder %s523, 0
      %s526 = sadd.s32 %s525, 1
      %s527 = scalar_select %p524, %s525, %s526
      %p530 = pneg %p524
      %p531 = scmp.eq.s32.totalorder %s35, 1
      %p532 = por %p530, %p531
      %p533 = scmp.ne.s32.totalorder %s525, %s528
      %p534 = scmp.eq.s32.totalorder %s35, 0
      %p535 = por %p533, %p534
      %p536 = scmp.ne.s32.totalorder %s525, %s528
      %p537 = scmp.eq.s32.totalorder %s40, 1
      %p538 = por %p536, %p537
      %p539 = scmp.ne.s32.totalorder %s528, %s529
      %p540 = scmp.eq.s32.totalorder %s40, 0
      %p541 = por %p539, %p540
      %p542 = scmp.ne.s32.totalorder %s528, %s529
      %p543 = scmp.eq.s32.totalorder %s41, 1
      %p544 = por %p542, %p543
      %p546 = scmp.ne.s32.totalorder %s529, %s545
      %p547 = scmp.eq.s32.totalorder %s41, 0
      %p548 = por %p546, %p547
      %s549 = ssub.s32 %s43, %s50
      %p550 = scmp.eq.s32.totalorder %s549, 0
      %s552 = sadd.s32 %s551, 1
      %s553 = scalar_select %p550, %s551, %s552
      %p556 = pneg %p550
      %p557 = scmp.eq.s32.totalorder %s35, 1
      %p558 = por %p556, %p557
      %p559 = scmp.ne.s32.totalorder %s551, %s554
      %p560 = scmp.eq.s32.totalorder %s35, 0
      %p561 = por %p559, %p560
      %p562 = scmp.ne.s32.totalorder %s551, %s554
      %p563 = scmp.eq.s32.totalorder %s40, 1
      %p564 = por %p562, %p563
      %p565 = scmp.ne.s32.totalorder %s554, %s555
      %p566 = scmp.eq.s32.totalorder %s40, 0
      %p567 = por %p565, %p566
      %p568 = scmp.ne.s32.totalorder %s554, %s555
      %p569 = scmp.eq.s32.totalorder %s41, 1
      %p570 = por %p568, %p569
      %p572 = scmp.ne.s32.totalorder %s555, %s571
      %p573 = scmp.eq.s32.totalorder %s41, 0
      %p574 = por %p572, %p573
      %s575 = ssub.s32 %s43, %s50
      %p576 = scmp.eq.s32.totalorder %s575, 0
      %s578 = sadd.s32 %s577, 1
      %s579 = scalar_select %p576, %s577, %s578
      %p582 = pneg %p576
      %p583 = scmp.eq.s32.totalorder %s35, 1
      %p584 = por %p582, %p583
      %p585 = scmp.ne.s32.totalorder %s577, %s580
      %p586 = scmp.eq.s32.totalorder %s35, 0
      %p587 = por %p585, %p586
      %p588 = scmp.ne.s32.totalorder %s577, %s580
      %p589 = scmp.eq.s32.totalorder %s40, 1
      %p590 = por %p588, %p589
      %p591 = scmp.ne.s32.totalorder %s580, %s581
      %p592 = scmp.eq.s32.totalorder %s40, 0
      %p593 = por %p591, %p592
      %p594 = scmp.ne.s32.totalorder %s580, %s581
      %p595 = scmp.eq.s32.totalorder %s41, 1
      %p596 = por %p594, %p595
      %p598 = scmp.ne.s32.totalorder %s581, %s597
      %p599 = scmp.eq.s32.totalorder %s41, 0
      %p600 = por %p598, %p599
      %s601 = ssub.s32 %s43, %s50
      %p602 = scmp.eq.s32.totalorder %s601, 0
      %s604 = sadd.s32 %s603, 1
      %s605 = scalar_select %p602, %s603, %s604
      %p608 = pneg %p602
      %p609 = scmp.eq.s32.totalorder %s35, 1
      %p610 = por %p608, %p609
      %p611 = scmp.ne.s32.totalorder %s603, %s606
      %p612 = scmp.eq.s32.totalorder %s35, 0
      %p613 = por %p611, %p612
      %p614 = scmp.ne.s32.totalorder %s603, %s606
      %p615 = scmp.eq.s32.totalorder %s40, 1
      %p616 = por %p614, %p615
      %p617 = scmp.ne.s32.totalorder %s606, %s607
      %p618 = scmp.eq.s32.totalorder %s40, 0
      %p619 = por %p617, %p618
      %p620 = scmp.ne.s32.totalorder %s606, %s607
      %p621 = scmp.eq.s32.totalorder %s41, 1
      %p622 = por %p620, %p621
      %p624 = scmp.ne.s32.totalorder %s607, %s623
      %p625 = scmp.eq.s32.totalorder %s41, 0
      %p626 = por %p624, %p625
      %s627 = ssub.s32 %s43, %s50
      %p628 = scmp.eq.s32.totalorder %s627, 0
      %s630 = sadd.s32 %s629, 1
      %s631 = scalar_select %p628, %s629, %s630
      %p634 = pneg %p628
      %p635 = scmp.eq.s32.totalorder %s35, 1
      %p636 = por %p634, %p635
      %p637 = scmp.ne.s32.totalorder %s629, %s632
      %p638 = scmp.eq.s32.totalorder %s35, 0
      %p639 = por %p637, %p638
      %p640 = scmp.ne.s32.totalorder %s629, %s632
      %p641 = scmp.eq.s32.totalorder %s40, 1
      %p642 = por %p640, %p641
      %p643 = scmp.ne.s32.totalorder %s632, %s633
      %p644 = scmp.eq.s32.totalorder %s40, 0
      %p645 = por %p643, %p644
      %p646 = scmp.ne.s32.totalorder %s632, %s633
      %p647 = scmp.eq.s32.totalorder %s41, 1
      %p648 = por %p646, %p647
      %p650 = scmp.ne.s32.totalorder %s633, %s649
      %p651 = scmp.eq.s32.totalorder %s41, 0
      %p652 = por %p650, %p651
      %s653 = ssub.s32 %s43, %s50
      %p654 = scmp.eq.s32.totalorder %s653, 0
      %s656 = sadd.s32 %s655, 1
      %s657 = scalar_select %p654, %s655, %s656
      %p660 = pneg %p654
      %p661 = scmp.eq.s32.totalorder %s35, 1
      %p662 = por %p660, %p661
      %p663 = scmp.ne.s32.totalorder %s655, %s658
      %p664 = scmp.eq.s32.totalorder %s35, 0
      %p665 = por %p663, %p664
      %p666 = scmp.ne.s32.totalorder %s655, %s658
      %p667 = scmp.eq.s32.totalorder %s40, 1
      %p668 = por %p666, %p667
      %p669 = scmp.ne.s32.totalorder %s658, %s659
      %p670 = scmp.eq.s32.totalorder %s40, 0
      %p671 = por %p669, %p670
      %p672 = scmp.ne.s32.totalorder %s658, %s659
      %p673 = scmp.eq.s32.totalorder %s41, 1
      %p674 = por %p672, %p673
      %p676 = scmp.ne.s32.totalorder %s659, %s675
      %p677 = scmp.eq.s32.totalorder %s41, 0
      %p678 = por %p676, %p677
      %s679 = ssub.s32 %s42, %s54
      %p680 = scmp.eq.s32.totalorder %s679, 0
      %s682 = sadd.s32 %s681, 1
      %s683 = scalar_select %p680, %s681, %s682
      %p686 = pneg %p680
      %p687 = scmp.eq.s32.totalorder %s35, 1
      %p688 = por %p686, %p687
      %p689 = scmp.ne.s32.totalorder %s681, %s684
      %p690 = scmp.eq.s32.totalorder %s35, 0
      %p691 = por %p689, %p690
      %p692 = scmp.ne.s32.totalorder %s681, %s684
      %p693 = scmp.eq.s32.totalorder %s40, 1
      %p694 = por %p692, %p693
      %p695 = scmp.ne.s32.totalorder %s684, %s685
      %p696 = scmp.eq.s32.totalorder %s40, 0
      %p697 = por %p695, %p696
      %p698 = scmp.ne.s32.totalorder %s684, %s685
      %p699 = scmp.eq.s32.totalorder %s41, 1
      %p700 = por %p698, %p699
      %p702 = scmp.ne.s32.totalorder %s685, %s701
      %p703 = scmp.eq.s32.totalorder %s41, 0
      %p704 = por %p702, %p703
      %p705 = scmp.le.s32.totalorder 1, %s35
      %p706 = scmp.lt.s32.totalorder %s35, 3
      %p707 = pnand %p705, %p706
      %p708 = pneg %p707
      // Predicated region
      $region9: #{tpu_custom_call.1} parent=5 // pred_check
        _
      $region10: #{tpu_custom_call.1} parent=5 // pred_check_branch
        %710 = sbr.rel (%p707) target = $region12
      $region11: #{tpu_custom_call.1} parent=5 // pred_region
        %s711 = ssub.s32 %s35, 1
        // Predicated region
        $region13: #{tpu_custom_call.1} parent=11 // pred_check
          %p712 = pneg %p73
        $region14: #{tpu_custom_call.1} parent=11 // pred_check_branch
          %714 = sbr.rel (%p712) target = $region16
        $region15: #{tpu_custom_call.1} parent=11 // pred_region
          %s715 = smul.u32 2, %s44
          %p716 = scmp.lt.s32.totalorder %s715, 1
          %s717 = scalar_select %p716, %s715, 1
          %s718 = smul.addr %s717, 8
          %s719 = scalar_lea.vmem %s0, %s718
          %s720 = smul.u32 2, %s44
        $region16: #{tpu_custom_call.1} parent=11 // pred_fallthru
          _
        // Predicated region
        $region17: #{tpu_custom_call.1} parent=11 // pred_check
          %p721 = pneg %p99
        $region18: #{tpu_custom_call.1} parent=11 // pred_check_branch
          %723 = sbr.rel (%p721) target = $region20
        $region19: #{tpu_custom_call.1} parent=11 // pred_region
          %s724 = smul.u32 2, %s44
          %726 = vsyncadd [#allocation4], 0
          %s727 = smul.addr %s724, 8
          %s728 = scalar_lea.hbm %s1, %s727
          %s729 = sshll.u32 %s728, 4
          %s730 = int_to_ptr.hbm [resolvable:$true] %s729
          %s731 = sshll.u32 [#allocation3], 4
          %s732 = int_to_ptr.vmem [resolvable:$true] %s731
          %737 = dma.hbm_to_vmem [thread:$0]  %s730, 256, %s732, [#allocation4], 128, 128, 8
        $region20: #{tpu_custom_call.1} parent=11 // pred_fallthru
          _
      $region12: #{tpu_custom_call.1} parent=5 // pred_fallthru
        _
      %p738 = scmp.lt.s32.totalorder %s35, 2
      // Predicated region
      $region21: #{tpu_custom_call.1} parent=5 // pred_check
        %p739 = pneg %p738
      $region22: #{tpu_custom_call.1} parent=5 // pred_check_branch
        %741 = sbr.rel (%p739) target = $region24
      $region23: #{tpu_custom_call.1} parent=5 // pred_region
        // Predicated region
        $region25: #{tpu_custom_call.1} parent=23 // pred_check
          %p742 = pneg %p119
        $region26: #{tpu_custom_call.1} parent=23 // pred_check_branch
          %744 = sbr.rel (%p742) target = $region28
        $region27: #{tpu_custom_call.1} parent=23 // pred_region
          %p745 = scmp.lt.s32.totalorder %s43, 1
          %s746 = scalar_select %p745, %s43, 1
          %s747 = smul.addr %s746, 4
          %s748 = smul.addr %s747, 8
          %s749 = scalar_lea.vmem %s2, %s748
        $region28: #{tpu_custom_call.1} parent=23 // pred_fallthru
          _
        // Predicated region
        $region29: #{tpu_custom_call.1} parent=23 // pred_check
          %p750 = pneg %p145
        $region30: #{tpu_custom_call.1} parent=23 // pred_check_branch
          %752 = sbr.rel (%p750) target = $region32
        $region31: #{tpu_custom_call.1} parent=23 // pred_region
          %p753 = scmp.lt.s32.totalorder %s43, 1
          %s754 = scalar_select %p753, %s43, 1
          %s755 = scalar_lea.vmem %s3, %s754
        $region32: #{tpu_custom_call.1} parent=23 // pred_fallthru
          _
        // Predicated region
        $region33: #{tpu_custom_call.1} parent=23 // pred_check
          %p756 = pneg %p171
        $region34: #{tpu_custom_call.1} parent=23 // pred_check_branch
          %758 = sbr.rel (%p756) target = $region36
        $region35: #{tpu_custom_call.1} parent=23 // pred_region
          %p759 = scmp.lt.s32.totalorder %s43, 1
          %s760 = scalar_select %p759, %s43, 1
          %s761 = smul.addr %s760, 4
          %s762 = smul.addr %s761, 8
          %s763 = scalar_lea.vmem %s4, %s762
        $region36: #{tpu_custom_call.1} parent=23 // pred_fallthru
          _
        // Predicated region
        $region37: #{tpu_custom_call.1} parent=23 // pred_check
          %p764 = pneg %p197
        $region38: #{tpu_custom_call.1} parent=23 // pred_check_branch
          %766 = sbr.rel (%p764) target = $region40
        $region39: #{tpu_custom_call.1} parent=23 // pred_region
          %p767 = scmp.lt.s32.totalorder %s43, 1
          %s768 = scalar_select %p767, %s43, 1
          %s769 = scalar_lea.vmem %s5, %s768
        $region40: #{tpu_custom_call.1} parent=23 // pred_fallthru
          _
        // Predicated region
        $region41: #{tpu_custom_call.1} parent=23 // pred_check
          %p770 = pneg %p223
        $region42: #{tpu_custom_call.1} parent=23 // pred_check_branch
          %772 = sbr.rel (%p770) target = $region44
        $region43: #{tpu_custom_call.1} parent=23 // pred_region
          %p773 = scmp.lt.s32.totalorder %s43, 1
          %s774 = scalar_select %p773, %s43, 1
          %s775 = smul.addr %s774, 4
          %s776 = smul.addr %s775, 8
          %s777 = scalar_lea.vmem %s6, %s776
        $region44: #{tpu_custom_call.1} parent=23 // pred_fallthru
          _
        // Predicated region
        $region45: #{tpu_custom_call.1} parent=23 // pred_check
          %p778 = pneg %p249
        $region46: #{tpu_custom_call.1} parent=23 // pred_check_branch
          %780 = sbr.rel (%p778) target = $region48
        $region47: #{tpu_custom_call.1} parent=23 // pred_region
          %p781 = scmp.lt.s32.totalorder %s43, 1
          %s782 = scalar_select %p781, %s43, 1
          %s783 = scalar_lea.vmem %s7, %s782
        $region48: #{tpu_custom_call.1} parent=23 // pred_fallthru
          _
        // Predicated region
        $region49: #{tpu_custom_call.1} parent=23 // pred_check
          %p784 = pneg %p275
        $region50: #{tpu_custom_call.1} parent=23 // pred_check_branch
          %786 = sbr.rel (%p784) target = $region52
        $region51: #{tpu_custom_call.1} parent=23 // pred_region
          %p787 = scmp.lt.s32.totalorder %s43, 1
          %s788 = scalar_select %p787, %s43, 1
          %s789 = smul.addr %s788, 4
          %s790 = smul.addr %s789, 8
          %s791 = scalar_lea.vmem %s8, %s790
        $region52: #{tpu_custom_call.1} parent=23 // pred_fallthru
          _
        // Predicated region
        $region53: #{tpu_custom_call.1} parent=23 // pred_check
          %p792 = pneg %p301
        $region54: #{tpu_custom_call.1} parent=23 // pred_check_branch
          %794 = sbr.rel (%p792) target = $region56
        $region55: #{tpu_custom_call.1} parent=23 // pred_region
          %p795 = scmp.lt.s32.totalorder %s43, 1
          %s796 = scalar_select %p795, %s43, 1
          %s797 = scalar_lea.vmem %s9, %s796
        $region56: #{tpu_custom_call.1} parent=23 // pred_fallthru
          _
        // Predicated region
        $region57: #{tpu_custom_call.1} parent=23 // pred_check
          %p798 = pneg %p327
        $region58: #{tpu_custom_call.1} parent=23 // pred_check_branch
          %800 = sbr.rel (%p798) target = $region60
        $region59: #{tpu_custom_call.1} parent=23 // pred_region
          %p801 = scmp.lt.s32.totalorder %s43, 1
          %s802 = scalar_select %p801, %s43, 1
          %s803 = smul.addr %s802, 8
          %s804 = scalar_lea.vmem %s10, %s803
        $region60: #{tpu_custom_call.1} parent=23 // pred_fallthru
          _
        // Predicated region
        $region61: #{tpu_custom_call.1} parent=23 // pred_check
          %p805 = pneg %p353
        $region62: #{tpu_custom_call.1} parent=23 // pred_check_branch
          %807 = sbr.rel (%p805) target = $region64
        $region63: #{tpu_custom_call.1} parent=23 // pred_region
          %p808 = scmp.lt.s32.totalorder %s43, 1
          %s809 = scalar_select %p808, %s43, 1
          %s810 = scalar_lea.vmem %s11, %s809
        $region64: #{tpu_custom_call.1} parent=23 // pred_fallthru
          _
        // Predicated region
        $region65: #{tpu_custom_call.1} parent=23 // pred_check
          %p811 = pneg %p379
        $region66: #{tpu_custom_call.1} parent=23 // pred_check_branch
          %813 = sbr.rel (%p811) target = $region68
        $region67: #{tpu_custom_call.1} parent=23 // pred_region
          %p814 = scmp.lt.s32.totalorder %s43, 1
          %s815 = scalar_select %p814, %s43, 1
          %s816 = smul.addr %s815, 8
          %s817 = smul.addr %s816, 8
          %s818 = scalar_lea.vmem %s12, %s817
        $region68: #{tpu_custom_call.1} parent=23 // pred_fallthru
          _
        // Predicated region
        $region69: #{tpu_custom_call.1} parent=23 // pred_check
          %p819 = pneg %p405
        $region70: #{tpu_custom_call.1} parent=23 // pred_check_branch
          %821 = sbr.rel (%p819) target = $region72
        $region71: #{tpu_custom_call.1} parent=23 // pred_region
          %p822 = scmp.lt.s32.totalorder %s43, 1
          %s823 = scalar_select %p822, %s43, 1
          %s824 = scalar_lea.vmem %s13, %s823
        $region72: #{tpu_custom_call.1} parent=23 // pred_fallthru
          _
        // Predicated region
        $region73: #{tpu_custom_call.1} parent=23 // pred_check
          %p825 = pneg %p431
        $region74: #{tpu_custom_call.1} parent=23 // pred_check_branch
          %827 = sbr.rel (%p825) target = $region76
        $region75: #{tpu_custom_call.1} parent=23 // pred_region
          %p828 = scmp.lt.s32.totalorder %s43, 1
          %s829 = scalar_select %p828, %s43, 1
          %s830 = smul.addr %s829, 8
          %s831 = smul.addr %s830, 8
          %s832 = scalar_lea.vmem %s14, %s831
        $region76: #{tpu_custom_call.1} parent=23 // pred_fallthru
          _
        // Predicated region
        $region77: #{tpu_custom_call.1} parent=23 // pred_check
          %p833 = pneg %p457
        $region78: #{tpu_custom_call.1} parent=23 // pred_check_branch
          %835 = sbr.rel (%p833) target = $region80
        $region79: #{tpu_custom_call.1} parent=23 // pred_region
          %p836 = scmp.lt.s32.totalorder %s43, 1
          %s837 = scalar_select %p836, %s43, 1
          %s838 = scalar_lea.vmem %s15, %s837
        $region80: #{tpu_custom_call.1} parent=23 // pred_fallthru
          _
        // Predicated region
        $region81: #{tpu_custom_call.1} parent=23 // pred_check
          %p839 = pneg %p483
        $region82: #{tpu_custom_call.1} parent=23 // pred_check_branch
          %841 = sbr.rel (%p839) target = $region84
        $region83: #{tpu_custom_call.1} parent=23 // pred_region
          %p842 = scmp.lt.s32.totalorder %s43, 1
          %s843 = scalar_select %p842, %s43, 1
          %s844 = scalar_lea.vmem %s16, %s843
        $region84: #{tpu_custom_call.1} parent=23 // pred_fallthru
          _
        // Predicated region
        $region85: #{tpu_custom_call.1} parent=23 // pred_check
          %p845 = pneg %p509
        $region86: #{tpu_custom_call.1} parent=23 // pred_check_branch
          %847 = sbr.rel (%p845) target = $region88
        $region87: #{tpu_custom_call.1} parent=23 // pred_region
          %p848 = scmp.lt.s32.totalorder %s43, 1
          %s849 = scalar_select %p848, %s43, 1
          %s850 = scalar_lea.vmem %s17, %s849
        $region88: #{tpu_custom_call.1} parent=23 // pred_fallthru
          _
        // Predicated region
        $region89: #{tpu_custom_call.1} parent=23 // pred_check
          %p851 = pneg %p535
        $region90: #{tpu_custom_call.1} parent=23 // pred_check_branch
          %853 = sbr.rel (%p851) target = $region92
        $region91: #{tpu_custom_call.1} parent=23 // pred_region
          %s854 = sand.u32 %s525, 1
          %s855 = scalar_lea.sflag [#allocation7], %s854
          %s856 = sand.u32 %s525, 1
          %s857 = smul.addr %s856, 32
          %s858 = scalar_lea.vmem [#allocation6], %s857
          %860 = vsyncadd %s855, 0
          %s861 = smul.addr %s43, 4
          %s862 = smul.addr %s861, 8
          %s863 = scalar_lea.hbm %s18, %s862
          %s864 = sshll.u32 %s863, 4
          %s865 = int_to_ptr.hbm [resolvable:$true] %s864
          %s866 = sshll.u32 %s858, 4
          %s867 = int_to_ptr.vmem [resolvable:$true] %s866
          %872 = dma.hbm_to_vmem [thread:$0]  %s865, 512, %s867, %s855, 128, 128, 8
        $region92: #{tpu_custom_call.1} parent=23 // pred_fallthru
          _
        // Predicated region
        $region93: #{tpu_custom_call.1} parent=23 // pred_check
          %p873 = pneg %p561
        $region94: #{tpu_custom_call.1} parent=23 // pred_check_branch
          %875 = sbr.rel (%p873) target = $region96
        $region95: #{tpu_custom_call.1} parent=23 // pred_region
          %p876 = scmp.lt.s32.totalorder %s43, 1
          %s877 = scalar_select %p876, %s43, 1
          %s878 = scalar_lea.vmem %s19, %s877
        $region96: #{tpu_custom_call.1} parent=23 // pred_fallthru
          _
        // Predicated region
        $region97: #{tpu_custom_call.1} parent=23 // pred_check
          %p879 = pneg %p587
        $region98: #{tpu_custom_call.1} parent=23 // pred_check_branch
          %881 = sbr.rel (%p879) target = $region100
        $region99: #{tpu_custom_call.1} parent=23 // pred_region
          %p882 = scmp.lt.s32.totalorder %s43, 1
          %s883 = scalar_select %p882, %s43, 1
          %s884 = smul.addr %s883, 16
          %s885 = smul.addr %s884, 8
          %s886 = scalar_lea.vmem %s20, %s885
        $region100: #{tpu_custom_call.1} parent=23 // pred_fallthru
          _
        // Predicated region
        $region101: #{tpu_custom_call.1} parent=23 // pred_check
          %p887 = pneg %p613
        $region102: #{tpu_custom_call.1} parent=23 // pred_check_branch
          %889 = sbr.rel (%p887) target = $region104
        $region103: #{tpu_custom_call.1} parent=23 // pred_region
          %p890 = scmp.lt.s32.totalorder %s43, 1
          %s891 = scalar_select %p890, %s43, 1
          %s892 = scalar_lea.vmem %s21, %s891
        $region104: #{tpu_custom_call.1} parent=23 // pred_fallthru
          _
        // Predicated region
        $region105: #{tpu_custom_call.1} parent=23 // pred_check
          %p893 = pneg %p639
        $region106: #{tpu_custom_call.1} parent=23 // pred_check_branch
          %895 = sbr.rel (%p893) target = $region108
        $region107: #{tpu_custom_call.1} parent=23 // pred_region
          %p896 = scmp.lt.s32.totalorder %s43, 1
          %s897 = scalar_select %p896, %s43, 1
          %s898 = scalar_lea.vmem %s22, %s897
        $region108: #{tpu_custom_call.1} parent=23 // pred_fallthru
          _
        // Predicated region
        $region109: #{tpu_custom_call.1} parent=23 // pred_check
          %p899 = pneg %p665
        $region110: #{tpu_custom_call.1} parent=23 // pred_check_branch
          %901 = sbr.rel (%p899) target = $region112
        $region111: #{tpu_custom_call.1} parent=23 // pred_region
          %p902 = scmp.lt.s32.totalorder %s43, 1
          %s903 = scalar_select %p902, %s43, 1
          %s904 = scalar_lea.vmem %s23, %s903
        $region112: #{tpu_custom_call.1} parent=23 // pred_fallthru
          _
      $region24: #{tpu_custom_call.1} parent=5 // pred_fallthru
        _
      %p905 = scmp.le.s32.totalorder 1, %s35
      %p906 = scmp.lt.s32.totalorder %s35, 3
      %p907 = pnand %p905, %p906
      %p908 = pneg %p907
      // Predicated region
      $region113: #{tpu_custom_call.1} parent=5 // pred_check
        _
      $region114: #{tpu_custom_call.1} parent=5 // pred_check_branch
        %910 = sbr.rel (%p907) target = $region116
      $region115: #{tpu_custom_call.1} parent=5 // pred_region
        %s911 = ssub.s32 %s35, 1
        // Predicated region
        $region117: #{tpu_custom_call.1} parent=115 // pred_check
          %p912 = pneg %p99
        $region118: #{tpu_custom_call.1} parent=115 // pred_check_branch
          %914 = sbr.rel (%p912) target = $region120
        $region119: #{tpu_custom_call.1} parent=115 // pred_region
          %916 = dma.done [#allocation4], 256
        $region120: #{tpu_custom_call.1} parent=115 // pred_fallthru
          _
        %s917 = sand.u32 %s528, 1
        %s918 = scalar_lea.sflag [#allocation7], %s917
        %s919 = sand.u32 %s528, 1
        %s920 = smul.addr %s919, 32
        %s921 = scalar_lea.vmem [#allocation6], %s920
        // Predicated region
        $region121: #{tpu_custom_call.1} parent=115 // pred_check
          %p922 = pneg %p541
        $region122: #{tpu_custom_call.1} parent=115 // pred_check_branch
          %924 = sbr.rel (%p922) target = $region124
        $region123: #{tpu_custom_call.1} parent=115 // pred_region
          %926 = dma.done %s918, 512
        $region124: #{tpu_custom_call.1} parent=115 // pred_fallthru
          _
        %s927 = smul.u32 2, %s44
        %p928 = scmp.lt.s32.totalorder %s927, 1
        %s929 = scalar_select %p928, %s927, 1
        %s930 = smul.addr %s929, 8
        %s931 = scalar_lea.vmem %s0, %s930
        %p932 = pneg %p73
        %p933 = pneg %p70
        %p934 = pneg %p99
        %p935 = pneg %p96
        %p936 = scmp.lt.s32.totalorder %s45, 1
        %s937 = scalar_select %p936, %s45, 1
        %s938 = smul.addr %s937, 4
        %s939 = smul.addr %s938, 8
        %s940 = scalar_lea.vmem %s2, %s939
        %p941 = pneg %p125
        %p942 = pneg %p122
        %p943 = scmp.lt.s32.totalorder %s45, 1
        %s944 = scalar_select %p943, %s45, 1
        %s945 = scalar_lea.vmem %s3, %s944
        %p946 = pneg %p151
        %p947 = pneg %p148
        %p948 = scmp.lt.s32.totalorder %s45, 1
        %s949 = scalar_select %p948, %s45, 1
        %s950 = smul.addr %s949, 4
        %s951 = smul.addr %s950, 8
        %s952 = scalar_lea.vmem %s4, %s951
        %p953 = pneg %p177
        %p954 = pneg %p174
        %p955 = scmp.lt.s32.totalorder %s45, 1
        %s956 = scalar_select %p955, %s45, 1
        %s957 = scalar_lea.vmem %s5, %s956
        %p958 = pneg %p203
        %p959 = pneg %p200
        %p960 = scmp.lt.s32.totalorder %s45, 1
        %s961 = scalar_select %p960, %s45, 1
        %s962 = smul.addr %s961, 4
        %s963 = smul.addr %s962, 8
        %s964 = scalar_lea.vmem %s6, %s963
        %p965 = pneg %p229
        %p966 = pneg %p226
        %p967 = scmp.lt.s32.totalorder %s45, 1
        %s968 = scalar_select %p967, %s45, 1
        %s969 = scalar_lea.vmem %s7, %s968
        %p970 = pneg %p255
        %p971 = pneg %p252
        %p972 = scmp.lt.s32.totalorder %s45, 1
        %s973 = scalar_select %p972, %s45, 1
        %s974 = smul.addr %s973, 4
        %s975 = smul.addr %s974, 8
        %s976 = scalar_lea.vmem %s8, %s975
        %p977 = pneg %p281
        %p978 = pneg %p278
        %p979 = scmp.lt.s32.totalorder %s45, 1
        %s980 = scalar_select %p979, %s45, 1
        %s981 = scalar_lea.vmem %s9, %s980
        %p982 = pneg %p307
        %p983 = pneg %p304
        %p984 = scmp.lt.s32.totalorder %s45, 1
        %s985 = scalar_select %p984, %s45, 1
        %s986 = smul.addr %s985, 8
        %s987 = scalar_lea.vmem %s10, %s986
        %p988 = pneg %p333
        %p989 = pneg %p330
        %p990 = scmp.lt.s32.totalorder %s45, 1
        %s991 = scalar_select %p990, %s45, 1
        %s992 = scalar_lea.vmem %s11, %s991
        %p993 = pneg %p359
        %p994 = pneg %p356
        %p995 = scmp.lt.s32.totalorder %s45, 1
        %s996 = scalar_select %p995, %s45, 1
        %s997 = smul.addr %s996, 8
        %s998 = smul.addr %s997, 8
        %s999 = scalar_lea.vmem %s12, %s998
        %p1000 = pneg %p385
        %p1001 = pneg %p382
        %p1002 = scmp.lt.s32.totalorder %s45, 1
        %s1003 = scalar_select %p1002, %s45, 1
        %s1004 = scalar_lea.vmem %s13, %s1003
        %p1005 = pneg %p411
        %p1006 = pneg %p408
        %p1007 = scmp.lt.s32.totalorder %s45, 1
        %s1008 = scalar_select %p1007, %s45, 1
        %s1009 = smul.addr %s1008, 8
        %s1010 = smul.addr %s1009, 8
        %s1011 = scalar_lea.vmem %s14, %s1010
        %p1012 = pneg %p437
        %p1013 = pneg %p434
        %p1014 = scmp.lt.s32.totalorder %s45, 1
        %s1015 = scalar_select %p1014, %s45, 1
        %s1016 = scalar_lea.vmem %s15, %s1015
        %p1017 = pneg %p463
        %p1018 = pneg %p460
        %p1019 = scmp.lt.s32.totalorder %s45, 1
        %s1020 = scalar_select %p1019, %s45, 1
        %s1021 = scalar_lea.vmem %s16, %s1020
        %p1022 = pneg %p489
        %p1023 = pneg %p486
        %p1024 = scmp.lt.s32.totalorder %s45, 1
        %s1025 = scalar_select %p1024, %s45, 1
        %s1026 = scalar_lea.vmem %s17, %s1025
        %p1027 = pneg %p515
        %p1028 = pneg %p512
        %s1029 = sand.u32 %s528, 1
        %s1030 = scalar_lea.sflag [#allocation7], %s1029
        %s1031 = sand.u32 %s528, 1
        %s1032 = smul.addr %s1031, 32
        %s1033 = scalar_lea.vmem [#allocation6], %s1032
        %p1034 = pneg %p541
        %p1035 = pneg %p538
        %p1036 = scmp.lt.s32.totalorder %s45, 1
        %s1037 = scalar_select %p1036, %s45, 1
        %s1038 = scalar_lea.vmem %s19, %s1037
        %p1039 = pneg %p567
        %p1040 = pneg %p564
        %p1041 = scmp.lt.s32.totalorder %s45, 1
        %s1042 = scalar_select %p1041, %s45, 1
        %s1043 = smul.addr %s1042, 16
        %s1044 = smul.addr %s1043, 8
        %s1045 = scalar_lea.vmem %s20, %s1044
        %p1046 = pneg %p593
        %p1047 = pneg %p590
        %p1048 = scmp.lt.s32.totalorder %s45, 1
        %s1049 = scalar_select %p1048, %s45, 1
        %s1050 = scalar_lea.vmem %s21, %s1049
        %p1051 = pneg %p619
        %p1052 = pneg %p616
        %p1053 = scmp.lt.s32.totalorder %s45, 1
        %s1054 = scalar_select %p1053, %s45, 1
        %s1055 = scalar_lea.vmem %s22, %s1054
        %p1056 = pneg %p645
        %p1057 = pneg %p642
        %p1058 = scmp.lt.s32.totalorder %s45, 1
        %s1059 = scalar_select %p1058, %s45, 1
        %s1060 = scalar_lea.vmem %s23, %s1059
        %p1061 = pneg %p671
        %p1062 = pneg %p668
        %p1063 = pneg %p697
        %p1064 = pneg %p694
        %s1065 = smul.u32 2, %s44
        %p1066 = scmp.lt.s32.totalorder %s1065, 1
        %s1067 = scalar_select %p1066, %s1065, 1
        %s1068 = smul.addr %s1067, 8
        %s1069 = scalar_lea.vmem %s0, %s1068
        %s1070 = smul.u32 2, %s44
        %s1071 = smul.u32 2, %s44
        %p1072 = scmp.lt.s32.totalorder %s45, 1
        %s1073 = scalar_select %p1072, %s45, 1
        %s1074 = smul.addr %s1073, 4
        %s1075 = smul.addr %s1074, 8
        %s1076 = scalar_lea.vmem %s2, %s1075
        %p1077 = scmp.lt.s32.totalorder %s45, 1
        %s1078 = scalar_select %p1077, %s45, 1
        %s1079 = scalar_lea.vmem %s3, %s1078
        %p1080 = scmp.lt.s32.totalorder %s45, 1
        %s1081 = scalar_select %p1080, %s45, 1
        %s1082 = smul.addr %s1081, 4
        %s1083 = smul.addr %s1082, 8
        %s1084 = scalar_lea.vmem %s4, %s1083
        %p1085 = scmp.lt.s32.totalorder %s45, 1
        %s1086 = scalar_select %p1085, %s45, 1
        %s1087 = scalar_lea.vmem %s5, %s1086
        %p1088 = scmp.lt.s32.totalorder %s45, 1
        %s1089 = scalar_select %p1088, %s45, 1
        %s1090 = smul.addr %s1089, 4
        %s1091 = smul.addr %s1090, 8
        %s1092 = scalar_lea.vmem %s6, %s1091
        %p1093 = scmp.lt.s32.totalorder %s45, 1
        %s1094 = scalar_select %p1093, %s45, 1
        %s1095 = scalar_lea.vmem %s7, %s1094
        %p1096 = scmp.lt.s32.totalorder %s45, 1
        %s1097 = scalar_select %p1096, %s45, 1
        %s1098 = smul.addr %s1097, 4
        %s1099 = smul.addr %s1098, 8
        %s1100 = scalar_lea.vmem %s8, %s1099
        %p1101 = scmp.lt.s32.totalorder %s45, 1
        %s1102 = scalar_select %p1101, %s45, 1
        %s1103 = scalar_lea.vmem %s9, %s1102
        %p1104 = scmp.lt.s32.totalorder %s45, 1
        %s1105 = scalar_select %p1104, %s45, 1
        %s1106 = smul.addr %s1105, 8
        %s1107 = scalar_lea.vmem %s10, %s1106
        %p1108 = scmp.lt.s32.totalorder %s45, 1
        %s1109 = scalar_select %p1108, %s45, 1
        %s1110 = scalar_lea.vmem %s11, %s1109
        %p1111 = scmp.lt.s32.totalorder %s45, 1
        %s1112 = scalar_select %p1111, %s45, 1
        %s1113 = smul.addr %s1112, 8
        %s1114 = smul.addr %s1113, 8
        %s1115 = scalar_lea.vmem %s12, %s1114
        %p1116 = scmp.lt.s32.totalorder %s45, 1
        %s1117 = scalar_select %p1116, %s45, 1
        %s1118 = scalar_lea.vmem %s13, %s1117
        %p1119 = scmp.lt.s32.totalorder %s45, 1
        %s1120 = scalar_select %p1119, %s45, 1
        %s1121 = smul.addr %s1120, 8
        %s1122 = smul.addr %s1121, 8
        %s1123 = scalar_lea.vmem %s14, %s1122
        %p1124 = scmp.lt.s32.totalorder %s45, 1
        %s1125 = scalar_select %p1124, %s45, 1
        %s1126 = scalar_lea.vmem %s15, %s1125
        %p1127 = scmp.lt.s32.totalorder %s45, 1
        %s1128 = scalar_select %p1127, %s45, 1
        %s1129 = scalar_lea.vmem %s16, %s1128
        %p1130 = scmp.lt.s32.totalorder %s45, 1
        %s1131 = scalar_select %p1130, %s45, 1
        %s1132 = scalar_lea.vmem %s17, %s1131
        %p1133 = scmp.lt.s32.totalorder %s45, 1
        %s1134 = scalar_select %p1133, %s45, 1
        %s1135 = scalar_lea.vmem %s19, %s1134
        %p1136 = scmp.lt.s32.totalorder %s45, 1
        %s1137 = scalar_select %p1136, %s45, 1
        %s1138 = smul.addr %s1137, 16
        %s1139 = smul.addr %s1138, 8
        %s1140 = scalar_lea.vmem %s20, %s1139
        %p1141 = scmp.lt.s32.totalorder %s45, 1
        %s1142 = scalar_select %p1141, %s45, 1
        %s1143 = scalar_lea.vmem %s21, %s1142
        %p1144 = scmp.lt.s32.totalorder %s45, 1
        %s1145 = scalar_select %p1144, %s45, 1
        %s1146 = scalar_lea.vmem %s22, %s1145
        %p1147 = scmp.lt.s32.totalorder %s45, 1
        %s1148 = scalar_select %p1147, %s45, 1
        %s1149 = scalar_lea.vmem %s23, %s1148
        %s1150 = smul.u32 2, %s44
        %p1151 = scmp.eq.s32.totalorder %s45, 0
        // Predicated region
        $region125: #{tpu_custom_call.1} parent=115 // pred_check
          %p1152 = pneg %p1151
        $region126: #{tpu_custom_call.1} parent=115 // pred_check_branch
          %1154 = sbr.rel (%p1152) target = $region128
        $region127: #{tpu_custom_call.1} parent=115 // pred_region
          %v1155 = vld [vmem:[%s1069] sm:$0xff]
          %v1156 = vld [vmem:[%s1069 + $0x8] sm:$0xff]
          %vm1157 = vcmask 261120
          %1158 = vst.msk [vmem:[#allocation2] sm:$0xff] %vm1157, %v1155
          %1159 = vst.msk [vmem:[#allocation2 + $0x8] sm:$0xff] %vm1157, %v1156
        $region128: #{tpu_custom_call.1} parent=115 // pred_fallthru
          _
        %v1160 = vld [vmem:[#allocation2] sm:$0xff]
        %v1161 = vld [vmem:[#allocation2 + $0x8] sm:$0xff]
        %v1162 = vld [vmem:[#allocation3] sm:$0xff]
        %v1163 = vld [vmem:[#allocation3 + $0x8] sm:$0xff]
        %v1164 = vld [vmem:[%s1076] sm:$0xff]
        %v1165 = vld [vmem:[%s1076 + $0x8] sm:$0xff]
        %v1166 = vld [vmem:[%s1076 + $0x10] sm:$0xff]
        %v1167 = vld [vmem:[%s1076 + $0x18] sm:$0xff]
        %v1168 = vld [vmem:[%s1079] sm:$0x1]
        %v1170 = vperm.slane %v1168, 0
        %vm1172 = vcmask 261120
        %v1174 = vsel %vm1172, %v1160, 0
        %v1177 = vsel %vm1172, %v1161, 0
        %1179 = vmatpush.msra.mxu0 0.0
        %1180 = vmatpush.msra.mxu0 0.0
        %1181 = vmatpush.msra.mxu0 0.0
        %1182 = vmatpush.msra.mxu0 0.0
        %1183 = vmatpush.msra.mxu0 0.0
        %1184 = vmatpush.msra.mxu0 0.0
        %1185 = vmatpush.msra.mxu0 0.0
        %1186 = vmatpush.msra.mxu0 0.0
        %1187 = vmatpush.msra.mxu0 0.0
        %1188 = vmatpush.msra.mxu0 0.0
        %1189 = vmatpush.msra.mxu0 0.0
        %1190 = vmatpush.msra.mxu0 0.0
        %1191 = vmatpush.msra.mxu0 %v1167
        %1192 = vmatpush.msra.mxu0 %v1166
        %1193 = vmatpush.msra.mxu0 %v1165
        %1194 = vmatpush.msra.mxu0 %v1164
        %1195 = vmatmul.f32.gmra.mxu0 %v1174
        %v1196 = vpop.f32.mrf.mxu0
        %v1197 = vadd.f32 %v1170, %v1196
        %1198 = vmatmul.f32.gmra.mxu0 %v1177
        %v1199 = vpop.f32.mrf.mxu0
        %v1200 = vadd.f32 %v1170, %v1199
        %1201 = vdwg.mxu0
        %v1202 = vld [vmem:[%s1084] sm:$0xff]
        %v1203 = vld [vmem:[%s1084 + $0x8] sm:$0xff]
        %v1204 = vld [vmem:[%s1084 + $0x10] sm:$0xff]
        %v1205 = vld [vmem:[%s1084 + $0x18] sm:$0xff]
        %v1206 = vld [vmem:[%s1087] sm:$0x1]
        %v1208 = vperm.slane %v1206, 0
        %1210 = vmatpush.msra.mxu0 0.0
        %1211 = vmatpush.msra.mxu0 0.0
        %1212 = vmatpush.msra.mxu0 0.0
        %1213 = vmatpush.msra.mxu0 0.0
        %1214 = vmatpush.msra.mxu0 0.0
        %1215 = vmatpush.msra.mxu0 0.0
        %1216 = vmatpush.msra.mxu0 0.0
        %1217 = vmatpush.msra.mxu0 0.0
        %1218 = vmatpush.msra.mxu0 0.0
        %1219 = vmatpush.msra.mxu0 0.0
        %1220 = vmatpush.msra.mxu0 0.0
        %1221 = vmatpush.msra.mxu0 0.0
        %1222 = vmatpush.msra.mxu0 %v1205
        %1223 = vmatpush.msra.mxu0 %v1204
        %1224 = vmatpush.msra.mxu0 %v1203
        %1225 = vmatpush.msra.mxu0 %v1202
        %1226 = vmatmul.f32.gmra.mxu0 %v1174
        %v1227 = vpop.f32.mrf.mxu0
        %v1228 = vadd.f32 %v1208, %v1227
        %1229 = vmatmul.f32.gmra.mxu0 %v1177
        %v1230 = vpop.f32.mrf.mxu0
        %v1231 = vadd.f32 %v1208, %v1230
        %1232 = vdwg.mxu0
        %v1233 = vld [vmem:[%s1092] sm:$0xff]
        %v1234 = vld [vmem:[%s1092 + $0x8] sm:$0xff]
        %v1235 = vld [vmem:[%s1092 + $0x10] sm:$0xff]
        %v1236 = vld [vmem:[%s1092 + $0x18] sm:$0xff]
        %v1237 = vld [vmem:[%s1095] sm:$0x1]
        %v1239 = vperm.slane %v1237, 0
        %1241 = vmatpush.msra.mxu0 0.0
        %1242 = vmatpush.msra.mxu0 0.0
        %1243 = vmatpush.msra.mxu0 0.0
        %1244 = vmatpush.msra.mxu0 0.0
        %1245 = vmatpush.msra.mxu0 0.0
        %1246 = vmatpush.msra.mxu0 0.0
        %1247 = vmatpush.msra.mxu0 0.0
        %1248 = vmatpush.msra.mxu0 0.0
        %1249 = vmatpush.msra.mxu0 0.0
        %1250 = vmatpush.msra.mxu0 0.0
        %1251 = vmatpush.msra.mxu0 0.0
        %1252 = vmatpush.msra.mxu0 0.0
        %1253 = vmatpush.msra.mxu0 %v1236
        %1254 = vmatpush.msra.mxu0 %v1235
        %1255 = vmatpush.msra.mxu0 %v1234
        %1256 = vmatpush.msra.mxu0 %v1233
        %1257 = vmatmul.f32.gmra.mxu0 %v1174
        %v1258 = vpop.f32.mrf.mxu0
        %v1259 = vadd.f32 %v1239, %v1258
        %1260 = vmatmul.f32.gmra.mxu0 %v1177
        %v1261 = vpop.f32.mrf.mxu0
        %v1262 = vadd.f32 %v1239, %v1261
        %1263 = vdwg.mxu0
        %vm1264 = vcmask 64512
        %v1266 = vsel %vm1264, %v1197, 0
        %v1269 = vsel %vm1264, %v1228, 0
        %1271 = vmatpush.xpose.msra.mxu0 0.0
        %1272 = vmatpush.xpose.msra.mxu0 0.0
        %1273 = vmatpush.xpose.msra.mxu0 0.0
        %1274 = vmatpush.xpose.msra.mxu0 0.0
        %1275 = vmatpush.xpose.msra.mxu0 0.0
        %1276 = vmatpush.xpose.msra.mxu0 0.0
        %1277 = vmatpush.xpose.msra.mxu0 0.0
        %1278 = vmatpush.xpose.msra.mxu0 0.0
        %1279 = vmatpush.xpose.msra.mxu0 0.0
        %1280 = vmatpush.xpose.msra.mxu0 0.0
        %1281 = vmatpush.xpose.msra.mxu0 0.0
        %1282 = vmatpush.xpose.msra.mxu0 0.0
        %1283 = vmatpush.xpose.msra.mxu0 0.0
        %1284 = vmatpush.xpose.msra.mxu0 0.0
        %1285 = vmatpush.xpose.msra.mxu0 0.0
        %1286 = vmatpush.xpose.msra.mxu0 %v1269
        %1287 = vmatmul.f32.gmra.mxu0 %v1266
        %v1288 = vpop.f32.mrf.mxu0
        %v1289 = vadd.f32 0.0, %v1288
        %1290 = vdwg.mxu0
        %v1291 = vmul.f32 %v1289, 0.35355338
        %1292 = vrot.lane.b32.xlu0 %v1197, 120
        %v1293 = vpop.permute.xlu0 %1292
        %1294 = vrot.lane.b32.xlu0 %v1228, 120
        %v1295 = vpop.permute.xlu0 %1294
        %v1296 = vsel %vm1264, %v1293, 0
        %v1298 = vsel %vm1264, %v1295, 0
        %1300 = vmatpush.xpose.msra.mxu0 0.0
        %1301 = vmatpush.xpose.msra.mxu0 0.0
        %1302 = vmatpush.xpose.msra.mxu0 0.0
        %1303 = vmatpush.xpose.msra.mxu0 0.0
        %1304 = vmatpush.xpose.msra.mxu0 0.0
        %1305 = vmatpush.xpose.msra.mxu0 0.0
        %1306 = vmatpush.xpose.msra.mxu0 0.0
        %1307 = vmatpush.xpose.msra.mxu0 0.0
        %1308 = vmatpush.xpose.msra.mxu0 0.0
        %1309 = vmatpush.xpose.msra.mxu0 0.0
        %1310 = vmatpush.xpose.msra.mxu0 0.0
        %1311 = vmatpush.xpose.msra.mxu0 0.0
        %1312 = vmatpush.xpose.msra.mxu0 0.0
        %1313 = vmatpush.xpose.msra.mxu0 0.0
        %1314 = vmatpush.xpose.msra.mxu0 0.0
        %1315 = vmatpush.xpose.msra.mxu0 %v1298
        %1316 = vmatmul.f32.gmra.mxu0 %v1296
        %v1317 = vpop.f32.mrf.mxu0
        %v1318 = vadd.f32 0.0, %v1317
        %1319 = vdwg.mxu0
        %v1320 = vmul.f32 %v1318, 0.35355338
        %1321 = vrot.lane.b32.xlu0 %v1197, 112
        %v1322 = vpop.permute.xlu0 %1321
        %1323 = vrot.lane.b32.xlu0 %v1228, 112
        %v1324 = vpop.permute.xlu0 %1323
        %v1325 = vsel %vm1264, %v1322, 0
        %v1327 = vsel %vm1264, %v1324, 0
        %1329 = vmatpush.xpose.msra.mxu0 0.0
        %1330 = vmatpush.xpose.msra.mxu0 0.0
        %1331 = vmatpush.xpose.msra.mxu0 0.0
        %1332 = vmatpush.xpose.msra.mxu0 0.0
        %1333 = vmatpush.xpose.msra.mxu0 0.0
        %1334 = vmatpush.xpose.msra.mxu0 0.0
        %1335 = vmatpush.xpose.msra.mxu0 0.0
        %1336 = vmatpush.xpose.msra.mxu0 0.0
        %1337 = vmatpush.xpose.msra.mxu0 0.0
        %1338 = vmatpush.xpose.msra.mxu0 0.0
        %1339 = vmatpush.xpose.msra.mxu0 0.0
        %1340 = vmatpush.xpose.msra.mxu0 0.0
        %1341 = vmatpush.xpose.msra.mxu0 0.0
        %1342 = vmatpush.xpose.msra.mxu0 0.0
        %1343 = vmatpush.xpose.msra.mxu0 0.0
        %1344 = vmatpush.xpose.msra.mxu0 %v1327
        %1345 = vmatmul.f32.gmra.mxu0 %v1325
        %v1346 = vpop.f32.mrf.mxu0
        %v1347 = vadd.f32 0.0, %v1346
        %1348 = vdwg.mxu0
        %v1349 = vmul.f32 %v1347, 0.35355338
        %1350 = vrot.lane.b32.xlu0 %v1197, 104
        %v1351 = vpop.permute.xlu0 %1350
        %1352 = vrot.lane.b32.xlu0 %v1228, 104
        %v1353 = vpop.permute.xlu0 %1352
        %v1354 = vsel %vm1264, %v1351, 0
        %v1356 = vsel %vm1264, %v1353, 0
        %1358 = vmatpush.xpose.msra.mxu0 0.0
        %1359 = vmatpush.xpose.msra.mxu0 0.0
        %1360 = vmatpush.xpose.msra.mxu0 0.0
        %1361 = vmatpush.xpose.msra.mxu0 0.0
        %1362 = vmatpush.xpose.msra.mxu0 0.0
        %1363 = vmatpush.xpose.msra.mxu0 0.0
        %1364 = vmatpush.xpose.msra.mxu0 0.0
        %1365 = vmatpush.xpose.msra.mxu0 0.0
        %1366 = vmatpush.xpose.msra.mxu0 0.0
        %1367 = vmatpush.xpose.msra.mxu0 0.0
        %1368 = vmatpush.xpose.msra.mxu0 0.0
        %1369 = vmatpush.xpose.msra.mxu0 0.0
        %1370 = vmatpush.xpose.msra.mxu0 0.0
        %1371 = vmatpush.xpose.msra.mxu0 0.0
        %1372 = vmatpush.xpose.msra.mxu0 0.0
        %1373 = vmatpush.xpose.msra.mxu0 %v1356
        %1374 = vmatmul.f32.gmra.mxu0 %v1354
        %v1375 = vpop.f32.mrf.mxu0
        %v1376 = vadd.f32 0.0, %v1375
        %1377 = vdwg.mxu0
        %v1378 = vmul.f32 %v1376, 0.35355338
        %v1379 = vsel %vm1264, %v1291, -inf
        %1380 = vmax.xlane.f32.xlu0 %v1379
        %v1381 = vpop.xlane.xlu0 %1380
        %v1382 = vsel %vm1264, %v1320, -inf
        %1383 = vmax.xlane.f32.xlu0 %v1382
        %v1384 = vpop.xlane.xlu0 %1383
        %v1385 = vsel %vm1264, %v1349, -inf
        %1386 = vmax.xlane.f32.xlu0 %v1385
        %v1387 = vpop.xlane.xlu0 %1386
        %v1388 = vsel %vm1264, %v1378, -inf
        %1389 = vmax.xlane.f32.xlu0 %v1388
        %v1390 = vpop.xlane.xlu0 %1389
        %v1391 = vsub.f32 %v1291, %v1381
        %v1392 = vsub.f32 %v1320, %v1384
        %v1393 = vsub.f32 %v1349, %v1387
        %v1394 = vsub.f32 %v1378, %v1390
        %v1395 = vmul.f32 %v1391, 1.442695
        %v1396 = vpow.pop %v1395
        %v1397 = vmul.f32 %v1392, 1.442695
        %v1398 = vpow.pop %v1397
        %v1399 = vmul.f32 %v1393, 1.442695
        %v1400 = vpow.pop %v1399
        %v1401 = vmul.f32 %v1394, 1.442695
        %v1402 = vpow.pop %v1401
        %v1403 = vsel %vm1264, %v1396, 0.0
        %1404 = vadd.xlane.f32.xlu0 %v1403
        %v1405 = vpop.xlane.xlu0 %1404
        %v1406 = vsel %vm1264, %v1398, 0.0
        %1407 = vadd.xlane.f32.xlu0 %v1406
        %v1408 = vpop.xlane.xlu0 %1407
        %v1409 = vsel %vm1264, %v1400, 0.0
        %1410 = vadd.xlane.f32.xlu0 %v1409
        %v1411 = vpop.xlane.xlu0 %1410
        %v1412 = vsel %vm1264, %v1402, 0.0
        %1413 = vadd.xlane.f32.xlu0 %v1412
        %v1414 = vpop.xlane.xlu0 %1413
        %v1415 = vrcp.pop %v1405
        %v1416 = vrcp.pop %v1408
        %v1417 = vrcp.pop %v1411
        %v1418 = vrcp.pop %v1414
        %v1419 = vmul.f32 %v1405, %v1415
        %v1420 = vmul.f32 %v1408, %v1416
        %v1421 = vmul.f32 %v1411, %v1417
        %v1422 = vmul.f32 %v1414, %v1418
        %v1423 = vsub.f32 2.0, %v1419
        %v1424 = vsub.f32 2.0, %v1420
        %v1425 = vsub.f32 2.0, %v1421
        %v1426 = vsub.f32 2.0, %v1422
        %v1427 = vmul.f32 %v1415, %v1423
        %v1428 = vmul.f32 %v1416, %v1424
        %v1429 = vmul.f32 %v1417, %v1425
        %v1430 = vmul.f32 %v1418, %v1426
        %v1431 = vmul.f32 %v1396, %v1427
        %v1432 = vmul.f32 %v1398, %v1428
        %v1433 = vmul.f32 %v1400, %v1429
        %v1434 = vmul.f32 %v1402, %v1430
        %v1435 = vrot.slane %v1433, 4
        %vm1436 = vcmask 1047556
        %v1437 = vsel %vm1436, %v1435, %v1431
        %v1438 = vrot.slane %v1431, 4
        %v1439 = vsel %vm1436, %v1433, %v1438
        %v1441 = vunpack.c.l.s4 1983009808
        %v1442 = vunpack.c.0.s8 %v1441
        %v1443 = vperm.slane %v1437, %v1442
        %v1445 = vunpack.c.l.s4 1983009808
        %v1446 = vunpack.c.0.s8 %v1445
        %v1447 = vperm.slane %v1439, %v1446
        %v1448 = vrot.slane %v1434, 4
        %v1449 = vsel %vm1436, %v1448, %v1432
        %v1450 = vrot.slane %v1432, 4
        %v1451 = vsel %vm1436, %v1434, %v1450
        %v1453 = vunpack.c.l.s4 1983009808
        %v1454 = vunpack.c.0.s8 %v1453
        %v1455 = vperm.slane %v1449, %v1454
        %v1457 = vunpack.c.l.s4 1983009808
        %v1458 = vunpack.c.0.s8 %v1457
        %v1459 = vperm.slane %v1451, %v1458
        %v1460 = vld [vmem:[#allocation3] sm:$0xff]
        %v1461 = vrot.slane %v1162, 4
        %v1462 = vsel %vm1436, 0.0, %v1461
        %v1464 = vunpack.c.l.s4 1983009808
        %v1465 = vunpack.c.0.s8 %v1464
        %v1466 = vperm.slane %v1460, %v1465
        %v1468 = vunpack.c.l.s4 1983009808
        %v1469 = vunpack.c.0.s8 %v1468
        %v1470 = vperm.slane %v1462, %v1469
        %v1471 = vrot.slane %v1455, 4
        %v1472 = vsel %vm1436, %v1471, %v1443
        %v1473 = vrot.slane %v1443, 4
        %v1474 = vsel %vm1436, %v1455, %v1473
        %v1476 = vunpack.c.l.s4 1934713408
        %v1477 = vunpack.c.0.s8 %v1476
        %v1478 = vperm.slane %v1472, %v1477
        %v1480 = vunpack.c.l.s4 1934713408
        %v1481 = vunpack.c.0.s8 %v1480
        %v1482 = vperm.slane %v1474, %v1481
        %v1483 = vrot.slane %v1459, 4
        %v1484 = vsel %vm1436, %v1483, %v1447
        %v1485 = vrot.slane %v1447, 4
        %v1486 = vsel %vm1436, %v1459, %v1485
        %v1488 = vunpack.c.l.s4 1934713408
        %v1489 = vunpack.c.0.s8 %v1488
        %v1490 = vperm.slane %v1484, %v1489
        %v1492 = vunpack.c.l.s4 1934713408
        %v1493 = vunpack.c.0.s8 %v1492
        %v1494 = vperm.slane %v1486, %v1493
        %v1495 = vrot.slane %v1466, 4
        %v1496 = vsel %vm1436, 0.0, %v1495
        %v1498 = vunpack.c.l.s4 1934713408
        %v1499 = vunpack.c.0.s8 %v1498
        %v1500 = vperm.slane %v1466, %v1499
        %v1502 = vunpack.c.l.s4 1934713408
        %v1503 = vunpack.c.0.s8 %v1502
        %v1504 = vperm.slane %v1496, %v1503
        %v1505 = vrot.slane %v1470, 4
        %v1506 = vsel %vm1436, 0.0, %v1505
        %v1508 = vunpack.c.l.s4 1934713408
        %v1509 = vunpack.c.0.s8 %v1508
        %v1510 = vperm.slane %v1470, %v1509
        %v1512 = vunpack.c.l.s4 1934713408
        %v1513 = vunpack.c.0.s8 %v1512
        %v1514 = vperm.slane %v1506, %v1513
        %v1515 = vrot.slane %v1500, 4
        %v1516 = vsel %vm1436, %v1515, %v1478
        %v1517 = vrot.slane %v1478, 4
        %v1518 = vsel %vm1436, %v1500, %v1517
        %v1519 = vrot.slane %v1504, 4
        %v1520 = vsel %vm1436, %v1519, %v1482
        %v1521 = vrot.slane %v1482, 4
        %v1522 = vsel %vm1436, %v1504, %v1521
        %v1523 = vrot.slane %v1510, 4
        %v1524 = vsel %vm1436, %v1523, %v1490
        %v1525 = vrot.slane %v1490, 4
        %v1526 = vsel %vm1436, %v1510, %v1525
        %v1527 = vrot.slane %v1514, 4
        %v1528 = vsel %vm1436, %v1527, %v1494
        %v1529 = vrot.slane %v1494, 4
        %v1530 = vsel %vm1436, %v1514, %v1529
        %1532 = vrot.lane.b32.xlu0 %v1518, 8
        %v1533 = vpop.permute.xlu0 %1532
        %1536 = vrot.lane.b32.xlu0 %v1520, 16
        %v1537 = vpop.permute.xlu0 %1536
        %1540 = vrot.lane.b32.xlu0 %v1522, 24
        %v1541 = vpop.permute.xlu0 %1540
        %1544 = vrot.lane.b32.xlu0 %v1524, 32
        %v1545 = vpop.permute.xlu0 %1544
        %1548 = vrot.lane.b32.xlu0 %v1526, 40
        %v1549 = vpop.permute.xlu0 %1548
        %1552 = vrot.lane.b32.xlu0 %v1528, 48
        %v1553 = vpop.permute.xlu0 %1552
        %1556 = vrot.lane.b32.xlu0 %v1530, 56
        %v1557 = vpop.permute.xlu0 %1556
        %v1559 = vsel %vm1264, %v1516, %v1533
        %vm1560 = vcmask 130048
        %v1561 = vsel %vm1560, %v1559, %v1537
        %vm1562 = vcmask 195584
        %v1563 = vsel %vm1562, %v1561, %v1541
        %v1564 = vsel %vm1172, %v1563, %v1545
        %vm1565 = vcmask 326656
        %v1566 = vsel %vm1565, %v1564, %v1549
        %vm1567 = vcmask 392192
        %v1568 = vsel %vm1567, %v1566, %v1553
        %vm1569 = vcmask 457728
        %v1570 = vsel %vm1569, %v1568, %v1557
        %1571 = vxpose.xlu0.b32.start [1/16] %v1570, 128
        %1572 = vxpose.xlu0.b32.cont [2/16] 0.0, 128
        %1573 = vxpose.xlu0.b32.cont [3/16] 0.0, 128
        %1574 = vxpose.xlu0.b32.cont [4/16] 0.0, 128
        %1575 = vxpose.xlu0.b32.cont [5/16] 0.0, 128
        %1576 = vxpose.xlu0.b32.cont [6/16] 0.0, 128
        %1577 = vxpose.xlu0.b32.cont [7/16] 0.0, 128
        %1578 = vxpose.xlu0.b32.cont [8/16] 0.0, 128
        %1579 = vxpose.xlu0.b32.cont [9/16] 0.0, 128
        %1580 = vxpose.xlu0.b32.cont [10/16] 0.0, 128
        %1581 = vxpose.xlu0.b32.cont [11/16] 0.0, 128
        %1582 = vxpose.xlu0.b32.cont [12/16] 0.0, 128
        %1583 = vxpose.xlu0.b32.cont [13/16] 0.0, 128
        %1584 = vxpose.xlu0.b32.cont [14/16] 0.0, 128
        %1585 = vxpose.xlu0.b32.cont [15/16] 0.0, 128
        %1586 = vxpose.xlu0.b32.end [16/16] 0.0, 128
        %v1587 = vpop.trf.xlu0
        %v1588 = vpop.trf.xlu0
        %v1589 = vpop.trf.xlu0
        %v1590 = vpop.trf.xlu0
        %v1591 = vpop.trf.xlu0
        %v1592 = vpop.trf.xlu0
        %v1593 = vpop.trf.xlu0
        %v1594 = vpop.trf.xlu0
        %v1595 = vpop.trf.xlu0
        %v1596 = vpop.trf.xlu0
        %v1597 = vpop.trf.xlu0
        %v1598 = vpop.trf.xlu0
        %v1599 = vpop.trf.xlu0
        %v1600 = vpop.trf.xlu0
        %v1601 = vpop.trf.xlu0
        %v1602 = vpop.trf.xlu0
        %v1604 = vsel %vm1264, %v1200, 0
        %v1607 = vsel %vm1264, %v1231, 0
        %1609 = vmatpush.xpose.msra.mxu0 0.0
        %1610 = vmatpush.xpose.msra.mxu0 0.0
        %1611 = vmatpush.xpose.msra.mxu0 0.0
        %1612 = vmatpush.xpose.msra.mxu0 0.0
        %1613 = vmatpush.xpose.msra.mxu0 0.0
        %1614 = vmatpush.xpose.msra.mxu0 0.0
        %1615 = vmatpush.xpose.msra.mxu0 0.0
        %1616 = vmatpush.xpose.msra.mxu0 0.0
        %1617 = vmatpush.xpose.msra.mxu0 0.0
        %1618 = vmatpush.xpose.msra.mxu0 0.0
        %1619 = vmatpush.xpose.msra.mxu0 0.0
        %1620 = vmatpush.xpose.msra.mxu0 0.0
        %1621 = vmatpush.xpose.msra.mxu0 0.0
        %1622 = vmatpush.xpose.msra.mxu0 0.0
        %1623 = vmatpush.xpose.msra.mxu0 0.0
        %1624 = vmatpush.xpose.msra.mxu0 %v1607
        %1625 = vmatmul.f32.gmra.mxu0 %v1604
        %v1626 = vpop.f32.mrf.mxu0
        %v1627 = vadd.f32 0.0, %v1626
        %1628 = vdwg.mxu0
        %v1629 = vmul.f32 %v1627, 0.35355338
        %1630 = vrot.lane.b32.xlu0 %v1200, 120
        %v1631 = vpop.permute.xlu0 %1630
        %1632 = vrot.lane.b32.xlu0 %v1231, 120
        %v1633 = vpop.permute.xlu0 %1632
        %v1634 = vsel %vm1264, %v1631, 0
        %v1636 = vsel %vm1264, %v1633, 0
        %1638 = vmatpush.xpose.msra.mxu0 0.0
        %1639 = vmatpush.xpose.msra.mxu0 0.0
        %1640 = vmatpush.xpose.msra.mxu0 0.0
        %1641 = vmatpush.xpose.msra.mxu0 0.0
        %1642 = vmatpush.xpose.msra.mxu0 0.0
        %1643 = vmatpush.xpose.msra.mxu0 0.0
        %1644 = vmatpush.xpose.msra.mxu0 0.0
        %1645 = vmatpush.xpose.msra.mxu0 0.0
        %1646 = vmatpush.xpose.msra.mxu0 0.0
        %1647 = vmatpush.xpose.msra.mxu0 0.0
        %1648 = vmatpush.xpose.msra.mxu0 0.0
        %1649 = vmatpush.xpose.msra.mxu0 0.0
        %1650 = vmatpush.xpose.msra.mxu0 0.0
        %1651 = vmatpush.xpose.msra.mxu0 0.0
        %1652 = vmatpush.xpose.msra.mxu0 0.0
        %1653 = vmatpush.xpose.msra.mxu0 %v1636
        %1654 = vmatmul.f32.gmra.mxu0 %v1634
        %v1655 = vpop.f32.mrf.mxu0
        %v1656 = vadd.f32 0.0, %v1655
        %1657 = vdwg.mxu0
        %v1658 = vmul.f32 %v1656, 0.35355338
        %1659 = vrot.lane.b32.xlu0 %v1200, 112
        %v1660 = vpop.permute.xlu0 %1659
        %1661 = vrot.lane.b32.xlu0 %v1231, 112
        %v1662 = vpop.permute.xlu0 %1661
        %v1663 = vsel %vm1264, %v1660, 0
        %v1665 = vsel %vm1264, %v1662, 0
        %1667 = vmatpush.xpose.msra.mxu0 0.0
        %1668 = vmatpush.xpose.msra.mxu0 0.0
        %1669 = vmatpush.xpose.msra.mxu0 0.0
        %1670 = vmatpush.xpose.msra.mxu0 0.0
        %1671 = vmatpush.xpose.msra.mxu0 0.0
        %1672 = vmatpush.xpose.msra.mxu0 0.0
        %1673 = vmatpush.xpose.msra.mxu0 0.0
        %1674 = vmatpush.xpose.msra.mxu0 0.0
        %1675 = vmatpush.xpose.msra.mxu0 0.0
        %1676 = vmatpush.xpose.msra.mxu0 0.0
        %1677 = vmatpush.xpose.msra.mxu0 0.0
        %1678 = vmatpush.xpose.msra.mxu0 0.0
        %1679 = vmatpush.xpose.msra.mxu0 0.0
        %1680 = vmatpush.xpose.msra.mxu0 0.0
        %1681 = vmatpush.xpose.msra.mxu0 0.0
        %1682 = vmatpush.xpose.msra.mxu0 %v1665
        %1683 = vmatmul.f32.gmra.mxu0 %v1663
        %v1684 = vpop.f32.mrf.mxu0
        %v1685 = vadd.f32 0.0, %v1684
        %1686 = vdwg.mxu0
        %v1687 = vmul.f32 %v1685, 0.35355338
        %1688 = vrot.lane.b32.xlu0 %v1200, 104
        %v1689 = vpop.permute.xlu0 %1688
        %1690 = vrot.lane.b32.xlu0 %v1231, 104
        %v1691 = vpop.permute.xlu0 %1690
        %v1692 = vsel %vm1264, %v1689, 0
        %v1694 = vsel %vm1264, %v1691, 0
        %1696 = vmatpush.xpose.msra.mxu0 0.0
        %1697 = vmatpush.xpose.msra.mxu0 0.0
        %1698 = vmatpush.xpose.msra.mxu0 0.0
        %1699 = vmatpush.xpose.msra.mxu0 0.0
        %1700 = vmatpush.xpose.msra.mxu0 0.0
        %1701 = vmatpush.xpose.msra.mxu0 0.0
        %1702 = vmatpush.xpose.msra.mxu0 0.0
        %1703 = vmatpush.xpose.msra.mxu0 0.0
        %1704 = vmatpush.xpose.msra.mxu0 0.0
        %1705 = vmatpush.xpose.msra.mxu0 0.0
        %1706 = vmatpush.xpose.msra.mxu0 0.0
        %1707 = vmatpush.xpose.msra.mxu0 0.0
        %1708 = vmatpush.xpose.msra.mxu0 0.0
        %1709 = vmatpush.xpose.msra.mxu0 0.0
        %1710 = vmatpush.xpose.msra.mxu0 0.0
        %1711 = vmatpush.xpose.msra.mxu0 %v1694
        %1712 = vmatmul.f32.gmra.mxu0 %v1692
        %v1713 = vpop.f32.mrf.mxu0
        %v1714 = vadd.f32 0.0, %v1713
        %1715 = vdwg.mxu0
        %v1716 = vmul.f32 %v1714, 0.35355338
        %v1717 = vsel %vm1264, %v1629, -inf
        %1718 = vmax.xlane.f32.xlu0 %v1717
        %v1719 = vpop.xlane.xlu0 %1718
        %v1720 = vsel %vm1264, %v1658, -inf
        %1721 = vmax.xlane.f32.xlu0 %v1720
        %v1722 = vpop.xlane.xlu0 %1721
        %v1723 = vsel %vm1264, %v1687, -inf
        %1724 = vmax.xlane.f32.xlu0 %v1723
        %v1725 = vpop.xlane.xlu0 %1724
        %v1726 = vsel %vm1264, %v1716, -inf
        %1727 = vmax.xlane.f32.xlu0 %v1726
        %v1728 = vpop.xlane.xlu0 %1727
        %v1729 = vsub.f32 %v1629, %v1719
        %v1730 = vsub.f32 %v1658, %v1722
        %v1731 = vsub.f32 %v1687, %v1725
        %v1732 = vsub.f32 %v1716, %v1728
        %v1733 = vmul.f32 %v1729, 1.442695
        %v1734 = vpow.pop %v1733
        %v1735 = vmul.f32 %v1730, 1.442695
        %v1736 = vpow.pop %v1735
        %v1737 = vmul.f32 %v1731, 1.442695
        %v1738 = vpow.pop %v1737
        %v1739 = vmul.f32 %v1732, 1.442695
        %v1740 = vpow.pop %v1739
        %v1741 = vsel %vm1264, %v1734, 0.0
        %1742 = vadd.xlane.f32.xlu0 %v1741
        %v1743 = vpop.xlane.xlu0 %1742
        %v1744 = vsel %vm1264, %v1736, 0.0
        %1745 = vadd.xlane.f32.xlu0 %v1744
        %v1746 = vpop.xlane.xlu0 %1745
        %v1747 = vsel %vm1264, %v1738, 0.0
        %1748 = vadd.xlane.f32.xlu0 %v1747
        %v1749 = vpop.xlane.xlu0 %1748
        %v1750 = vsel %vm1264, %v1740, 0.0
        %1751 = vadd.xlane.f32.xlu0 %v1750
        %v1752 = vpop.xlane.xlu0 %1751
        %v1753 = vrcp.pop %v1743
        %v1754 = vrcp.pop %v1746
        %v1755 = vrcp.pop %v1749
        %v1756 = vrcp.pop %v1752
        %v1757 = vmul.f32 %v1743, %v1753
        %v1758 = vmul.f32 %v1746, %v1754
        %v1759 = vmul.f32 %v1749, %v1755
        %v1760 = vmul.f32 %v1752, %v1756
        %v1761 = vsub.f32 2.0, %v1757
        %v1762 = vsub.f32 2.0, %v1758
        %v1763 = vsub.f32 2.0, %v1759
        %v1764 = vsub.f32 2.0, %v1760
        %v1765 = vmul.f32 %v1753, %v1761
        %v1766 = vmul.f32 %v1754, %v1762
        %v1767 = vmul.f32 %v1755, %v1763
        %v1768 = vmul.f32 %v1756, %v1764
        %v1769 = vmul.f32 %v1734, %v1765
        %v1770 = vmul.f32 %v1736, %v1766
        %v1771 = vmul.f32 %v1738, %v1767
        %v1772 = vmul.f32 %v1740, %v1768
        %v1773 = vrot.slane %v1771, 4
        %v1774 = vsel %vm1436, %v1773, %v1769
        %v1775 = vrot.slane %v1769, 4
        %v1776 = vsel %vm1436, %v1771, %v1775
        %v1778 = vunpack.c.l.s4 1983009808
        %v1779 = vunpack.c.0.s8 %v1778
        %v1780 = vperm.slane %v1774, %v1779
        %v1782 = vunpack.c.l.s4 1983009808
        %v1783 = vunpack.c.0.s8 %v1782
        %v1784 = vperm.slane %v1776, %v1783
        %v1785 = vrot.slane %v1772, 4
        %v1786 = vsel %vm1436, %v1785, %v1770
        %v1787 = vrot.slane %v1770, 4
        %v1788 = vsel %vm1436, %v1772, %v1787
        %v1790 = vunpack.c.l.s4 1983009808
        %v1791 = vunpack.c.0.s8 %v1790
        %v1792 = vperm.slane %v1786, %v1791
        %v1794 = vunpack.c.l.s4 1983009808
        %v1795 = vunpack.c.0.s8 %v1794
        %v1796 = vperm.slane %v1788, %v1795
        %v1797 = vld [vmem:[#allocation3 + $0x8] sm:$0xff]
        %v1798 = vrot.slane %v1163, 4
        %v1799 = vsel %vm1436, 0.0, %v1798
        %v1801 = vunpack.c.l.s4 1983009808
        %v1802 = vunpack.c.0.s8 %v1801
        %v1803 = vperm.slane %v1797, %v1802
        %v1805 = vunpack.c.l.s4 1983009808
        %v1806 = vunpack.c.0.s8 %v1805
        %v1807 = vperm.slane %v1799, %v1806
        %v1808 = vrot.slane %v1792, 4
        %v1809 = vsel %vm1436, %v1808, %v1780
        %v1810 = vrot.slane %v1780, 4
        %v1811 = vsel %vm1436, %v1792, %v1810
        %v1813 = vunpack.c.l.s4 1934713408
        %v1814 = vunpack.c.0.s8 %v1813
        %v1815 = vperm.slane %v1809, %v1814
        %v1817 = vunpack.c.l.s4 1934713408
        %v1818 = vunpack.c.0.s8 %v1817
        %v1819 = vperm.slane %v1811, %v1818
        %v1820 = vrot.slane %v1796, 4
        %v1821 = vsel %vm1436, %v1820, %v1784
        %v1822 = vrot.slane %v1784, 4
        %v1823 = vsel %vm1436, %v1796, %v1822
        %v1825 = vunpack.c.l.s4 1934713408
        %v1826 = vunpack.c.0.s8 %v1825
        %v1827 = vperm.slane %v1821, %v1826
        %v1829 = vunpack.c.l.s4 1934713408
        %v1830 = vunpack.c.0.s8 %v1829
        %v1831 = vperm.slane %v1823, %v1830
        %v1832 = vrot.slane %v1803, 4
        %v1833 = vsel %vm1436, 0.0, %v1832
        %v1835 = vunpack.c.l.s4 1934713408
        %v1836 = vunpack.c.0.s8 %v1835
        %v1837 = vperm.slane %v1803, %v1836
        %v1839 = vunpack.c.l.s4 1934713408
        %v1840 = vunpack.c.0.s8 %v1839
        %v1841 = vperm.slane %v1833, %v1840
        %v1842 = vrot.slane %v1807, 4
        %v1843 = vsel %vm1436, 0.0, %v1842
        %v1845 = vunpack.c.l.s4 1934713408
        %v1846 = vunpack.c.0.s8 %v1845
        %v1847 = vperm.slane %v1807, %v1846
        %v1849 = vunpack.c.l.s4 1934713408
        %v1850 = vunpack.c.0.s8 %v1849
        %v1851 = vperm.slane %v1843, %v1850
        %v1852 = vrot.slane %v1837, 4
        %v1853 = vsel %vm1436, %v1852, %v1815
        %v1854 = vrot.slane %v1815, 4
        %v1855 = vsel %vm1436, %v1837, %v1854
        %v1856 = vrot.slane %v1841, 4
        %v1857 = vsel %vm1436, %v1856, %v1819
        %v1858 = vrot.slane %v1819, 4
        %v1859 = vsel %vm1436, %v1841, %v1858
        %v1860 = vrot.slane %v1847, 4
        %v1861 = vsel %vm1436, %v1860, %v1827
        %v1862 = vrot.slane %v1827, 4
        %v1863 = vsel %vm1436, %v1847, %v1862
        %v1864 = vrot.slane %v1851, 4
        %v1865 = vsel %vm1436, %v1864, %v1831
        %v1866 = vrot.slane %v1831, 4
        %v1867 = vsel %vm1436, %v1851, %v1866
        %1869 = vrot.lane.b32.xlu0 %v1855, 8
        %v1870 = vpop.permute.xlu0 %1869
        %1873 = vrot.lane.b32.xlu0 %v1857, 16
        %v1874 = vpop.permute.xlu0 %1873
        %1877 = vrot.lane.b32.xlu0 %v1859, 24
        %v1878 = vpop.permute.xlu0 %1877
        %1881 = vrot.lane.b32.xlu0 %v1861, 32
        %v1882 = vpop.permute.xlu0 %1881
        %1885 = vrot.lane.b32.xlu0 %v1863, 40
        %v1886 = vpop.permute.xlu0 %1885
        %1889 = vrot.lane.b32.xlu0 %v1865, 48
        %v1890 = vpop.permute.xlu0 %1889
        %1893 = vrot.lane.b32.xlu0 %v1867, 56
        %v1894 = vpop.permute.xlu0 %1893
        %v1896 = vsel %vm1264, %v1853, %v1870
        %v1897 = vsel %vm1560, %v1896, %v1874
        %v1898 = vsel %vm1562, %v1897, %v1878
        %v1899 = vsel %vm1172, %v1898, %v1882
        %v1900 = vsel %vm1565, %v1899, %v1886
        %v1901 = vsel %vm1567, %v1900, %v1890
        %v1902 = vsel %vm1569, %v1901, %v1894
        %1903 = vxpose.xlu0.b32.start [1/16] %v1902, 128
        %1904 = vxpose.xlu0.b32.cont [2/16] 0.0, 128
        %1905 = vxpose.xlu0.b32.cont [3/16] 0.0, 128
        %1906 = vxpose.xlu0.b32.cont [4/16] 0.0, 128
        %1907 = vxpose.xlu0.b32.cont [5/16] 0.0, 128
        %1908 = vxpose.xlu0.b32.cont [6/16] 0.0, 128
        %1909 = vxpose.xlu0.b32.cont [7/16] 0.0, 128
        %1910 = vxpose.xlu0.b32.cont [8/16] 0.0, 128
        %1911 = vxpose.xlu0.b32.cont [9/16] 0.0, 128
        %1912 = vxpose.xlu0.b32.cont [10/16] 0.0, 128
        %1913 = vxpose.xlu0.b32.cont [11/16] 0.0, 128
        %1914 = vxpose.xlu0.b32.cont [12/16] 0.0, 128
        %1915 = vxpose.xlu0.b32.cont [13/16] 0.0, 128
        %1916 = vxpose.xlu0.b32.cont [14/16] 0.0, 128
        %1917 = vxpose.xlu0.b32.cont [15/16] 0.0, 128
        %1918 = vxpose.xlu0.b32.end [16/16] 0.0, 128
        %v1919 = vpop.trf.xlu0
        %v1920 = vpop.trf.xlu0
        %v1921 = vpop.trf.xlu0
        %v1922 = vpop.trf.xlu0
        %v1923 = vpop.trf.xlu0
        %v1924 = vpop.trf.xlu0
        %v1925 = vpop.trf.xlu0
        %v1926 = vpop.trf.xlu0
        %v1927 = vpop.trf.xlu0
        %v1928 = vpop.trf.xlu0
        %v1929 = vpop.trf.xlu0
        %v1930 = vpop.trf.xlu0
        %v1931 = vpop.trf.xlu0
        %v1932 = vpop.trf.xlu0
        %v1933 = vpop.trf.xlu0
        %v1934 = vpop.trf.xlu0
        %v1935 = vld [vmem:[%s1107] sm:$0x1f]
        %v1936 = vld [vmem:[%s1110] sm:$0x1]
        %v1938 = vperm.slane %v1936, 0
        %vm1940 = vcmask 39936
        %v1942 = vsel %vm1940, %v1587, 0
        %v1945 = vsel %vm1940, %v1588, 0
        %v1948 = vsel %vm1940, %v1589, 0
        %v1951 = vsel %vm1940, %v1590, 0
        %v1954 = vsel %vm1940, %v1591, 0
        %v1957 = vsel %vm1940, %v1592, 0
        %v1960 = vsel %vm1940, %v1593, 0
        %v1963 = vsel %vm1940, %v1594, 0
        %v1966 = vsel %vm1940, %v1919, 0
        %v1969 = vsel %vm1940, %v1920, 0
        %v1972 = vsel %vm1940, %v1921, 0
        %v1975 = vsel %vm1940, %v1922, 0
        %v1978 = vsel %vm1940, %v1923, 0
        %v1981 = vsel %vm1940, %v1924, 0
        %v1984 = vsel %vm1940, %v1925, 0
        %v1987 = vsel %vm1940, %v1926, 0
        %vm1989 = vcmask 1044480
        %v1991 = vsel %vm1989, %v1935, 0
        %1993 = vmatpush.msra.mxu0 0.0
        %1994 = vmatpush.msra.mxu0 0.0
        %1995 = vmatpush.msra.mxu0 0.0
        %1996 = vmatpush.msra.mxu0 0.0
        %1997 = vmatpush.msra.mxu0 0.0
        %1998 = vmatpush.msra.mxu0 0.0
        %1999 = vmatpush.msra.mxu0 0.0
        %2000 = vmatpush.msra.mxu0 0.0
        %2001 = vmatpush.msra.mxu0 0.0
        %2002 = vmatpush.msra.mxu0 0.0
        %2003 = vmatpush.msra.mxu0 0.0
        %2004 = vmatpush.msra.mxu0 0.0
        %2005 = vmatpush.msra.mxu0 0.0
        %2006 = vmatpush.msra.mxu0 0.0
        %2007 = vmatpush.msra.mxu0 0.0
        %2008 = vmatpush.msra.mxu0 %v1991
        %2009 = vmatmul.f32.gmra.mxu0 %v1942
        %v2010 = vpop.f32.mrf.mxu0
        %v2011 = vadd.f32 %v1938, %v2010
        %2012 = vmatmul.f32.gmra.mxu0 %v1945
        %v2013 = vpop.f32.mrf.mxu0
        %v2014 = vadd.f32 %v1938, %v2013
        %2015 = vmatmul.f32.gmra.mxu0 %v1948
        %v2016 = vpop.f32.mrf.mxu0
        %v2017 = vadd.f32 %v1938, %v2016
        %2018 = vmatmul.f32.gmra.mxu0 %v1951
        %v2019 = vpop.f32.mrf.mxu0
        %v2020 = vadd.f32 %v1938, %v2019
        %2021 = vmatmul.f32.gmra.mxu0 %v1954
        %v2022 = vpop.f32.mrf.mxu0
        %v2023 = vadd.f32 %v1938, %v2022
        %2024 = vmatmul.f32.gmra.mxu0 %v1957
        %v2025 = vpop.f32.mrf.mxu0
        %v2026 = vadd.f32 %v1938, %v2025
        %2027 = vmatmul.f32.gmra.mxu0 %v1960
        %v2028 = vpop.f32.mrf.mxu0
        %v2029 = vadd.f32 %v1938, %v2028
        %2030 = vmatmul.f32.gmra.mxu0 %v1963
        %v2031 = vpop.f32.mrf.mxu0
        %v2032 = vadd.f32 %v1938, %v2031
        %2033 = vmatmul.f32.gmra.mxu0 %v1966
        %v2034 = vpop.f32.mrf.mxu0
        %v2035 = vadd.f32 %v1938, %v2034
        %2036 = vmatmul.f32.gmra.mxu0 %v1969
        %v2037 = vpop.f32.mrf.mxu0
        %v2038 = vadd.f32 %v1938, %v2037
        %2039 = vmatmul.f32.gmra.mxu0 %v1972
        %v2040 = vpop.f32.mrf.mxu0
        %v2041 = vadd.f32 %v1938, %v2040
        %2042 = vmatmul.f32.gmra.mxu0 %v1975
        %v2043 = vpop.f32.mrf.mxu0
        %v2044 = vadd.f32 %v1938, %v2043
        %2045 = vmatmul.f32.gmra.mxu0 %v1978
        %v2046 = vpop.f32.mrf.mxu0
        %v2047 = vadd.f32 %v1938, %v2046
        %2048 = vmatmul.f32.gmra.mxu0 %v1981
        %v2049 = vpop.f32.mrf.mxu0
        %v2050 = vadd.f32 %v1938, %v2049
        %2051 = vmatmul.f32.gmra.mxu0 %v1984
        %v2052 = vpop.f32.mrf.mxu0
        %v2053 = vadd.f32 %v1938, %v2052
        %2054 = vmatmul.f32.gmra.mxu0 %v1987
        %v2055 = vpop.f32.mrf.mxu0
        %v2056 = vadd.f32 %v1938, %v2055
        %2057 = vdwg.mxu0
        %v2058 = vmax.f32 %v2011, 0.0
        %v2059 = vmax.f32 %v2014, 0.0
        %v2060 = vmax.f32 %v2017, 0.0
        %v2061 = vmax.f32 %v2020, 0.0
        %v2062 = vmax.f32 %v2023, 0.0
        %v2063 = vmax.f32 %v2026, 0.0
        %v2064 = vmax.f32 %v2029, 0.0
        %v2065 = vmax.f32 %v2032, 0.0
        %v2066 = vmax.f32 %v2035, 0.0
        %v2067 = vmax.f32 %v2038, 0.0
        %v2068 = vmax.f32 %v2041, 0.0
        %v2069 = vmax.f32 %v2044, 0.0
        %v2070 = vmax.f32 %v2047, 0.0
        %v2071 = vmax.f32 %v2050, 0.0
        %v2072 = vmax.f32 %v2053, 0.0
        %v2073 = vmax.f32 %v2056, 0.0
        %v2074 = vld [vmem:[%s1115] sm:$0xff]
        %v2075 = vld [vmem:[%s1115 + $0x8] sm:$0xff]
        %v2076 = vld [vmem:[%s1115 + $0x10] sm:$0xff]
        %v2077 = vld [vmem:[%s1115 + $0x18] sm:$0xff]
        %v2078 = vld [vmem:[%s1115 + $0x20] sm:$0xff]
        %v2079 = vld [vmem:[%s1115 + $0x28] sm:$0xff]
        %v2080 = vld [vmem:[%s1115 + $0x30] sm:$0xff]
        %v2081 = vld [vmem:[%s1115 + $0x38] sm:$0xff]
        %v2082 = vld [vmem:[%s1118] sm:$0x1]
        %v2084 = vperm.slane %v2082, 0
        %vm2086 = vcmask 523264
        %v2088 = vsel %vm2086, %v2058, 0
        %v2091 = vsel %vm2086, %v2059, 0
        %v2094 = vsel %vm2086, %v2060, 0
        %v2097 = vsel %vm2086, %v2061, 0
        %v2100 = vsel %vm2086, %v2062, 0
        %v2103 = vsel %vm2086, %v2063, 0
        %v2106 = vsel %vm2086, %v2064, 0
        %v2109 = vsel %vm2086, %v2065, 0
        %v2112 = vsel %vm2086, %v2066, 0
        %v2115 = vsel %vm2086, %v2067, 0
        %v2118 = vsel %vm2086, %v2068, 0
        %v2121 = vsel %vm2086, %v2069, 0
        %v2124 = vsel %vm2086, %v2070, 0
        %v2127 = vsel %vm2086, %v2071, 0
        %v2130 = vsel %vm2086, %v2072, 0
        %v2133 = vsel %vm2086, %v2073, 0
        %2135 = vmatpush.msra.mxu0 0.0
        %2136 = vmatpush.msra.mxu0 0.0
        %2137 = vmatpush.msra.mxu0 0.0
        %2138 = vmatpush.msra.mxu0 0.0
        %2139 = vmatpush.msra.mxu0 0.0
        %2140 = vmatpush.msra.mxu0 0.0
        %2141 = vmatpush.msra.mxu0 0.0
        %2142 = vmatpush.msra.mxu0 0.0
        %2143 = vmatpush.msra.mxu0 %v2081
        %2144 = vmatpush.msra.mxu0 %v2080
        %2145 = vmatpush.msra.mxu0 %v2079
        %2146 = vmatpush.msra.mxu0 %v2078
        %2147 = vmatpush.msra.mxu0 %v2077
        %2148 = vmatpush.msra.mxu0 %v2076
        %2149 = vmatpush.msra.mxu0 %v2075
        %2150 = vmatpush.msra.mxu0 %v2074
        %2151 = vmatmul.f32.gmra.mxu0 %v2088
        %v2152 = vpop.f32.mrf.mxu0
        %v2153 = vadd.f32 %v2084, %v2152
        %2154 = vmatmul.f32.gmra.mxu0 %v2091
        %v2155 = vpop.f32.mrf.mxu0
        %v2156 = vadd.f32 %v2084, %v2155
        %2157 = vmatmul.f32.gmra.mxu0 %v2094
        %v2158 = vpop.f32.mrf.mxu0
        %v2159 = vadd.f32 %v2084, %v2158
        %2160 = vmatmul.f32.gmra.mxu0 %v2097
        %v2161 = vpop.f32.mrf.mxu0
        %v2162 = vadd.f32 %v2084, %v2161
        %2163 = vmatmul.f32.gmra.mxu0 %v2100
        %v2164 = vpop.f32.mrf.mxu0
        %v2165 = vadd.f32 %v2084, %v2164
        %2166 = vmatmul.f32.gmra.mxu0 %v2103
        %v2167 = vpop.f32.mrf.mxu0
        %v2168 = vadd.f32 %v2084, %v2167
        %2169 = vmatmul.f32.gmra.mxu0 %v2106
        %v2170 = vpop.f32.mrf.mxu0
        %v2171 = vadd.f32 %v2084, %v2170
        %2172 = vmatmul.f32.gmra.mxu0 %v2109
        %v2173 = vpop.f32.mrf.mxu0
        %v2174 = vadd.f32 %v2084, %v2173
        %2175 = vmatmul.f32.gmra.mxu0 %v2112
        %v2176 = vpop.f32.mrf.mxu0
        %v2177 = vadd.f32 %v2084, %v2176
        %2178 = vmatmul.f32.gmra.mxu0 %v2115
        %v2179 = vpop.f32.mrf.mxu0
        %v2180 = vadd.f32 %v2084, %v2179
        %2181 = vmatmul.f32.gmra.mxu0 %v2118
        %v2182 = vpop.f32.mrf.mxu0
        %v2183 = vadd.f32 %v2084, %v2182
        %2184 = vmatmul.f32.gmra.mxu0 %v2121
        %v2185 = vpop.f32.mrf.mxu0
        %v2186 = vadd.f32 %v2084, %v2185
        %2187 = vmatmul.f32.gmra.mxu0 %v2124
        %v2188 = vpop.f32.mrf.mxu0
        %v2189 = vadd.f32 %v2084, %v2188
        %2190 = vmatmul.f32.gmra.mxu0 %v2127
        %v2191 = vpop.f32.mrf.mxu0
        %v2192 = vadd.f32 %v2084, %v2191
        %2193 = vmatmul.f32.gmra.mxu0 %v2130
        %v2194 = vpop.f32.mrf.mxu0
        %v2195 = vadd.f32 %v2084, %v2194
        %2196 = vmatmul.f32.gmra.mxu0 %v2133
        %v2197 = vpop.f32.mrf.mxu0
        %v2198 = vadd.f32 %v2084, %v2197
        %2199 = vdwg.mxu0
        %v2200 = vmax.f32 %v2153, 0.0
        %v2201 = vmax.f32 %v2156, 0.0
        %v2202 = vmax.f32 %v2159, 0.0
        %v2203 = vmax.f32 %v2162, 0.0
        %v2204 = vmax.f32 %v2165, 0.0
        %v2205 = vmax.f32 %v2168, 0.0
        %v2206 = vmax.f32 %v2171, 0.0
        %v2207 = vmax.f32 %v2174, 0.0
        %v2208 = vmax.f32 %v2177, 0.0
        %v2209 = vmax.f32 %v2180, 0.0
        %v2210 = vmax.f32 %v2183, 0.0
        %v2211 = vmax.f32 %v2186, 0.0
        %v2212 = vmax.f32 %v2189, 0.0
        %v2213 = vmax.f32 %v2192, 0.0
        %v2214 = vmax.f32 %v2195, 0.0
        %v2215 = vmax.f32 %v2198, 0.0
        %v2216 = vld [vmem:[%s1123] sm:$0xff]
        %v2217 = vld [vmem:[%s1123 + $0x8] sm:$0xff]
        %v2218 = vld [vmem:[%s1123 + $0x10] sm:$0xff]
        %v2219 = vld [vmem:[%s1123 + $0x18] sm:$0xff]
        %v2220 = vld [vmem:[%s1123 + $0x20] sm:$0xff]
        %v2221 = vld [vmem:[%s1123 + $0x28] sm:$0xff]
        %v2222 = vld [vmem:[%s1123 + $0x30] sm:$0xff]
        %v2223 = vld [vmem:[%s1123 + $0x38] sm:$0xff]
        %v2224 = vld [vmem:[%s1126] sm:$0x1]
        %v2226 = vperm.slane %v2224, 0
        %v2229 = vsel %vm2086, %v2200, 0
        %v2232 = vsel %vm2086, %v2201, 0
        %v2235 = vsel %vm2086, %v2202, 0
        %v2238 = vsel %vm2086, %v2203, 0
        %v2241 = vsel %vm2086, %v2204, 0
        %v2244 = vsel %vm2086, %v2205, 0
        %v2247 = vsel %vm2086, %v2206, 0
        %v2250 = vsel %vm2086, %v2207, 0
        %v2253 = vsel %vm2086, %v2208, 0
        %v2256 = vsel %vm2086, %v2209, 0
        %v2259 = vsel %vm2086, %v2210, 0
        %v2262 = vsel %vm2086, %v2211, 0
        %v2265 = vsel %vm2086, %v2212, 0
        %v2268 = vsel %vm2086, %v2213, 0
        %v2271 = vsel %vm2086, %v2214, 0
        %v2274 = vsel %vm2086, %v2215, 0
        %2276 = vmatpush.msra.mxu0 0.0
        %2277 = vmatpush.msra.mxu0 0.0
        %2278 = vmatpush.msra.mxu0 0.0
        %2279 = vmatpush.msra.mxu0 0.0
        %2280 = vmatpush.msra.mxu0 0.0
        %2281 = vmatpush.msra.mxu0 0.0
        %2282 = vmatpush.msra.mxu0 0.0
        %2283 = vmatpush.msra.mxu0 0.0
        %2284 = vmatpush.msra.mxu0 %v2223
        %2285 = vmatpush.msra.mxu0 %v2222
        %2286 = vmatpush.msra.mxu0 %v2221
        %2287 = vmatpush.msra.mxu0 %v2220
        %2288 = vmatpush.msra.mxu0 %v2219
        %2289 = vmatpush.msra.mxu0 %v2218
        %2290 = vmatpush.msra.mxu0 %v2217
        %2291 = vmatpush.msra.mxu0 %v2216
        %2292 = vmatmul.f32.gmra.mxu0 %v2229
        %v2293 = vpop.f32.mrf.mxu0
        %v2294 = vadd.f32 %v2226, %v2293
        %2295 = vmatmul.f32.gmra.mxu0 %v2232
        %v2296 = vpop.f32.mrf.mxu0
        %v2297 = vadd.f32 %v2226, %v2296
        %2298 = vmatmul.f32.gmra.mxu0 %v2235
        %v2299 = vpop.f32.mrf.mxu0
        %v2300 = vadd.f32 %v2226, %v2299
        %2301 = vmatmul.f32.gmra.mxu0 %v2238
        %v2302 = vpop.f32.mrf.mxu0
        %v2303 = vadd.f32 %v2226, %v2302
        %2304 = vmatmul.f32.gmra.mxu0 %v2241
        %v2305 = vpop.f32.mrf.mxu0
        %v2306 = vadd.f32 %v2226, %v2305
        %2307 = vmatmul.f32.gmra.mxu0 %v2244
        %v2308 = vpop.f32.mrf.mxu0
        %v2309 = vadd.f32 %v2226, %v2308
        %2310 = vmatmul.f32.gmra.mxu0 %v2247
        %v2311 = vpop.f32.mrf.mxu0
        %v2312 = vadd.f32 %v2226, %v2311
        %2313 = vmatmul.f32.gmra.mxu0 %v2250
        %v2314 = vpop.f32.mrf.mxu0
        %v2315 = vadd.f32 %v2226, %v2314
        %2316 = vmatmul.f32.gmra.mxu0 %v2253
        %v2317 = vpop.f32.mrf.mxu0
        %v2318 = vadd.f32 %v2226, %v2317
        %2319 = vmatmul.f32.gmra.mxu0 %v2256
        %v2320 = vpop.f32.mrf.mxu0
        %v2321 = vadd.f32 %v2226, %v2320
        %2322 = vmatmul.f32.gmra.mxu0 %v2259
        %v2323 = vpop.f32.mrf.mxu0
        %v2324 = vadd.f32 %v2226, %v2323
        %2325 = vmatmul.f32.gmra.mxu0 %v2262
        %v2326 = vpop.f32.mrf.mxu0
        %v2327 = vadd.f32 %v2226, %v2326
        %2328 = vmatmul.f32.gmra.mxu0 %v2265
        %v2329 = vpop.f32.mrf.mxu0
        %v2330 = vadd.f32 %v2226, %v2329
        %2331 = vmatmul.f32.gmra.mxu0 %v2268
        %v2332 = vpop.f32.mrf.mxu0
        %v2333 = vadd.f32 %v2226, %v2332
        %2334 = vmatmul.f32.gmra.mxu0 %v2271
        %v2335 = vpop.f32.mrf.mxu0
        %v2336 = vadd.f32 %v2226, %v2335
        %2337 = vmatmul.f32.gmra.mxu0 %v2274
        %v2338 = vpop.f32.mrf.mxu0
        %v2339 = vadd.f32 %v2226, %v2338
        %2340 = vdwg.mxu0
        %2341 = vxpose.xlu0.b32.start [1/16] %v2294, 128
        %2342 = vxpose.xlu0.b32.cont [2/16] %v2297, 128
        %2343 = vxpose.xlu0.b32.cont [3/16] %v2300, 128
        %2344 = vxpose.xlu0.b32.cont [4/16] %v2303, 128
        %2345 = vxpose.xlu0.b32.cont [5/16] %v2306, 128
        %2346 = vxpose.xlu0.b32.cont [6/16] %v2309, 128
        %2347 = vxpose.xlu0.b32.cont [7/16] %v2312, 128
        %2348 = vxpose.xlu0.b32.cont [8/16] %v2315, 128
        %2349 = vxpose.xlu0.b32.cont [9/16] 0.0, 128
        %2350 = vxpose.xlu0.b32.cont [10/16] 0.0, 128
        %2351 = vxpose.xlu0.b32.cont [11/16] 0.0, 128
        %2352 = vxpose.xlu0.b32.cont [12/16] 0.0, 128
        %2353 = vxpose.xlu0.b32.cont [13/16] 0.0, 128
        %2354 = vxpose.xlu0.b32.cont [14/16] 0.0, 128
        %2355 = vxpose.xlu0.b32.cont [15/16] 0.0, 128
        %2356 = vxpose.xlu0.b32.end [16/16] 0.0, 128
        %v2357 = vpop.trf.xlu0
        %v2358 = vpop.trf.xlu0
        %v2359 = vpop.trf.xlu0
        %v2360 = vpop.trf.xlu0
        %v2361 = vpop.trf.xlu0
        %v2362 = vpop.trf.xlu0
        %v2363 = vpop.trf.xlu0
        %v2364 = vpop.trf.xlu0
        %v2365 = vpop.trf.xlu0
        %v2366 = vpop.trf.xlu0
        %v2367 = vpop.trf.xlu0
        %v2368 = vpop.trf.xlu0
        %v2369 = vpop.trf.xlu0
        %v2370 = vpop.trf.xlu0
        %v2371 = vpop.trf.xlu0
        %v2372 = vpop.trf.xlu0
        %2374 = vrot.lane.b32.xlu0 %v2357, 120
        %v2375 = vpop.permute.xlu0 %2374
        %2377 = vrot.lane.b32.xlu0 %v2357, 112
        %v2378 = vpop.permute.xlu0 %2377
        %2380 = vrot.lane.b32.xlu0 %v2357, 104
        %v2381 = vpop.permute.xlu0 %2380
        %2383 = vrot.lane.b32.xlu0 %v2357, 96
        %v2384 = vpop.permute.xlu0 %2383
        %2386 = vrot.lane.b32.xlu0 %v2357, 88
        %v2387 = vpop.permute.xlu0 %2386
        %2389 = vrot.lane.b32.xlu0 %v2357, 80
        %v2390 = vpop.permute.xlu0 %2389
        %2392 = vrot.lane.b32.xlu0 %v2357, 72
        %v2393 = vpop.permute.xlu0 %2392
        %v2395 = vrot.slane %v2378, 4
        %v2396 = vsel %vm1436, %v2395, %v2357
        %v2398 = vunpack.c.l.s4 1983009808
        %v2399 = vunpack.c.0.s8 %v2398
        %v2400 = vperm.slane %v2396, %v2399
        %v2401 = vrot.slane %v2381, 4
        %v2402 = vsel %vm1436, %v2401, %v2375
        %v2404 = vunpack.c.l.s4 1983009808
        %v2405 = vunpack.c.0.s8 %v2404
        %v2406 = vperm.slane %v2402, %v2405
        %v2407 = vrot.slane %v2390, 4
        %v2408 = vsel %vm1436, %v2407, %v2384
        %v2410 = vunpack.c.l.s4 1983009808
        %v2411 = vunpack.c.0.s8 %v2410
        %v2412 = vperm.slane %v2408, %v2411
        %v2413 = vrot.slane %v2393, 4
        %v2414 = vsel %vm1436, %v2413, %v2387
        %v2416 = vunpack.c.l.s4 1983009808
        %v2417 = vunpack.c.0.s8 %v2416
        %v2418 = vperm.slane %v2414, %v2417
        %v2419 = vrot.slane %v2406, 4
        %v2420 = vsel %vm1436, %v2419, %v2400
        %v2421 = vrot.slane %v2400, 4
        %v2422 = vsel %vm1436, %v2406, %v2421
        %v2424 = vunpack.c.l.s4 1934713408
        %v2425 = vunpack.c.0.s8 %v2424
        %v2426 = vperm.slane %v2420, %v2425
        %v2428 = vunpack.c.l.s4 1934713408
        %v2429 = vunpack.c.0.s8 %v2428
        %v2430 = vperm.slane %v2422, %v2429
        %v2431 = vrot.slane %v2418, 4
        %v2432 = vsel %vm1436, %v2431, %v2412
        %v2433 = vrot.slane %v2412, 4
        %v2434 = vsel %vm1436, %v2418, %v2433
        %v2436 = vunpack.c.l.s4 1934713408
        %v2437 = vunpack.c.0.s8 %v2436
        %v2438 = vperm.slane %v2432, %v2437
        %v2440 = vunpack.c.l.s4 1934713408
        %v2441 = vunpack.c.0.s8 %v2440
        %v2442 = vperm.slane %v2434, %v2441
        %v2443 = vrot.slane %v2438, 4
        %v2444 = vsel %vm1436, %v2443, %v2426
        %v2445 = vrot.slane %v2426, 4
        %v2446 = vsel %vm1436, %v2438, %v2445
        %v2447 = vrot.slane %v2442, 4
        %v2448 = vsel %vm1436, %v2447, %v2430
        %v2449 = vrot.slane %v2430, 4
        %v2450 = vsel %vm1436, %v2442, %v2449
        %v2452 = vsel %vm1264, %v2444, 0
        %2454 = vmatpush.msra.mxu0 0.0
        %2455 = vmatpush.msra.mxu0 0.0
        %2456 = vmatpush.msra.mxu0 0.0
        %2457 = vmatpush.msra.mxu0 0.0
        %2458 = vmatpush.msra.mxu0 0.0
        %2459 = vmatpush.msra.mxu0 0.0
        %2460 = vmatpush.msra.mxu0 0.0
        %2461 = vmatpush.msra.mxu0 0.0
        %2462 = vmatpush.msra.mxu0 0.0
        %2463 = vmatpush.msra.mxu0 0.0
        %2464 = vmatpush.msra.mxu0 0.0
        %2465 = vmatpush.msra.mxu0 0.0
        %2466 = vmatpush.msra.mxu0 0.0
        %2467 = vmatpush.msra.mxu0 0.0
        %2468 = vmatpush.msra.mxu0 0.0
        %2469 = vmatpush.msra.mxu0 %v1259
        %2470 = vmatmul.f32.gmra.mxu0 %v2452
        %v2471 = vpop.f32.mrf.mxu0
        %v2472 = vadd.f32 0.0, %v2471
        %2473 = vdwg.mxu0
        %2475 = vrot.lane.b32.xlu0 %v1259, 120
        %v2476 = vpop.permute.xlu0 %2475
        %v2479 = vsel %vm1264, %v2446, 0
        %2481 = vmatpush.msra.mxu0 0.0
        %2482 = vmatpush.msra.mxu0 0.0
        %2483 = vmatpush.msra.mxu0 0.0
        %2484 = vmatpush.msra.mxu0 0.0
        %2485 = vmatpush.msra.mxu0 0.0
        %2486 = vmatpush.msra.mxu0 0.0
        %2487 = vmatpush.msra.mxu0 0.0
        %2488 = vmatpush.msra.mxu0 0.0
        %2489 = vmatpush.msra.mxu0 0.0
        %2490 = vmatpush.msra.mxu0 0.0
        %2491 = vmatpush.msra.mxu0 0.0
        %2492 = vmatpush.msra.mxu0 0.0
        %2493 = vmatpush.msra.mxu0 0.0
        %2494 = vmatpush.msra.mxu0 0.0
        %2495 = vmatpush.msra.mxu0 0.0
        %2496 = vmatpush.msra.mxu0 %v2476
        %2497 = vmatmul.f32.gmra.mxu0 %v2479
        %v2498 = vpop.f32.mrf.mxu0
        %v2499 = vadd.f32 0.0, %v2498
        %2500 = vdwg.mxu0
        %2501 = vrot.lane.b32.xlu0 %v1259, 112
        %v2502 = vpop.permute.xlu0 %2501
        %v2505 = vsel %vm1264, %v2448, 0
        %2507 = vmatpush.msra.mxu0 0.0
        %2508 = vmatpush.msra.mxu0 0.0
        %2509 = vmatpush.msra.mxu0 0.0
        %2510 = vmatpush.msra.mxu0 0.0
        %2511 = vmatpush.msra.mxu0 0.0
        %2512 = vmatpush.msra.mxu0 0.0
        %2513 = vmatpush.msra.mxu0 0.0
        %2514 = vmatpush.msra.mxu0 0.0
        %2515 = vmatpush.msra.mxu0 0.0
        %2516 = vmatpush.msra.mxu0 0.0
        %2517 = vmatpush.msra.mxu0 0.0
        %2518 = vmatpush.msra.mxu0 0.0
        %2519 = vmatpush.msra.mxu0 0.0
        %2520 = vmatpush.msra.mxu0 0.0
        %2521 = vmatpush.msra.mxu0 0.0
        %2522 = vmatpush.msra.mxu0 %v2502
        %2523 = vmatmul.f32.gmra.mxu0 %v2505
        %v2524 = vpop.f32.mrf.mxu0
        %v2525 = vadd.f32 0.0, %v2524
        %2526 = vdwg.mxu0
        %2527 = vrot.lane.b32.xlu0 %v1259, 104
        %v2528 = vpop.permute.xlu0 %2527
        %v2531 = vsel %vm1264, %v2450, 0
        %2533 = vmatpush.msra.mxu0 0.0
        %2534 = vmatpush.msra.mxu0 0.0
        %2535 = vmatpush.msra.mxu0 0.0
        %2536 = vmatpush.msra.mxu0 0.0
        %2537 = vmatpush.msra.mxu0 0.0
        %2538 = vmatpush.msra.mxu0 0.0
        %2539 = vmatpush.msra.mxu0 0.0
        %2540 = vmatpush.msra.mxu0 0.0
        %2541 = vmatpush.msra.mxu0 0.0
        %2542 = vmatpush.msra.mxu0 0.0
        %2543 = vmatpush.msra.mxu0 0.0
        %2544 = vmatpush.msra.mxu0 0.0
        %2545 = vmatpush.msra.mxu0 0.0
        %2546 = vmatpush.msra.mxu0 0.0
        %2547 = vmatpush.msra.mxu0 0.0
        %2548 = vmatpush.msra.mxu0 %v2528
        %2549 = vmatmul.f32.gmra.mxu0 %v2531
        %v2550 = vpop.f32.mrf.mxu0
        %v2551 = vadd.f32 0.0, %v2550
        %2552 = vdwg.mxu0
        %2554 = vrot.lane.b32.xlu0 %v2499, 8
        %v2555 = vpop.permute.xlu0 %2554
        %2558 = vrot.lane.b32.xlu0 %v2525, 16
        %v2559 = vpop.permute.xlu0 %2558
        %2562 = vrot.lane.b32.xlu0 %v2551, 24
        %v2563 = vpop.permute.xlu0 %2562
        %v2565 = vsel %vm1264, %v2472, %v2555
        %v2566 = vsel %vm1560, %v2565, %v2559
        %v2567 = vsel %vm1562, %v2566, %v2563
        %2568 = vxpose.xlu0.b32.start [1/16] %v2318, 128
        %2569 = vxpose.xlu0.b32.cont [2/16] %v2321, 128
        %2570 = vxpose.xlu0.b32.cont [3/16] %v2324, 128
        %2571 = vxpose.xlu0.b32.cont [4/16] %v2327, 128
        %2572 = vxpose.xlu0.b32.cont [5/16] %v2330, 128
        %2573 = vxpose.xlu0.b32.cont [6/16] %v2333, 128
        %2574 = vxpose.xlu0.b32.cont [7/16] %v2336, 128
        %2575 = vxpose.xlu0.b32.cont [8/16] %v2339, 128
        %2576 = vxpose.xlu0.b32.cont [9/16] 0.0, 128
        %2577 = vxpose.xlu0.b32.cont [10/16] 0.0, 128
        %2578 = vxpose.xlu0.b32.cont [11/16] 0.0, 128
        %2579 = vxpose.xlu0.b32.cont [12/16] 0.0, 128
        %2580 = vxpose.xlu0.b32.cont [13/16] 0.0, 128
        %2581 = vxpose.xlu0.b32.cont [14/16] 0.0, 128
        %2582 = vxpose.xlu0.b32.cont [15/16] 0.0, 128
        %2583 = vxpose.xlu0.b32.end [16/16] 0.0, 128
        %v2584 = vpop.trf.xlu0
        %v2585 = vpop.trf.xlu0
        %v2586 = vpop.trf.xlu0
        %v2587 = vpop.trf.xlu0
        %v2588 = vpop.trf.xlu0
        %v2589 = vpop.trf.xlu0
        %v2590 = vpop.trf.xlu0
        %v2591 = vpop.trf.xlu0
        %v2592 = vpop.trf.xlu0
        %v2593 = vpop.trf.xlu0
        %v2594 = vpop.trf.xlu0
        %v2595 = vpop.trf.xlu0
        %v2596 = vpop.trf.xlu0
        %v2597 = vpop.trf.xlu0
        %v2598 = vpop.trf.xlu0
        %v2599 = vpop.trf.xlu0
        %2601 = vrot.lane.b32.xlu0 %v2584, 120
        %v2602 = vpop.permute.xlu0 %2601
        %2604 = vrot.lane.b32.xlu0 %v2584, 112
        %v2605 = vpop.permute.xlu0 %2604
        %2607 = vrot.lane.b32.xlu0 %v2584, 104
        %v2608 = vpop.permute.xlu0 %2607
        %2610 = vrot.lane.b32.xlu0 %v2584, 96
        %v2611 = vpop.permute.xlu0 %2610
        %2613 = vrot.lane.b32.xlu0 %v2584, 88
        %v2614 = vpop.permute.xlu0 %2613
        %2616 = vrot.lane.b32.xlu0 %v2584, 80
        %v2617 = vpop.permute.xlu0 %2616
        %2619 = vrot.lane.b32.xlu0 %v2584, 72
        %v2620 = vpop.permute.xlu0 %2619
        %v2622 = vrot.slane %v2605, 4
        %v2623 = vsel %vm1436, %v2622, %v2584
        %v2625 = vunpack.c.l.s4 1983009808
        %v2626 = vunpack.c.0.s8 %v2625
        %v2627 = vperm.slane %v2623, %v2626
        %v2628 = vrot.slane %v2608, 4
        %v2629 = vsel %vm1436, %v2628, %v2602
        %v2631 = vunpack.c.l.s4 1983009808
        %v2632 = vunpack.c.0.s8 %v2631
        %v2633 = vperm.slane %v2629, %v2632
        %v2634 = vrot.slane %v2617, 4
        %v2635 = vsel %vm1436, %v2634, %v2611
        %v2637 = vunpack.c.l.s4 1983009808
        %v2638 = vunpack.c.0.s8 %v2637
        %v2639 = vperm.slane %v2635, %v2638
        %v2640 = vrot.slane %v2620, 4
        %v2641 = vsel %vm1436, %v2640, %v2614
        %v2643 = vunpack.c.l.s4 1983009808
        %v2644 = vunpack.c.0.s8 %v2643
        %v2645 = vperm.slane %v2641, %v2644
        %v2646 = vrot.slane %v2633, 4
        %v2647 = vsel %vm1436, %v2646, %v2627
        %v2648 = vrot.slane %v2627, 4
        %v2649 = vsel %vm1436, %v2633, %v2648
        %v2651 = vunpack.c.l.s4 1934713408
        %v2652 = vunpack.c.0.s8 %v2651
        %v2653 = vperm.slane %v2647, %v2652
        %v2655 = vunpack.c.l.s4 1934713408
        %v2656 = vunpack.c.0.s8 %v2655
        %v2657 = vperm.slane %v2649, %v2656
        %v2658 = vrot.slane %v2645, 4
        %v2659 = vsel %vm1436, %v2658, %v2639
        %v2660 = vrot.slane %v2639, 4
        %v2661 = vsel %vm1436, %v2645, %v2660
        %v2663 = vunpack.c.l.s4 1934713408
        %v2664 = vunpack.c.0.s8 %v2663
        %v2665 = vperm.slane %v2659, %v2664
        %v2667 = vunpack.c.l.s4 1934713408
        %v2668 = vunpack.c.0.s8 %v2667
        %v2669 = vperm.slane %v2661, %v2668
        %v2670 = vrot.slane %v2665, 4
        %v2671 = vsel %vm1436, %v2670, %v2653
        %v2672 = vrot.slane %v2653, 4
        %v2673 = vsel %vm1436, %v2665, %v2672
        %v2674 = vrot.slane %v2669, 4
        %v2675 = vsel %vm1436, %v2674, %v2657
        %v2676 = vrot.slane %v2657, 4
        %v2677 = vsel %vm1436, %v2669, %v2676
        %v2679 = vsel %vm1264, %v2671, 0
        %2681 = vmatpush.msra.mxu0 0.0
        %2682 = vmatpush.msra.mxu0 0.0
        %2683 = vmatpush.msra.mxu0 0.0
        %2684 = vmatpush.msra.mxu0 0.0
        %2685 = vmatpush.msra.mxu0 0.0
        %2686 = vmatpush.msra.mxu0 0.0
        %2687 = vmatpush.msra.mxu0 0.0
        %2688 = vmatpush.msra.mxu0 0.0
        %2689 = vmatpush.msra.mxu0 0.0
        %2690 = vmatpush.msra.mxu0 0.0
        %2691 = vmatpush.msra.mxu0 0.0
        %2692 = vmatpush.msra.mxu0 0.0
        %2693 = vmatpush.msra.mxu0 0.0
        %2694 = vmatpush.msra.mxu0 0.0
        %2695 = vmatpush.msra.mxu0 0.0
        %2696 = vmatpush.msra.mxu0 %v1262
        %2697 = vmatmul.f32.gmra.mxu0 %v2679
        %v2698 = vpop.f32.mrf.mxu0
        %v2699 = vadd.f32 0.0, %v2698
        %2700 = vdwg.mxu0
        %2702 = vrot.lane.b32.xlu0 %v1262, 120
        %v2703 = vpop.permute.xlu0 %2702
        %v2706 = vsel %vm1264, %v2673, 0
        %2708 = vmatpush.msra.mxu0 0.0
        %2709 = vmatpush.msra.mxu0 0.0
        %2710 = vmatpush.msra.mxu0 0.0
        %2711 = vmatpush.msra.mxu0 0.0
        %2712 = vmatpush.msra.mxu0 0.0
        %2713 = vmatpush.msra.mxu0 0.0
        %2714 = vmatpush.msra.mxu0 0.0
        %2715 = vmatpush.msra.mxu0 0.0
        %2716 = vmatpush.msra.mxu0 0.0
        %2717 = vmatpush.msra.mxu0 0.0
        %2718 = vmatpush.msra.mxu0 0.0
        %2719 = vmatpush.msra.mxu0 0.0
        %2720 = vmatpush.msra.mxu0 0.0
        %2721 = vmatpush.msra.mxu0 0.0
        %2722 = vmatpush.msra.mxu0 0.0
        %2723 = vmatpush.msra.mxu0 %v2703
        %2724 = vmatmul.f32.gmra.mxu0 %v2706
        %v2725 = vpop.f32.mrf.mxu0
        %v2726 = vadd.f32 0.0, %v2725
        %2727 = vdwg.mxu0
        %2728 = vrot.lane.b32.xlu0 %v1262, 112
        %v2729 = vpop.permute.xlu0 %2728
        %v2732 = vsel %vm1264, %v2675, 0
        %2734 = vmatpush.msra.mxu0 0.0
        %2735 = vmatpush.msra.mxu0 0.0
        %2736 = vmatpush.msra.mxu0 0.0
        %2737 = vmatpush.msra.mxu0 0.0
        %2738 = vmatpush.msra.mxu0 0.0
        %2739 = vmatpush.msra.mxu0 0.0
        %2740 = vmatpush.msra.mxu0 0.0
        %2741 = vmatpush.msra.mxu0 0.0
        %2742 = vmatpush.msra.mxu0 0.0
        %2743 = vmatpush.msra.mxu0 0.0
        %2744 = vmatpush.msra.mxu0 0.0
        %2745 = vmatpush.msra.mxu0 0.0
        %2746 = vmatpush.msra.mxu0 0.0
        %2747 = vmatpush.msra.mxu0 0.0
        %2748 = vmatpush.msra.mxu0 0.0
        %2749 = vmatpush.msra.mxu0 %v2729
        %2750 = vmatmul.f32.gmra.mxu0 %v2732
        %v2751 = vpop.f32.mrf.mxu0
        %v2752 = vadd.f32 0.0, %v2751
        %2753 = vdwg.mxu0
        %2754 = vrot.lane.b32.xlu0 %v1262, 104
        %v2755 = vpop.permute.xlu0 %2754
        %v2758 = vsel %vm1264, %v2677, 0
        %2760 = vmatpush.msra.mxu0 0.0
        %2761 = vmatpush.msra.mxu0 0.0
        %2762 = vmatpush.msra.mxu0 0.0
        %2763 = vmatpush.msra.mxu0 0.0
        %2764 = vmatpush.msra.mxu0 0.0
        %2765 = vmatpush.msra.mxu0 0.0
        %2766 = vmatpush.msra.mxu0 0.0
        %2767 = vmatpush.msra.mxu0 0.0
        %2768 = vmatpush.msra.mxu0 0.0
        %2769 = vmatpush.msra.mxu0 0.0
        %2770 = vmatpush.msra.mxu0 0.0
        %2771 = vmatpush.msra.mxu0 0.0
        %2772 = vmatpush.msra.mxu0 0.0
        %2773 = vmatpush.msra.mxu0 0.0
        %2774 = vmatpush.msra.mxu0 0.0
        %2775 = vmatpush.msra.mxu0 %v2755
        %2776 = vmatmul.f32.gmra.mxu0 %v2758
        %v2777 = vpop.f32.mrf.mxu0
        %v2778 = vadd.f32 0.0, %v2777
        %2779 = vdwg.mxu0
        %2781 = vrot.lane.b32.xlu0 %v2726, 8
        %v2782 = vpop.permute.xlu0 %2781
        %2785 = vrot.lane.b32.xlu0 %v2752, 16
        %v2786 = vpop.permute.xlu0 %2785
        %2789 = vrot.lane.b32.xlu0 %v2778, 24
        %v2790 = vpop.permute.xlu0 %2789
        %v2792 = vsel %vm1264, %v2699, %v2782
        %v2793 = vsel %vm1560, %v2792, %v2786
        %v2794 = vsel %vm1562, %v2793, %v2790
        %v2795 = vld [vmem:[%s1100] sm:$0xff]
        %v2796 = vld [vmem:[%s1100 + $0x8] sm:$0xff]
        %v2797 = vld [vmem:[%s1100 + $0x10] sm:$0xff]
        %v2798 = vld [vmem:[%s1100 + $0x18] sm:$0xff]
        %v2799 = vld [vmem:[%s1103] sm:$0x1]
        %v2801 = vperm.slane %v2799, 0
        %v2804 = vsel %vm1172, %v2567, 0
        %v2807 = vsel %vm1172, %v2794, 0
        %2809 = vmatpush.msra.mxu0 0.0
        %2810 = vmatpush.msra.mxu0 0.0
        %2811 = vmatpush.msra.mxu0 0.0
        %2812 = vmatpush.msra.mxu0 0.0
        %2813 = vmatpush.msra.mxu0 0.0
        %2814 = vmatpush.msra.mxu0 0.0
        %2815 = vmatpush.msra.mxu0 0.0
        %2816 = vmatpush.msra.mxu0 0.0
        %2817 = vmatpush.msra.mxu0 0.0
        %2818 = vmatpush.msra.mxu0 0.0
        %2819 = vmatpush.msra.mxu0 0.0
        %2820 = vmatpush.msra.mxu0 0.0
        %2821 = vmatpush.msra.mxu0 %v2798
        %2822 = vmatpush.msra.mxu0 %v2797
        %2823 = vmatpush.msra.mxu0 %v2796
        %2824 = vmatpush.msra.mxu0 %v2795
        %2825 = vmatmul.f32.gmra.mxu0 %v2804
        %v2826 = vpop.f32.mrf.mxu0
        %v2827 = vadd.f32 %v2801, %v2826
        %2828 = vmatmul.f32.gmra.mxu0 %v2807
        %v2829 = vpop.f32.mrf.mxu0
        %v2830 = vadd.f32 %v2801, %v2829
        %2831 = vdwg.mxu0
        %v2832 = vadd.f32 %v1160, %v2827
        %v2833 = vadd.f32 %v1161, %v2830
        %v2834 = vsel %vm1172, %v2832, 0.0
        %2835 = vadd.xlane.f32.xlu0 %v2834
        %v2836 = vpop.xlane.xlu0 %2835
        %v2837 = vsel %vm1172, %v2833, 0.0
        %2838 = vadd.xlane.f32.xlu0 %v2837
        %v2839 = vpop.xlane.xlu0 %2838
        %v2840 = vrcp.pop 32.0
        %v2841 = vmul.f32 32.0, %v2840
        %v2842 = vsub.f32 1.0, %v2841
        %v2843 = vmul.f32 %v2840, %v2842
        %v2844 = vadd.f32 %v2840, %v2843
        %vm2845 = vweird.f32 %v2840
        %v2846 = vsel %vm2845, %v2840, %v2844
        %v2847 = vmul.f32 %v2836, %v2846
        %v2848 = vmul.f32 %v2839, %v2846
        %v2849 = vsub.f32 %v2832, %v2847
        %v2850 = vsub.f32 %v2833, %v2848
        %v2851 = vmul.f32 %v2849, %v2849
        %v2852 = vmul.f32 %v2850, %v2850
        %v2853 = vsel %vm1172, %v2851, 0.0
        %2854 = vadd.xlane.f32.xlu0 %v2853
        %v2855 = vpop.xlane.xlu0 %2854
        %v2856 = vsel %vm1172, %v2852, 0.0
        %2857 = vadd.xlane.f32.xlu0 %v2856
        %v2858 = vpop.xlane.xlu0 %2857
        %v2859 = vmul.f32 %v2855, %v2846
        %v2860 = vmul.f32 %v2858, %v2846
        %v2861 = vadd.f32 %v2859, 1e-05
        %v2862 = vadd.f32 %v2860, 1e-05
        %v2863 = vrsqrt.pop %v2861
        %v2864 = vmul.f32 %v2863, %v2861
        %v2865 = vmul.f32 %v2864, %v2863
        %v2866 = vmul.f32 0.5, %v2865
        %v2867 = vsub.f32 1.5, %v2866
        %v2868 = vmul.f32 %v2863, %v2867
        %vm2869 = vweird.f32 %v2861
        %vm2870 = vweird.f32 %v2863
        %vm2871 = vmor %vm2869, %vm2870
        %v2872 = vsel %vm2871, %v2863, %v2868
        %v2873 = vrsqrt.pop %v2862
        %v2874 = vmul.f32 %v2873, %v2862
        %v2875 = vmul.f32 %v2874, %v2873
        %v2876 = vmul.f32 0.5, %v2875
        %v2877 = vsub.f32 1.5, %v2876
        %v2878 = vmul.f32 %v2873, %v2877
        %vm2879 = vweird.f32 %v2862
        %vm2880 = vweird.f32 %v2873
        %vm2881 = vmor %vm2879, %vm2880
        %v2882 = vsel %vm2881, %v2873, %v2878
        %v2883 = vmul.f32 %v2849, %v2872
        %v2884 = vmul.f32 %v2850, %v2882
        %v2885 = vld [vmem:[%s1129] sm:$0x1]
        %v2887 = vperm.slane %v2885, 0
        %v2889 = vmul.f32 %v2883, %v2887
        %v2890 = vmul.f32 %v2884, %v2887
        %v2891 = vld [vmem:[%s1132] sm:$0x1]
        %v2893 = vperm.slane %v2891, 0
        %v2895 = vadd.f32 %v2889, %v2893
        %v2896 = vadd.f32 %v2890, %v2893
        %v2897 = vld [vmem:[%s921] sm:$0xff]
        %v2898 = vld [vmem:[%s921 + $0x8] sm:$0xff]
        %v2899 = vld [vmem:[%s921 + $0x10] sm:$0xff]
        %v2900 = vld [vmem:[%s921 + $0x18] sm:$0xff]
        %v2901 = vld [vmem:[%s1135] sm:$0x1]
        %v2903 = vperm.slane %v2901, 0
        %v2906 = vsel %vm1172, %v2895, 0
        %v2909 = vsel %vm1172, %v2896, 0
        %2911 = vmatpush.msra.mxu0 0.0
        %2912 = vmatpush.msra.mxu0 0.0
        %2913 = vmatpush.msra.mxu0 0.0
        %2914 = vmatpush.msra.mxu0 0.0
        %2915 = vmatpush.msra.mxu0 0.0
        %2916 = vmatpush.msra.mxu0 0.0
        %2917 = vmatpush.msra.mxu0 0.0
        %2918 = vmatpush.msra.mxu0 0.0
        %2919 = vmatpush.msra.mxu0 0.0
        %2920 = vmatpush.msra.mxu0 0.0
        %2921 = vmatpush.msra.mxu0 0.0
        %2922 = vmatpush.msra.mxu0 0.0
        %2923 = vmatpush.msra.mxu0 %v2900
        %2924 = vmatpush.msra.mxu0 %v2899
        %2925 = vmatpush.msra.mxu0 %v2898
        %2926 = vmatpush.msra.mxu0 %v2897
        %2927 = vmatmul.f32.gmra.mxu0 %v2906
        %v2928 = vpop.f32.mrf.mxu0
        %v2929 = vadd.f32 %v2903, %v2928
        %2930 = vmatmul.f32.gmra.mxu0 %v2909
        %v2931 = vpop.f32.mrf.mxu0
        %v2932 = vadd.f32 %v2903, %v2931
        %2933 = vdwg.mxu0
        %v2934 = vmax.f32 %v2929, 0.0
        %v2935 = vmax.f32 %v2932, 0.0
        %v2936 = vld [vmem:[%s1140] sm:$0xff]
        %v2937 = vld [vmem:[%s1140 + $0x8] sm:$0xff]
        %v2938 = vld [vmem:[%s1140 + $0x10] sm:$0xff]
        %v2939 = vld [vmem:[%s1140 + $0x18] sm:$0xff]
        %v2940 = vld [vmem:[%s1140 + $0x20] sm:$0xff]
        %v2941 = vld [vmem:[%s1140 + $0x28] sm:$0xff]
        %v2942 = vld [vmem:[%s1140 + $0x30] sm:$0xff]
        %v2943 = vld [vmem:[%s1140 + $0x38] sm:$0xff]
        %v2944 = vld [vmem:[%s1140 + $0x40] sm:$0xff]
        %v2945 = vld [vmem:[%s1140 + $0x48] sm:$0xff]
        %v2946 = vld [vmem:[%s1140 + $0x50] sm:$0xff]
        %v2947 = vld [vmem:[%s1140 + $0x58] sm:$0xff]
        %v2948 = vld [vmem:[%s1140 + $0x60] sm:$0xff]
        %v2949 = vld [vmem:[%s1140 + $0x68] sm:$0xff]
        %v2950 = vld [vmem:[%s1140 + $0x70] sm:$0xff]
        %v2951 = vld [vmem:[%s1140 + $0x78] sm:$0xff]
        %v2952 = vld [vmem:[%s1143] sm:$0x1]
        %v2954 = vperm.slane %v2952, 0
        %2956 = vmatpush.msra.mxu0 %v2951
        %2957 = vmatpush.msra.mxu0 %v2950
        %2958 = vmatpush.msra.mxu0 %v2949
        %2959 = vmatpush.msra.mxu0 %v2948
        %2960 = vmatpush.msra.mxu0 %v2947
        %2961 = vmatpush.msra.mxu0 %v2946
        %2962 = vmatpush.msra.mxu0 %v2945
        %2963 = vmatpush.msra.mxu0 %v2944
        %2964 = vmatpush.msra.mxu0 %v2943
        %2965 = vmatpush.msra.mxu0 %v2942
        %2966 = vmatpush.msra.mxu0 %v2941
        %2967 = vmatpush.msra.mxu0 %v2940
        %2968 = vmatpush.msra.mxu0 %v2939
        %2969 = vmatpush.msra.mxu0 %v2938
        %2970 = vmatpush.msra.mxu0 %v2937
        %2971 = vmatpush.msra.mxu0 %v2936
        %2972 = vmatmul.f32.gmra.mxu0 %v2934
        %v2973 = vpop.f32.mrf.mxu0
        %v2974 = vadd.f32 %v2954, %v2973
        %2975 = vmatmul.f32.gmra.mxu0 %v2935
        %v2976 = vpop.f32.mrf.mxu0
        %v2977 = vadd.f32 %v2954, %v2976
        %2978 = vdwg.mxu0
        %v2979 = vadd.f32 %v2895, %v2974
        %v2980 = vadd.f32 %v2896, %v2977
        %v2981 = vsel %vm1172, %v2979, 0.0
        %2982 = vadd.xlane.f32.xlu0 %v2981
        %v2983 = vpop.xlane.xlu0 %2982
        %v2984 = vsel %vm1172, %v2980, 0.0
        %2985 = vadd.xlane.f32.xlu0 %v2984
        %v2986 = vpop.xlane.xlu0 %2985
        %v2987 = vmul.f32 %v2983, %v2846
        %v2988 = vmul.f32 %v2986, %v2846
        %v2989 = vsub.f32 %v2979, %v2987
        %v2990 = vsub.f32 %v2980, %v2988
        %v2991 = vmul.f32 %v2989, %v2989
        %v2992 = vmul.f32 %v2990, %v2990
        %v2993 = vsel %vm1172, %v2991, 0.0
        %2994 = vadd.xlane.f32.xlu0 %v2993
        %v2995 = vpop.xlane.xlu0 %2994
        %v2996 = vsel %vm1172, %v2992, 0.0
        %2997 = vadd.xlane.f32.xlu0 %v2996
        %v2998 = vpop.xlane.xlu0 %2997
        %v2999 = vmul.f32 %v2995, %v2846
        %v3000 = vmul.f32 %v2998, %v2846
        %v3001 = vadd.f32 %v2999, 1e-05
        %v3002 = vadd.f32 %v3000, 1e-05
        %v3003 = vrsqrt.pop %v3001
        %v3004 = vmul.f32 %v3003, %v3001
        %v3005 = vmul.f32 %v3004, %v3003
        %v3006 = vmul.f32 0.5, %v3005
        %v3007 = vsub.f32 1.5, %v3006
        %v3008 = vmul.f32 %v3003, %v3007
        %vm3009 = vweird.f32 %v3001
        %vm3010 = vweird.f32 %v3003
        %vm3011 = vmor %vm3009, %vm3010
        %v3012 = vsel %vm3011, %v3003, %v3008
        %v3013 = vrsqrt.pop %v3002
        %v3014 = vmul.f32 %v3013, %v3002
        %v3015 = vmul.f32 %v3014, %v3013
        %v3016 = vmul.f32 0.5, %v3015
        %v3017 = vsub.f32 1.5, %v3016
        %v3018 = vmul.f32 %v3013, %v3017
        %vm3019 = vweird.f32 %v3002
        %vm3020 = vweird.f32 %v3013
        %vm3021 = vmor %vm3019, %vm3020
        %v3022 = vsel %vm3021, %v3013, %v3018
        %v3023 = vmul.f32 %v2989, %v3012
        %v3024 = vmul.f32 %v2990, %v3022
        %v3025 = vld [vmem:[%s1146] sm:$0x1]
        %v3027 = vperm.slane %v3025, 0
        %v3029 = vmul.f32 %v3023, %v3027
        %v3030 = vmul.f32 %v3024, %v3027
        %v3031 = vld [vmem:[%s1149] sm:$0x1]
        %v3033 = vperm.slane %v3031, 0
        %v3035 = vadd.f32 %v3029, %v3033
        %v3036 = vadd.f32 %v3030, %v3033
        %3037 = vst.msk [vmem:[#allocation2] sm:$0xff] %vm1172, %v3035
        %3038 = vst.msk [vmem:[#allocation2 + $0x8] sm:$0xff] %vm1172, %v3036
        %p3039 = scmp.eq.s32.totalorder %s45, 1
        // Predicated region
        $region129: #{tpu_custom_call.1} parent=115 // pred_check
          %p3040 = pneg %p3039
        $region130: #{tpu_custom_call.1} parent=115 // pred_check_branch
          %3042 = sbr.rel (%p3040) target = $region132
        $region131: #{tpu_custom_call.1} parent=115 // pred_region
          %3043 = vst.msk [vmem:[#allocation8] sm:$0xff] %vm1172, %v3035
          %3044 = vst.msk [vmem:[#allocation8 + $0x8] sm:$0xff] %vm1172, %v3036
        $region132: #{tpu_custom_call.1} parent=115 // pred_fallthru
          _
        // Predicated region
        $region133: #{tpu_custom_call.1} parent=115 // pred_check
          %p3045 = pneg %p694
        $region134: #{tpu_custom_call.1} parent=115 // pred_check_branch
          %3047 = sbr.rel (%p3045) target = $region136
        $region135: #{tpu_custom_call.1} parent=115 // pred_region
          %s3048 = smul.u32 2, %s44
          %3050 = vsyncadd [#allocation5], 0
          %s3051 = smul.addr %s3048, 8
          %s3052 = scalar_lea.hbm %s24, %s3051
          %s3053 = sshll.u32 [#allocation8], 4
          %s3054 = int_to_ptr.vmem [resolvable:$true] %s3053
          %s3055 = sshll.u32 %s3052, 4
          %s3056 = int_to_ptr.hbm [resolvable:$true] %s3055
          %3061 = dma.vmem_to_hbm [thread:$0]  %s3054, 256, %s3056, [#allocation5], 128, 128, 8
        $region136: #{tpu_custom_call.1} parent=115 // pred_fallthru
          _
        // Predicated region
        $region137: #{tpu_custom_call.1} parent=115 // pred_check
          %p3062 = pneg %p694
        $region138: #{tpu_custom_call.1} parent=115 // pred_check_branch
          %3064 = sbr.rel (%p3062) target = $region140
        $region139: #{tpu_custom_call.1} parent=115 // pred_region
          %3066 = dma.done [#allocation5], 256
        $region140: #{tpu_custom_call.1} parent=115 // pred_fallthru
          _
      $region116: #{tpu_custom_call.1} parent=5 // pred_fallthru
        _
      %p3067 = scmp.le.s32.totalorder 2, %s35
      // Predicated region
      $region141: #{tpu_custom_call.1} parent=5 // pred_check
        %p3068 = pneg %p3067
      $region142: #{tpu_custom_call.1} parent=5 // pred_check_branch
        %3070 = sbr.rel (%p3068) target = $region144
      $region143: #{tpu_custom_call.1} parent=5 // pred_region
        %s3071 = ssub.s32 %s35, 2
      $region144: #{tpu_custom_call.1} parent=5 // pred_fallthru
        _
    $region6: #{tpu_custom_call.1} parent=1 // loop_footer
      %s39 = sadd.s32 1, %s35
    $region7: #{tpu_custom_call.1} parent=1 // loop_footer_branch
      %34 = sbr.rel target = $region3
    $region8: #{tpu_custom_call.1} parent=1 // loop_exit
      _
    %3072 = vsyncpa [#allocation4], 1
    %s3073 = scalar_lea.sflag [#allocation4], 1
    %3074 = vsyncpa %s3073, 1
    %3075 = vsyncpa [#allocation7], 1
    %s3076 = scalar_lea.sflag [#allocation7], 1
    %3077 = vsyncpa %s3076, 1
    %3078 = vsyncpa [#allocation5], 1
    %s3079 = scalar_lea.sflag [#allocation5], 1
    %3080 = vsyncpa %s3079, 1

</llo_original>
